<compile_context>
chip_gen: v7x
topology: tpu7x:2x2x1
jax: 0.10.0
libtpu: 0.0.40
codegen_flags: <defaults>
</compile_context>

<pallas_src>
import numpy as np
from functools import partial

import jax
import jax.numpy as jnp
from jax.experimental import pallas as pl
from jax.experimental.pallas import tpu as pltpu

LN_EPS = 1e-5


# ----------------------------- in-kernel math -------------------------------

def _layernorm(v, w, b):
    mu = jnp.mean(v, axis=-1, keepdims=True)
    var = jnp.mean(jnp.square(v - mu), axis=-1, keepdims=True)
    return (v - mu) * jax.lax.rsqrt(var + LN_EPS) * w + b


def _gelu_tanh(x):
    # tanh-approx GELU: transcendental goes to the EUP slot instead of
    # burning ~15 VALU ops/elem on an erf polynomial.  Deviates from
    # PyTorch's exact-erf GELU by at most ~1e-3 (inference-safe).  Kept f32.
    c = np.float32(np.sqrt(2.0 / np.pi))
    return 0.5 * x * (1.0 + jnp.tanh(c * (x + np.float32(0.044715) * x * x * x)))


# --------------------------------- kernel -----------------------------------

def fused_transformer_kernel(
        x_ref, pe_ref,
        n1w_ref, n1b_ref, qkvw_ref, qkvb_ref, projw_ref, projb_ref,
        n2w_ref, n2b_ref, fc1w_ref, fc1b_ref, fc2w_ref, fc2b_ref,
        nfw_ref, nfb_ref,
        o_ref,
        x_sc,
        *, num_heads, head_dim, peb):
    """grid = (B//TB, depth).  TB batch elements per grid step; the x slab is
    resident in VMEM scratch across the depth ('arbitrary') axis."""
    d = pl.program_id(1)
    depth = pl.num_programs(1)

    # --- depth == 0: load activations (+ positional embedding) into scratch ---
    @pl.when(d == 0)
    def _init():
        x0 = x_ref[...]                               # (TB, N, C)
        if peb:
            x0 = x0 + pe_ref[...]                     # (1, N, C) broadcasts
        x_sc[...] = x0

    x = x_sc[...]                                     # (TB, N, C) f32
    TB, N, C = x.shape
    M = TB * N
    H, hd = num_heads, head_dim
    bf16 = jnp.bfloat16

    # ------------------------- attention branch -----------------------------
    h = _layernorm(x, n1w_ref[0], n1b_ref[0])         # (TB, N, C) f32
    h2 = h.reshape(M, C).astype(bf16)
    # scale is already folded into the Q weight/bias columns at init time.
    qkv = jnp.dot(h2, qkvw_ref[0],
                  preferred_element_type=jnp.float32) + qkvb_ref[0]  # (M, 3C) f32
    qkv3 = qkv.reshape(TB, N, 3 * C)

    attn_rows = []
    for b in range(TB):                               # static unroll over TB
        qkv_b = qkv3[b]                               # (N, 3C)
        q = pltpu.einshape("nhd->hnd", qkv_b[:, :C].reshape(N, H, hd)).astype(bf16)
        k = pltpu.einshape("nhd->hnd", qkv_b[:, C:2 * C].reshape(N, H, hd)).astype(bf16)
        v = pltpu.einshape("nhd->hnd", qkv_b[:, 2 * C:].reshape(N, H, hd)).astype(bf16)

        s = jnp.einsum("hnd,hmd->hnm", q, k,
                       preferred_element_type=jnp.float32)           # (H, N, N)
        # explicit softmax; divide replaced by EUP approx reciprocal
        s_max = jnp.max(s, axis=-1, keepdims=True)
        p = jnp.exp(s - s_max)
        denom = jnp.sum(p, axis=-1, keepdims=True)
        p = p * pl.reciprocal(denom, approx=True)

        o = jnp.einsum("hnm,hmd->hnd", p.astype(bf16), v,
                       preferred_element_type=jnp.float32)           # (H, N, hd)
        attn_rows.append(pltpu.einshape("hnd->nhd", o).reshape(N, C))

    attn_cat = attn_rows[0] if TB == 1 else jnp.concatenate(attn_rows, axis=0)
    attn_out = jnp.dot(attn_cat.astype(bf16), projw_ref[0],
                       preferred_element_type=jnp.float32) + projb_ref[0]  # (M, C)
    x2 = x.reshape(M, C) + attn_out                                  # residual 1

    # ---------------------------- MLP branch --------------------------------
    hm = _layernorm(x2, n2w_ref[0], n2b_ref[0])
    m1 = jnp.dot(hm.astype(bf16), fc1w_ref[0],
                 preferred_element_type=jnp.float32) + fc1b_ref[0]   # (M, hidden) f32
    m1 = _gelu_tanh(m1)                                              # f32 on EUP
    m2 = jnp.dot(m1.astype(bf16), fc2w_ref[0],
                 preferred_element_type=jnp.float32) + fc2b_ref[0]   # (M, C)
    xo = x2 + m2                                                     # residual 2

    x_sc[...] = xo.reshape(TB, N, C)

    # --- last block: final LayerNorm, single HBM store per batch tile -------
    @pl.when(d == depth - 1)
    def _final():
        o_ref[...] = _layernorm(xo, nfw_ref[...], nfb_ref[...]).reshape(TB, N, C)


# --------------------------- sizing helpers ----------------------------------

def _vmem_capacity_bytes():
    try:
        cap = int(getattr(pltpu.get_tpu_info(), "vmem_capacity_bytes", 0))
        if cap > 0:
            return cap
    except Exception:
        pass
    return 64 << 20          # conservative (v7x-sized) fallback


def _working_set_bytes(N, C, hidden, TB):
    """Rough per-step VMEM budget: double-buffered bf16 block weights +
    double-buffered x in/out + scratch + activation temporaries."""
    w_big = (3 * C * C + C * C + 2 * C * hidden) * 2          # bf16 big weights
    small = (3 * C + C + hidden + C + 8 * C) * 4              # biases + norms
    weights = 2 * (w_big + small)                             # double-buffered
    xio = (2 * 2 + 1) * TB * N * C * 4                        # x in/out (2-buf) + scratch
    pos = N * C * 4
    acts = TB * N * (3 * C * 4 * 3 + hidden * 4 * 2 + C * 4 * 6)
    return weights + xio + pos + acts


def _auto_tb(B, N, C, hidden, max_tb=8):
    cap = _vmem_capacity_bytes()
    budget = cap - (8 << 20)
    for tb in range(min(max_tb, B), 0, -1):
        if B % tb:
            continue
        if _working_set_bytes(N, C, hidden, tb) <= budget:
            return tb
    return 1


# ------------------------------- host wrapper --------------------------------

def transformer_forward(x, params, num_heads, peb=True, tb=None, max_tb=8):
    B, N, C = x.shape
    depth = params["qkvw"].shape[0]
    hidden = params["fc1w"].shape[-1]
    head_dim = C // num_heads

    TB = tb if tb is not None else _auto_tb(B, N, C, hidden, max_tb=max_tb)
    assert B % TB == 0, f"batch {B} must be divisible by TB {TB}"

    cap = _vmem_capacity_bytes()
    vmem_limit = int(max(16 << 20,
                         min(cap - (8 << 20),
                             _working_set_bytes(N, C, hidden, TB) * 5 // 4 + (4 << 20))))

    # per-depth stacked weight: block (1, *shape), indexed by the depth axis.
    def wspec(shape):
        nd = len(shape)
        return pl.BlockSpec((1,) + tuple(shape),
                            lambda b, d, _nd=nd: (d,) + (0,) * _nd)

    # depth-invariant array: loaded once, block index constant.
    def const_spec(shape):
        nd = len(shape)
        return pl.BlockSpec(tuple(shape), lambda b, d, _nd=nd: (0,) * _nd)

    x_spec = pl.BlockSpec((TB, N, C), lambda b, d: (b, 0, 0))

    kern = partial(fused_transformer_kernel,
                   num_heads=num_heads, head_dim=head_dim, peb=peb)

    in_specs = [
        x_spec,
        const_spec((1, N, C)),                      # pos_embed
        wspec((1, C)), wspec((1, C)),               # norm1 w, b
        wspec((C, 3 * C)), wspec((1, 3 * C)),       # qkv w (bf16, scale folded), b
        wspec((C, C)), wspec((1, C)),               # proj w (bf16), b
        wspec((1, C)), wspec((1, C)),               # norm2 w, b
        wspec((C, hidden)), wspec((1, hidden)),     # fc1 w (bf16), b
        wspec((hidden, C)), wspec((1, C)),          # fc2 w (bf16), b
        const_spec((1, C)), const_spec((1, C)),     # final norm w, b
    ]

    # Advisory cost estimate (hidden ~ 4C ViT): lets XLA schedule around us.
    flops = int(depth * B * (2 * N * C * (3 * C + C + 2 * hidden) + 4 * N * N * C))
    transc = int(depth * B * (num_heads * N * N + N * hidden))
    w_bytes = depth * (B // TB) * (3 * C * C + C * C + 2 * C * hidden) * 2
    bytes_acc = int(w_bytes + 3 * B * N * C * 4)

    return pl.pallas_call(
        kern,
        out_shape=jax.ShapeDtypeStruct((B, N, C), jnp.float32),
        grid=(B // TB, depth),
        in_specs=in_specs,
        out_specs=x_spec,
        scratch_shapes=[pltpu.VMEM((TB, N, C), jnp.float32)],
        compiler_params=pltpu.CompilerParams(
            dimension_semantics=("parallel", "arbitrary"),
            vmem_limit_bytes=vmem_limit),
        cost_estimate=pl.CostEstimate(flops=flops,
                                      transcendentals=transc,
                                      bytes_accessed=bytes_acc),
    )(x, params["pos_embed"],
      params["n1w"], params["n1b"], params["qkvw"], params["qkvb"],
      params["projw"], params["projb"], params["n2w"], params["n2b"],
      params["fc1w"], params["fc1b"], params["fc2w"], params["fc2b"],
      params["norm_w"], params["norm_b"])


# --------------------------- parameter construction --------------------------

def get_sinusoid_encoding(n_position, d_hid):
    def angle_vec(pos):
        return [pos / np.power(10000, 2 * (j // 2) / d_hid) for j in range(d_hid)]
    table = np.array([angle_vec(p) for p in range(n_position)])
    table[:, 0::2] = np.sin(table[:, 0::2])
    table[:, 1::2] = np.cos(table[:, 1::2])
    return jnp.asarray(table[None], dtype=jnp.float32)              # (1, N, C)


def init_params(key, depth, num_heads, embed_dim, num_patches, mlp_ratio=4.0):
    hidden = int(embed_dim * mlp_ratio)
    head_dim = embed_dim // num_heads
    scale = np.float32(head_dim ** (-0.5))

    def trunc_normal(k, shape, std=0.02):
        # trunc_normal_(std=0.02): normal truncated to +/- 2 std
        return std * jax.random.truncated_normal(k, -2.0, 2.0, shape, jnp.float32)

    n1w, n1b, qkvw, qkvb, projw, projb = [], [], [], [], [], []
    n2w, n2b, fc1w, fc1b, fc2w, fc2b = [], [], [], [], [], []
    for _ in range(depth):
        key, k_qkv, k_proj, k_fc1, k_fc2 = jax.random.split(key, 5)
        # torch Linear weight is (out, in); store transposed as (in, out)
        w_qkv = trunc_normal(k_qkv, (3 * embed_dim, embed_dim)).T       # (C, 3C)
        b_qkv = jnp.zeros((1, 3 * embed_dim), jnp.float32)
        # Fold the attention scale into the Q columns (exactly equivalent to
        # multiplying the (N,N) score matrix by `scale` before softmax).
        w_qkv = w_qkv.at[:, :embed_dim].multiply(scale)
        b_qkv = b_qkv.at[:, :embed_dim].multiply(scale)

        n1w.append(jnp.ones((1, embed_dim), jnp.float32))
        n1b.append(jnp.zeros((1, embed_dim), jnp.float32))
        qkvw.append(w_qkv)
        qkvb.append(b_qkv)
        projw.append(trunc_normal(k_proj, (embed_dim, embed_dim)).T)
        projb.append(jnp.zeros((1, embed_dim), jnp.float32))
        n2w.append(jnp.ones((1, embed_dim), jnp.float32))
        n2b.append(jnp.zeros((1, embed_dim), jnp.float32))
        fc1w.append(trunc_normal(k_fc1, (hidden, embed_dim)).T)
        fc1b.append(jnp.zeros((1, hidden), jnp.float32))
        fc2w.append(trunc_normal(k_fc2, (embed_dim, hidden)).T)
        fc2b.append(jnp.zeros((1, embed_dim), jnp.float32))

    stack = lambda xs: jnp.stack(xs, axis=0)
    stack_bf = lambda xs: jnp.stack(xs, axis=0).astype(jnp.bfloat16)
    # Big matmul weights stored bf16 (halves weight DMA + VMEM working set;
    # MXU native bf16 path).  Biases / norms stay f32.
    return dict(
        n1w=stack(n1w), n1b=stack(n1b),
        qkvw=stack_bf(qkvw), qkvb=stack(qkvb),
        projw=stack_bf(projw), projb=stack(projb),
        n2w=stack(n2w), n2b=stack(n2b),
        fc1w=stack_bf(fc1w), fc1b=stack(fc1b),
        fc2w=stack_bf(fc2w), fc2b=stack(fc2b),
        norm_w=jnp.ones((1, embed_dim), jnp.float32),
        norm_b=jnp.zeros((1, embed_dim), jnp.float32),
        pos_embed=get_sinusoid_encoding(num_patches, embed_dim),
    )


# ----------------------------------- main ------------------------------------

if __name__ == "__main__":
    # Small shapes consistent with the module's forward: x is (B, N, C)
    depth, num_heads, embed_dim, num_patches, batch = 2, 4, 32, 8, 4

    key = jax.random.PRNGKey(0)
    key, kx, kp = jax.random.split(key, 3)
    x = jax.random.normal(kx, (batch, num_patches, embed_dim), jnp.float32)
    params = init_params(kp, depth, num_heads, embed_dim, num_patches, mlp_ratio=4.0)

    # max_tb=2 so the batch grid axis is exercised (grid = (2, depth)).
    out = transformer_forward(x, params, num_heads=num_heads, peb=True, max_tb=2)
    out = jax.block_until_ready(out)
    assert out.shape == (batch, num_patches, embed_dim)
    assert bool(jnp.all(jnp.isfinite(out)))

    print("KERNEL_OK")
</pallas_src>

<mosaic_0001>
module attributes {stable_mosaic.version = 11 : i64} {
  func.func @fused_transformer_kernel(%arg0: i32, %arg1: i32, %arg2: memref<2x8x32xf32, #tpu.memory_space<vmem>>, %arg3: memref<1x8x32xf32, #tpu.memory_space<vmem>>, %arg4: memref<1x1x32xf32, #tpu.memory_space<vmem>>, %arg5: memref<1x1x32xf32, #tpu.memory_space<vmem>>, %arg6: memref<1x32x96xbf16, #tpu.memory_space<vmem>>, %arg7: memref<1x1x96xf32, #tpu.memory_space<vmem>>, %arg8: memref<1x32x32xbf16, #tpu.memory_space<vmem>>, %arg9: memref<1x1x32xf32, #tpu.memory_space<vmem>>, %arg10: memref<1x1x32xf32, #tpu.memory_space<vmem>>, %arg11: memref<1x1x32xf32, #tpu.memory_space<vmem>>, %arg12: memref<1x32x128xbf16, #tpu.memory_space<vmem>>, %arg13: memref<1x1x128xf32, #tpu.memory_space<vmem>>, %arg14: memref<1x128x32xbf16, #tpu.memory_space<vmem>>, %arg15: memref<1x1x32xf32, #tpu.memory_space<vmem>>, %arg16: memref<1x32xf32, #tpu.memory_space<vmem>>, %arg17: memref<1x32xf32, #tpu.memory_space<vmem>>, %arg18: memref<2x8x32xf32, #tpu.memory_space<vmem>>, %arg19: memref<2x8x32xf32, #tpu.memory_space<vmem>>) attributes {dimension_semantics = [#tpu.dimension_semantics<parallel>, #tpu.dimension_semantics<arbitrary>], iteration_bounds = array<i64: 2, 2>, scalar_prefetch = 0 : i64, scratch_operands = 1 : i64, tpu.core_type = #tpu.core_type<tc>, window_params = [{transform_indices = @transform_0, window_bounds = array<i64: 2, 8, 32>}, {pipeline_mode = #tpu.pipeline_mode<synchronous>, transform_indices = @transform_1, window_bounds = array<i64: 1, 8, 32>}, {transform_indices = @transform_2, window_bounds = array<i64: 1, 1, 32>}, {transform_indices = @transform_3, window_bounds = array<i64: 1, 1, 32>}, {transform_indices = @transform_4, window_bounds = array<i64: 1, 32, 96>}, {transform_indices = @transform_5, window_bounds = array<i64: 1, 1, 96>}, {transform_indices = @transform_6, window_bounds = array<i64: 1, 32, 32>}, {transform_indices = @transform_7, window_bounds = array<i64: 1, 1, 32>}, {transform_indices = @transform_8, window_bounds = array<i64: 1, 1, 32>}, {transform_indices = @transform_9, window_bounds = array<i64: 1, 1, 32>}, {transform_indices = @transform_10, window_bounds = array<i64: 1, 32, 128>}, {transform_indices = @transform_11, window_bounds = array<i64: 1, 1, 128>}, {transform_indices = @transform_12, window_bounds = array<i64: 1, 128, 32>}, {transform_indices = @transform_13, window_bounds = array<i64: 1, 1, 32>}, {pipeline_mode = #tpu.pipeline_mode<synchronous>, transform_indices = @transform_14, window_bounds = array<i64: 1, 32>}, {pipeline_mode = #tpu.pipeline_mode<synchronous>, transform_indices = @transform_15, window_bounds = array<i64: 1, 32>}, {transform_indices = @transform_16, window_bounds = array<i64: 2, 8, 32>}]} {
    %c0_i32 = arith.constant 0 : i32
    %0 = arith.cmpi eq, %arg1, %c0_i32 : i32
    %1 = arith.extui %0 : i1 to i32
    %c0_i32_0 = arith.constant 0 : i32
    %2 = arith.cmpi ne, %1, %c0_i32_0 : i32
    scf.if %2 {
      %c0_68 = arith.constant 0 : index
      %c0_69 = arith.constant 0 : index
      %c0_70 = arith.constant 0 : index
      %172 = vector.load %arg2[%c0_68, %c0_69, %c0_70] : memref<2x8x32xf32, #tpu.memory_space<vmem>>, vector<2x8x32xf32>
      %c0_71 = arith.constant 0 : index
      %c0_72 = arith.constant 0 : index
      %c0_73 = arith.constant 0 : index
      %173 = vector.load %arg3[%c0_71, %c0_72, %c0_73] : memref<1x8x32xf32, #tpu.memory_space<vmem>>, vector<1x8x32xf32>
      %174 = vector.broadcast %173 : vector<1x8x32xf32> to vector<2x8x32xf32>
      %175 = arith.addf %172, %174 : vector<2x8x32xf32>
      %c0_74 = arith.constant 0 : index
      %c0_75 = arith.constant 0 : index
      %c0_76 = arith.constant 0 : index
      %176 = vector.load %arg19[%c0_74, %c0_75, %c0_76] : memref<2x8x32xf32, #tpu.memory_space<vmem>>, vector<2x8x32xf32>
      tpu.vector_store %arg19[%c0_74, %c0_75, %c0_76], %175 {strides = array<i32>} : memref<2x8x32xf32, #tpu.memory_space<vmem>>, vector<2x8x32xf32>,
    } else {
    }
    %c0 = arith.constant 0 : index
    %c0_1 = arith.constant 0 : index
    %c0_2 = arith.constant 0 : index
    %3 = vector.load %arg19[%c0, %c0_1, %c0_2] : memref<2x8x32xf32, #tpu.memory_space<vmem>>, vector<2x8x32xf32>
    %c0_3 = arith.constant 0 : index
    %c0_4 = arith.constant 0 : index
    %c0_5 = arith.constant 0 : index
    %4 = vector.load %arg4[%c0_3, %c0_4, %c0_5] : memref<1x1x32xf32, #tpu.memory_space<vmem>>, vector<1x1x32xf32>
    %5 = vector.shape_cast %4 : vector<1x1x32xf32> to vector<1x32xf32>
    %c0_6 = arith.constant 0 : index
    %c0_7 = arith.constant 0 : index
    %c0_8 = arith.constant 0 : index
    %6 = vector.load %arg5[%c0_6, %c0_7, %c0_8] : memref<1x1x32xf32, #tpu.memory_space<vmem>>, vector<1x1x32xf32>
    %7 = vector.shape_cast %6 : vector<1x1x32xf32> to vector<1x32xf32>
    %cst = arith.constant dense<0.000000e+00> : vector<2x8xf32>
    %8 = vector.multi_reduction <add>, %3, %cst [2] : vector<2x8x32xf32> to vector<2x8xf32>
    %9 = vector.shape_cast %8 : vector<2x8xf32> to vector<2x8x1xf32>
    %cst_9 = arith.constant 3.200000e+01 : f32
    %10 = vector.broadcast %cst_9 : f32 to vector<2x8x1xf32>
    %11 = arith.divf %9, %10 : vector<2x8x1xf32>
    %12 = vector.broadcast %11 : vector<2x8x1xf32> to vector<2x8x32xf32>
    %13 = arith.subf %3, %12 : vector<2x8x32xf32>
    %14 = arith.mulf %13, %13 : vector<2x8x32xf32>
    %cst_10 = arith.constant dense<0.000000e+00> : vector<2x8xf32>
    %15 = vector.multi_reduction <add>, %14, %cst_10 [2] : vector<2x8x32xf32> to vector<2x8xf32>
    %16 = vector.shape_cast %15 : vector<2x8xf32> to vector<2x8x1xf32>
    %cst_11 = arith.constant 3.200000e+01 : f32
    %17 = vector.broadcast %cst_11 : f32 to vector<2x8x1xf32>
    %18 = arith.divf %16, %17 : vector<2x8x1xf32>
    %19 = vector.broadcast %11 : vector<2x8x1xf32> to vector<2x8x32xf32>
    %20 = arith.subf %3, %19 : vector<2x8x32xf32>
    %cst_12 = arith.constant 9.99999974E-6 : f32
    %21 = vector.broadcast %cst_12 : f32 to vector<2x8x1xf32>
    %22 = arith.addf %18, %21 : vector<2x8x1xf32>
    %23 = math.rsqrt %22 : vector<2x8x1xf32>
    %24 = vector.broadcast %23 : vector<2x8x1xf32> to vector<2x8x32xf32>
    %25 = arith.mulf %20, %24 : vector<2x8x32xf32>
    %26 = vector.shape_cast %5 : vector<1x32xf32> to vector<1x1x32xf32>
    %27 = vector.broadcast %26 : vector<1x1x32xf32> to vector<2x8x32xf32>
    %28 = arith.mulf %25, %27 : vector<2x8x32xf32>
    %29 = vector.shape_cast %7 : vector<1x32xf32> to vector<1x1x32xf32>
    %30 = vector.broadcast %29 : vector<1x1x32xf32> to vector<2x8x32xf32>
    %31 = arith.addf %28, %30 : vector<2x8x32xf32>
    %32 = vector.shape_cast %31 : vector<2x8x32xf32> to vector<16x32xf32>
    %33 = arith.truncf %32 : vector<16x32xf32> to vector<16x32xbf16>
    %c0_13 = arith.constant 0 : index
    %c0_14 = arith.constant 0 : index
    %c0_15 = arith.constant 0 : index
    %34 = vector.load %arg6[%c0_13, %c0_14, %c0_15] : memref<1x32x96xbf16, #tpu.memory_space<vmem>>, vector<1x32x96xbf16>
    %35 = vector.shape_cast %34 : vector<1x32x96xbf16> to vector<32x96xbf16>
    %cst_16 = arith.constant dense<0.000000e+00> : vector<16x96xf32>
    %36 = tpu.matmul %33, %35, %cst_16 {dimension_numbers = #tpu.dot_dimension_numbers<[1], [0], [0], [1], [0, 0, 1, 1], [], []>} : vector<16x32xbf16>, vector<32x96xbf16>, vector<16x96xf32> -> vector<16x96xf32>
    %c0_17 = arith.constant 0 : index
    %c0_18 = arith.constant 0 : index
    %c0_19 = arith.constant 0 : index
    %37 = vector.load %arg7[%c0_17, %c0_18, %c0_19] : memref<1x1x96xf32, #tpu.memory_space<vmem>>, vector<1x1x96xf32>
    %38 = vector.shape_cast %37 : vector<1x1x96xf32> to vector<1x96xf32>
    %39 = vector.broadcast %38 : vector<1x96xf32> to vector<16x96xf32>
    %40 = arith.addf %36, %39 : vector<16x96xf32>
    %41 = vector.shape_cast %40 : vector<16x96xf32> to vector<2x8x96xf32>
    %42 = vector.extract_strided_slice %41 {offsets = [0, 0, 0], sizes = [1, 8, 96], strides = [1, 1, 1]} : vector<2x8x96xf32> to vector<1x8x96xf32>
    %43 = vector.shape_cast %42 : vector<1x8x96xf32> to vector<8x96xf32>
    %44 = vector.extract_strided_slice %43 {offsets = [0, 0], sizes = [8, 32], strides = [1, 1]} : vector<8x96xf32> to vector<8x32xf32>
    %45 = vector.shape_cast %44 : vector<8x32xf32> to vector<8x4x8xf32>
    %46 = tpu.transpose %45, [1, 0, 2] : vector<8x4x8xf32> -> vector<4x8x8xf32>
    %47 = arith.truncf %46 : vector<4x8x8xf32> to vector<4x8x8xbf16>
    %48 = vector.extract_strided_slice %43 {offsets = [0, 32], sizes = [8, 32], strides = [1, 1]} : vector<8x96xf32> to vector<8x32xf32>
    %49 = vector.shape_cast %48 : vector<8x32xf32> to vector<8x4x8xf32>
    %50 = tpu.transpose %49, [1, 0, 2] : vector<8x4x8xf32> -> vector<4x8x8xf32>
    %51 = arith.truncf %50 : vector<4x8x8xf32> to vector<4x8x8xbf16>
    %52 = vector.extract_strided_slice %43 {offsets = [0, 64], sizes = [8, 32], strides = [1, 1]} : vector<8x96xf32> to vector<8x32xf32>
    %53 = vector.shape_cast %52 : vector<8x32xf32> to vector<8x4x8xf32>
    %54 = tpu.transpose %53, [1, 0, 2] : vector<8x4x8xf32> -> vector<4x8x8xf32>
    %55 = arith.truncf %54 : vector<4x8x8xf32> to vector<4x8x8xbf16>
    "tpu.trace_start"() <{level = 10 : i32, message = "hnd,hmd->hnm"}> : () -> ()
    %cst_20 = arith.constant dense<0.000000e+00> : vector<4x8x8xf32>
    %56 = tpu.matmul %47, %51, %cst_20 {dimension_numbers = #tpu.dot_dimension_numbers<[2], [2], [1], [1], [0, 0, 0, 1, 1, 1], [0], [0]>} : vector<4x8x8xbf16>, vector<4x8x8xbf16>, vector<4x8x8xf32> -> vector<4x8x8xf32>
    "tpu.trace_stop"() : () -> ()
    %cst_21 = arith.constant dense<0xFF800000> : vector<4x8xf32>
    %57 = vector.multi_reduction <maximumf>, %56, %cst_21 [2] : vector<4x8x8xf32> to vector<4x8xf32>
    %58 = vector.shape_cast %57 : vector<4x8xf32> to vector<4x8x1xf32>
    %59 = vector.broadcast %58 : vector<4x8x1xf32> to vector<4x8x8xf32>
    %60 = arith.subf %56, %59 : vector<4x8x8xf32>
    %61 = math.exp %60 : vector<4x8x8xf32>
    %cst_22 = arith.constant dense<0.000000e+00> : vector<4x8xf32>
    %62 = vector.multi_reduction <add>, %61, %cst_22 [2] : vector<4x8x8xf32> to vector<4x8xf32>
    %63 = vector.shape_cast %62 : vector<4x8xf32> to vector<4x8x1xf32>
    %64 = tpu.reciprocal %63 {approx = true} : vector<4x8x1xf32> -> vector<4x8x1xf32>
    %65 = vector.broadcast %64 : vector<4x8x1xf32> to vector<4x8x8xf32>
    %66 = arith.mulf %61, %65 : vector<4x8x8xf32>
    %67 = arith.truncf %66 : vector<4x8x8xf32> to vector<4x8x8xbf16>
    "tpu.trace_start"() <{level = 10 : i32, message = "hnm,hmd->hnd"}> : () -> ()
    %cst_23 = arith.constant dense<0.000000e+00> : vector<4x8x8xf32>
    %68 = tpu.matmul %67, %55, %cst_23 {dimension_numbers = #tpu.dot_dimension_numbers<[2], [1], [1], [2], [0, 0, 0, 1, 1, 2], [0], [0]>} : vector<4x8x8xbf16>, vector<4x8x8xbf16>, vector<4x8x8xf32> -> vector<4x8x8xf32>
    "tpu.trace_stop"() : () -> ()
    %69 = tpu.transpose %68, [1, 0, 2] : vector<4x8x8xf32> -> vector<8x4x8xf32>
    %70 = vector.shape_cast %69 : vector<8x4x8xf32> to vector<8x32xf32>
    %71 = vector.extract_strided_slice %41 {offsets = [1, 0, 0], sizes = [1, 8, 96], strides = [1, 1, 1]} : vector<2x8x96xf32> to vector<1x8x96xf32>
    %72 = vector.shape_cast %71 : vector<1x8x96xf32> to vector<8x96xf32>
    %73 = vector.extract_strided_slice %72 {offsets = [0, 0], sizes = [8, 32], strides = [1, 1]} : vector<8x96xf32> to vector<8x32xf32>
    %74 = vector.shape_cast %73 : vector<8x32xf32> to vector<8x4x8xf32>
    %75 = tpu.transpose %74, [1, 0, 2] : vector<8x4x8xf32> -> vector<4x8x8xf32>
    %76 = arith.truncf %75 : vector<4x8x8xf32> to vector<4x8x8xbf16>
    %77 = vector.extract_strided_slice %72 {offsets = [0, 32], sizes = [8, 32], strides = [1, 1]} : vector<8x96xf32> to vector<8x32xf32>
    %78 = vector.shape_cast %77 : vector<8x32xf32> to vector<8x4x8xf32>
    %79 = tpu.transpose %78, [1, 0, 2] : vector<8x4x8xf32> -> vector<4x8x8xf32>
    %80 = arith.truncf %79 : vector<4x8x8xf32> to vector<4x8x8xbf16>
    %81 = vector.extract_strided_slice %72 {offsets = [0, 64], sizes = [8, 32], strides = [1, 1]} : vector<8x96xf32> to vector<8x32xf32>
    %82 = vector.shape_cast %81 : vector<8x32xf32> to vector<8x4x8xf32>
    %83 = tpu.transpose %82, [1, 0, 2] : vector<8x4x8xf32> -> vector<4x8x8xf32>
    %84 = arith.truncf %83 : vector<4x8x8xf32> to vector<4x8x8xbf16>
    "tpu.trace_start"() <{level = 10 : i32, message = "hnd,hmd->hnm"}> : () -> ()
    %cst_24 = arith.constant dense<0.000000e+00> : vector<4x8x8xf32>
    %85 = tpu.matmul %76, %80, %cst_24 {dimension_numbers = #tpu.dot_dimension_numbers<[2], [2], [1], [1], [0, 0, 0, 1, 1, 1], [0], [0]>} : vector<4x8x8xbf16>, vector<4x8x8xbf16>, vector<4x8x8xf32> -> vector<4x8x8xf32>
    "tpu.trace_stop"() : () -> ()
    %cst_25 = arith.constant dense<0xFF800000> : vector<4x8xf32>
    %86 = vector.multi_reduction <maximumf>, %85, %cst_25 [2] : vector<4x8x8xf32> to vector<4x8xf32>
    %87 = vector.shape_cast %86 : vector<4x8xf32> to vector<4x8x1xf32>
    %88 = vector.broadcast %87 : vector<4x8x1xf32> to vector<4x8x8xf32>
    %89 = arith.subf %85, %88 : vector<4x8x8xf32>
    %90 = math.exp %89 : vector<4x8x8xf32>
    %cst_26 = arith.constant dense<0.000000e+00> : vector<4x8xf32>
    %91 = vector.multi_reduction <add>, %90, %cst_26 [2] : vector<4x8x8xf32> to vector<4x8xf32>
    %92 = vector.shape_cast %91 : vector<4x8xf32> to vector<4x8x1xf32>
    %93 = tpu.reciprocal %92 {approx = true} : vector<4x8x1xf32> -> vector<4x8x1xf32>
    %94 = vector.broadcast %93 : vector<4x8x1xf32> to vector<4x8x8xf32>
    %95 = arith.mulf %90, %94 : vector<4x8x8xf32>
    %96 = arith.truncf %95 : vector<4x8x8xf32> to vector<4x8x8xbf16>
    "tpu.trace_start"() <{level = 10 : i32, message = "hnm,hmd->hnd"}> : () -> ()
    %cst_27 = arith.constant dense<0.000000e+00> : vector<4x8x8xf32>
    %97 = tpu.matmul %96, %84, %cst_27 {dimension_numbers = #tpu.dot_dimension_numbers<[2], [1], [1], [2], [0, 0, 0, 1, 1, 2], [0], [0]>} : vector<4x8x8xbf16>, vector<4x8x8xbf16>, vector<4x8x8xf32> -> vector<4x8x8xf32>
    "tpu.trace_stop"() : () -> ()
    %98 = tpu.transpose %97, [1, 0, 2] : vector<4x8x8xf32> -> vector<8x4x8xf32>
    %99 = vector.shape_cast %98 : vector<8x4x8xf32> to vector<8x32xf32>
    %100 = tpu.concatenate %70, %99 in 0 : vector<8x32xf32>, vector<8x32xf32> -> vector<16x32xf32>
    %101 = arith.truncf %100 : vector<16x32xf32> to vector<16x32xbf16>
    %c0_28 = arith.constant 0 : index
    %c0_29 = arith.constant 0 : index
    %c0_30 = arith.constant 0 : index
    %102 = vector.load %arg8[%c0_28, %c0_29, %c0_30] : memref<1x32x32xbf16, #tpu.memory_space<vmem>>, vector<1x32x32xbf16>
    %103 = vector.shape_cast %102 : vector<1x32x32xbf16> to vector<32x32xbf16>
    %cst_31 = arith.constant dense<0.000000e+00> : vector<16x32xf32>
    %104 = tpu.matmul %101, %103, %cst_31 {dimension_numbers = #tpu.dot_dimension_numbers<[1], [0], [0], [1], [0, 0, 1, 1], [], []>} : vector<16x32xbf16>, vector<32x32xbf16>, vector<16x32xf32> -> vector<16x32xf32>
    %c0_32 = arith.constant 0 : index
    %c0_33 = arith.constant 0 : index
    %c0_34 = arith.constant 0 : index
    %105 = vector.load %arg9[%c0_32, %c0_33, %c0_34] : memref<1x1x32xf32, #tpu.memory_space<vmem>>, vector<1x1x32xf32>
    %106 = vector.shape_cast %105 : vector<1x1x32xf32> to vector<1x32xf32>
    %107 = vector.broadcast %106 : vector<1x32xf32> to vector<16x32xf32>
    %108 = arith.addf %104, %107 : vector<16x32xf32>
    %109 = vector.shape_cast %3 : vector<2x8x32xf32> to vector<16x32xf32>
    %110 = arith.addf %109, %108 : vector<16x32xf32>
    %c0_35 = arith.constant 0 : index
    %c0_36 = arith.constant 0 : index
    %c0_37 = arith.constant 0 : index
    %111 = vector.load %arg10[%c0_35, %c0_36, %c0_37] : memref<1x1x32xf32, #tpu.memory_space<vmem>>, vector<1x1x32xf32>
    %112 = vector.shape_cast %111 : vector<1x1x32xf32> to vector<1x32xf32>
    %c0_38 = arith.constant 0 : index
    %c0_39 = arith.constant 0 : index
    %c0_40 = arith.constant 0 : index
    %113 = vector.load %arg11[%c0_38, %c0_39, %c0_40] : memref<1x1x32xf32, #tpu.memory_space<vmem>>, vector<1x1x32xf32>
    %114 = vector.shape_cast %113 : vector<1x1x32xf32> to vector<1x32xf32>
    %cst_41 = arith.constant dense<0.000000e+00> : vector<16xf32>
    %115 = vector.multi_reduction <add>, %110, %cst_41 [1] : vector<16x32xf32> to vector<16xf32>
    %116 = vector.shape_cast %115 : vector<16xf32> to vector<16x1xf32>
    %cst_42 = arith.constant 3.200000e+01 : f32
    %117 = vector.broadcast %cst_42 : f32 to vector<16x1xf32>
    %118 = arith.divf %116, %117 : vector<16x1xf32>
    %119 = vector.broadcast %118 : vector<16x1xf32> to vector<16x32xf32>
    %120 = arith.subf %110, %119 : vector<16x32xf32>
    %121 = arith.mulf %120, %120 : vector<16x32xf32>
    %cst_43 = arith.constant dense<0.000000e+00> : vector<16xf32>
    %122 = vector.multi_reduction <add>, %121, %cst_43 [1] : vector<16x32xf32> to vector<16xf32>
    %123 = vector.shape_cast %122 : vector<16xf32> to vector<16x1xf32>
    %cst_44 = arith.constant 3.200000e+01 : f32
    %124 = vector.broadcast %cst_44 : f32 to vector<16x1xf32>
    %125 = arith.divf %123, %124 : vector<16x1xf32>
    %126 = vector.broadcast %118 : vector<16x1xf32> to vector<16x32xf32>
    %127 = arith.subf %110, %126 : vector<16x32xf32>
    %cst_45 = arith.constant 9.99999974E-6 : f32
    %128 = vector.broadcast %cst_45 : f32 to vector<16x1xf32>
    %129 = arith.addf %125, %128 : vector<16x1xf32>
    %130 = math.rsqrt %129 : vector<16x1xf32>
    %131 = vector.broadcast %130 : vector<16x1xf32> to vector<16x32xf32>
    %132 = arith.mulf %127, %131 : vector<16x32xf32>
    %133 = vector.broadcast %112 : vector<1x32xf32> to vector<16x32xf32>
    %134 = arith.mulf %132, %133 : vector<16x32xf32>
    %135 = vector.broadcast %114 : vector<1x32xf32> to vector<16x32xf32>
    %136 = arith.addf %134, %135 : vector<16x32xf32>
    %137 = arith.truncf %136 : vector<16x32xf32> to vector<16x32xbf16>
    %c0_46 = arith.constant 0 : index
    %c0_47 = arith.constant 0 : index
    %c0_48 = arith.constant 0 : index
    %138 = vector.load %arg12[%c0_46, %c0_47, %c0_48] : memref<1x32x128xbf16, #tpu.memory_space<vmem>>, vector<1x32x128xbf16>
    %139 = vector.shape_cast %138 : vector<1x32x128xbf16> to vector<32x128xbf16>
    %cst_49 = arith.constant dense<0.000000e+00> : vector<16x128xf32>
    %140 = tpu.matmul %137, %139, %cst_49 {dimension_numbers = #tpu.dot_dimension_numbers<[1], [0], [0], [1], [0, 0, 1, 1], [], []>} : vector<16x32xbf16>, vector<32x128xbf16>, vector<16x128xf32> -> vector<16x128xf32>
    %c0_50 = arith.constant 0 : index
    %c0_51 = arith.constant 0 : index
    %c0_52 = arith.constant 0 : index
    %141 = vector.load %arg13[%c0_50, %c0_51, %c0_52] : memref<1x1x128xf32, #tpu.memory_space<vmem>>, vector<1x1x128xf32>
    %142 = vector.shape_cast %141 : vector<1x1x128xf32> to vector<1x128xf32>
    %143 = vector.broadcast %142 : vector<1x128xf32> to vector<16x128xf32>
    %144 = arith.addf %140, %143 : vector<16x128xf32>
    %cst_53 = arith.constant 5.000000e-01 : f32
    %145 = vector.broadcast %cst_53 : f32 to vector<16x128xf32>
    %146 = arith.mulf %145, %144 : vector<16x128xf32>
    %cst_54 = arith.constant 4.471500e-02 : f32
    %147 = vector.broadcast %cst_54 : f32 to vector<16x128xf32>
    %148 = arith.mulf %147, %144 : vector<16x128xf32>
    %149 = arith.mulf %148, %144 : vector<16x128xf32>
    %150 = arith.mulf %149, %144 : vector<16x128xf32>
    %151 = arith.addf %144, %150 : vector<16x128xf32>
    %cst_55 = arith.constant 0.797884583 : f32
    %152 = vector.broadcast %cst_55 : f32 to vector<16x128xf32>
    %153 = arith.mulf %152, %151 : vector<16x128xf32>
    %154 = math.tanh %153 : vector<16x128xf32>
    %cst_56 = arith.constant 1.000000e+00 : f32
    %155 = vector.broadcast %cst_56 : f32 to vector<16x128xf32>
    %156 = arith.addf %155, %154 : vector<16x128xf32>
    %157 = arith.mulf %146, %156 : vector<16x128xf32>
    %158 = arith.truncf %157 : vector<16x128xf32> to vector<16x128xbf16>
    %c0_57 = arith.constant 0 : index
    %c0_58 = arith.constant 0 : index
    %c0_59 = arith.constant 0 : index
    %159 = vector.load %arg14[%c0_57, %c0_58, %c0_59] : memref<1x128x32xbf16, #tpu.memory_space<vmem>>, vector<1x128x32xbf16>
    %160 = vector.shape_cast %159 : vector<1x128x32xbf16> to vector<128x32xbf16>
    %cst_60 = arith.constant dense<0.000000e+00> : vector<16x32xf32>
    %161 = tpu.matmul %158, %160, %cst_60 {dimension_numbers = #tpu.dot_dimension_numbers<[1], [0], [0], [1], [0, 0, 1, 1], [], []>} : vector<16x128xbf16>, vector<128x32xbf16>, vector<16x32xf32> -> vector<16x32xf32>
    %c0_61 = arith.constant 0 : index
    %c0_62 = arith.constant 0 : index
    %c0_63 = arith.constant 0 : index
    %162 = vector.load %arg15[%c0_61, %c0_62, %c0_63] : memref<1x1x32xf32, #tpu.memory_space<vmem>>, vector<1x1x32xf32>
    %163 = vector.shape_cast %162 : vector<1x1x32xf32> to vector<1x32xf32>
    %164 = vector.broadcast %163 : vector<1x32xf32> to vector<16x32xf32>
    %165 = arith.addf %161, %164 : vector<16x32xf32>
    %166 = arith.addf %110, %165 : vector<16x32xf32>
    %167 = vector.shape_cast %166 : vector<16x32xf32> to vector<2x8x32xf32>
    %c0_64 = arith.constant 0 : index
    %c0_65 = arith.constant 0 : index
    %c0_66 = arith.constant 0 : index
    %168 = vector.load %arg19[%c0_64, %c0_65, %c0_66] : memref<2x8x32xf32, #tpu.memory_space<vmem>>, vector<2x8x32xf32>
    tpu.vector_store %arg19[%c0_64, %c0_65, %c0_66], %167 {strides = array<i32>} : memref<2x8x32xf32, #tpu.memory_space<vmem>>, vector<2x8x32xf32>,
    %c1_i32 = arith.constant 1 : i32
    %169 = arith.cmpi eq, %arg1, %c1_i32 : i32
    %170 = arith.extui %169 : i1 to i32
    %c0_i32_67 = arith.constant 0 : i32
    %171 = arith.cmpi ne, %170, %c0_i32_67 : i32
    scf.if %171 {
      %c0_68 = arith.constant 0 : index
      %c0_69 = arith.constant 0 : index
      %172 = vector.load %arg16[%c0_68, %c0_69] : memref<1x32xf32, #tpu.memory_space<vmem>>, vector<1x32xf32>
      %c0_70 = arith.constant 0 : index
      %c0_71 = arith.constant 0 : index
      %173 = vector.load %arg17[%c0_70, %c0_71] : memref<1x32xf32, #tpu.memory_space<vmem>>, vector<1x32xf32>
      %cst_72 = arith.constant dense<0.000000e+00> : vector<16xf32>
      %174 = vector.multi_reduction <add>, %166, %cst_72 [1] : vector<16x32xf32> to vector<16xf32>
      %175 = vector.shape_cast %174 : vector<16xf32> to vector<16x1xf32>
      %cst_73 = arith.constant 3.200000e+01 : f32
      %176 = vector.broadcast %cst_73 : f32 to vector<16x1xf32>
      %177 = arith.divf %175, %176 : vector<16x1xf32>
      %178 = vector.broadcast %177 : vector<16x1xf32> to vector<16x32xf32>
      %179 = arith.subf %166, %178 : vector<16x32xf32>
      %180 = arith.mulf %179, %179 : vector<16x32xf32>
      %cst_74 = arith.constant dense<0.000000e+00> : vector<16xf32>
      %181 = vector.multi_reduction <add>, %180, %cst_74 [1] : vector<16x32xf32> to vector<16xf32>
      %182 = vector.shape_cast %181 : vector<16xf32> to vector<16x1xf32>
      %cst_75 = arith.constant 3.200000e+01 : f32
      %183 = vector.broadcast %cst_75 : f32 to vector<16x1xf32>
      %184 = arith.divf %182, %183 : vector<16x1xf32>
      %185 = vector.broadcast %177 : vector<16x1xf32> to vector<16x32xf32>
      %186 = arith.subf %166, %185 : vector<16x32xf32>
      %cst_76 = arith.constant 9.99999974E-6 : f32
      %187 = vector.broadcast %cst_76 : f32 to vector<16x1xf32>
      %188 = arith.addf %184, %187 : vector<16x1xf32>
      %189 = math.rsqrt %188 : vector<16x1xf32>
      %190 = vector.broadcast %189 : vector<16x1xf32> to vector<16x32xf32>
      %191 = arith.mulf %186, %190 : vector<16x32xf32>
      %192 = vector.broadcast %172 : vector<1x32xf32> to vector<16x32xf32>
      %193 = arith.mulf %191, %192 : vector<16x32xf32>
      %194 = vector.broadcast %173 : vector<1x32xf32> to vector<16x32xf32>
      %195 = arith.addf %193, %194 : vector<16x32xf32>
      %196 = vector.shape_cast %195 : vector<16x32xf32> to vector<2x8x32xf32>
      %c0_77 = arith.constant 0 : index
      %c0_78 = arith.constant 0 : index
      %c0_79 = arith.constant 0 : index
      %197 = vector.load %arg18[%c0_77, %c0_78, %c0_79] : memref<2x8x32xf32, #tpu.memory_space<vmem>>, vector<2x8x32xf32>
      tpu.vector_store %arg18[%c0_77, %c0_78, %c0_79], %196 {strides = array<i32>} : memref<2x8x32xf32, #tpu.memory_space<vmem>>, vector<2x8x32xf32>,
    } else {
    }
    return
  }
  func.func @transform_0(%arg0: i32, %arg1: i32) -> (i32, i32, i32) {
    %c0_i32 = arith.constant 0 : i32
    %c0_i32_0 = arith.constant 0 : i32
    %c0_i32_1 = arith.constant 0 : i32
    return %arg0, %c0_i32, %c0_i32_0 : i32, i32, i32
  }
  func.func @transform_1(%arg0: i32, %arg1: i32) -> (i32, i32, i32) {
    %c0_i32 = arith.constant 0 : i32
    %c0_i32_0 = arith.constant 0 : i32
    %c0_i32_1 = arith.constant 0 : i32
    %c0_i32_2 = arith.constant 0 : i32
    return %c0_i32, %c0_i32_0, %c0_i32_1 : i32, i32, i32
  }
  func.func @transform_2(%arg0: i32, %arg1: i32) -> (i32, i32, i32) {
    %c0_i32 = arith.constant 0 : i32
    %c0_i32_0 = arith.constant 0 : i32
    %c0_i32_1 = arith.constant 0 : i32
    return %arg1, %c0_i32, %c0_i32_0 : i32, i32, i32
  }
  func.func @transform_3(%arg0: i32, %arg1: i32) -> (i32, i32, i32) {
    %c0_i32 = arith.constant 0 : i32
    %c0_i32_0 = arith.constant 0 : i32
    %c0_i32_1 = arith.constant 0 : i32
    return %arg1, %c0_i32, %c0_i32_0 : i32, i32, i32
  }
  func.func @transform_4(%arg0: i32, %arg1: i32) -> (i32, i32, i32) {
    %c0_i32 = arith.constant 0 : i32
    %c0_i32_0 = arith.constant 0 : i32
    %c0_i32_1 = arith.constant 0 : i32
    return %arg1, %c0_i32, %c0_i32_0 : i32, i32, i32
  }
  func.func @transform_5(%arg0: i32, %arg1: i32) -> (i32, i32, i32) {
    %c0_i32 = arith.constant 0 : i32
    %c0_i32_0 = arith.constant 0 : i32
    %c0_i32_1 = arith.constant 0 : i32
    return %arg1, %c0_i32, %c0_i32_0 : i32, i32, i32
  }
  func.func @transform_6(%arg0: i32, %arg1: i32) -> (i32, i32, i32) {
    %c0_i32 = arith.constant 0 : i32
    %c0_i32_0 = arith.constant 0 : i32
    %c0_i32_1 = arith.constant 0 : i32
    return %arg1, %c0_i32, %c0_i32_0 : i32, i32, i32
  }
  func.func @transform_7(%arg0: i32, %arg1: i32) -> (i32, i32, i32) {
    %c0_i32 = arith.constant 0 : i32
    %c0_i32_0 = arith.constant 0 : i32
    %c0_i32_1 = arith.constant 0 : i32
    return %arg1, %c0_i32, %c0_i32_0 : i32, i32, i32
  }
  func.func @transform_8(%arg0: i32, %arg1: i32) -> (i32, i32, i32) {
    %c0_i32 = arith.constant 0 : i32
    %c0_i32_0 = arith.constant 0 : i32
    %c0_i32_1 = arith.constant 0 : i32
    return %arg1, %c0_i32, %c0_i32_0 : i32, i32, i32
  }
  func.func @transform_9(%arg0: i32, %arg1: i32) -> (i32, i32, i32) {
    %c0_i32 = arith.constant 0 : i32
    %c0_i32_0 = arith.constant 0 : i32
    %c0_i32_1 = arith.constant 0 : i32
    return %arg1, %c0_i32, %c0_i32_0 : i32, i32, i32
  }
  func.func @transform_10(%arg0: i32, %arg1: i32) -> (i32, i32, i32) {
    %c0_i32 = arith.constant 0 : i32
    %c0_i32_0 = arith.constant 0 : i32
    %c0_i32_1 = arith.constant 0 : i32
    return %arg1, %c0_i32, %c0_i32_0 : i32, i32, i32
  }
  func.func @transform_11(%arg0: i32, %arg1: i32) -> (i32, i32, i32) {
    %c0_i32 = arith.constant 0 : i32
    %c0_i32_0 = arith.constant 0 : i32
    %c0_i32_1 = arith.constant 0 : i32
    return %arg1, %c0_i32, %c0_i32_0 : i32, i32, i32
  }
  func.func @transform_12(%arg0: i32, %arg1: i32) -> (i32, i32, i32) {
    %c0_i32 = arith.constant 0 : i32
    %c0_i32_0 = arith.constant 0 : i32
    %c0_i32_1 = arith.constant 0 : i32
    return %arg1, %c0_i32, %c0_i32_0 : i32, i32, i32
  }
  func.func @transform_13(%arg0: i32, %arg1: i32) -> (i32, i32, i32) {
    %c0_i32 = arith.constant 0 : i32
    %c0_i32_0 = arith.constant 0 : i32
    %c0_i32_1 = arith.constant 0 : i32
    return %arg1, %c0_i32, %c0_i32_0 : i32, i32, i32
  }
  func.func @transform_14(%arg0: i32, %arg1: i32) -> (i32, i32) {
    %c0_i32 = arith.constant 0 : i32
    %c0_i32_0 = arith.constant 0 : i32
    %c0_i32_1 = arith.constant 0 : i32
    return %c0_i32, %c0_i32_0 : i32, i32
  }
  func.func @transform_15(%arg0: i32, %arg1: i32) -> (i32, i32) {
    %c0_i32 = arith.constant 0 : i32
    %c0_i32_0 = arith.constant 0 : i32
    %c0_i32_1 = arith.constant 0 : i32
    return %c0_i32, %c0_i32_0 : i32, i32
  }
  func.func @transform_16(%arg0: i32, %arg1: i32) -> (i32, i32, i32) {
    %c0_i32 = arith.constant 0 : i32
    %c0_i32_0 = arith.constant 0 : i32
    %c0_i32_1 = arith.constant 0 : i32
    return %arg0, %c0_i32, %c0_i32_0 : i32, i32, i32
  }
}

</mosaic_0001>

<llo_original>
// kernel: tpu_custom_call.1
$region0: #{tpu_custom_call.1}
  #allocation0 [shape = 'u32[]', space=smem, size = 0x4, offset = 0x4, fixed_abs, tag = 'smem constant byte address 0x4 - core index']
  #allocation1 [shape = 'u32[144,128]{1,0:T(1,128)}', space=vmem, size = 0x12000, scoped, tag = 'internal scratch']
  #allocation2 [shape = 'f32[2,8,32]{2,1,0:T(8,128)}', space=vmem, size = 0x2000, scoped, tag = 'scratch operand']
  %s0 = inlined_call_operand.vmem [shape: f32[4,8,32], index: 0, kind: input, shape index: {}]
  %s1 = inlined_call_operand.vmem [shape: f32[1,8,32], index: 1, kind: input, shape index: {}]
  %s2 = inlined_call_operand.vmem [shape: f32[2,1,32], index: 2, kind: input, shape index: {}]
  %s3 = inlined_call_operand.vmem [shape: f32[2,1,32], index: 3, kind: input, shape index: {}]
  %s4 = inlined_call_operand.vmem [shape: bf16[2,32,96], index: 4, kind: input, shape index: {}]
  %s5 = inlined_call_operand.vmem [shape: f32[2,1,96], index: 5, kind: input, shape index: {}]
  %s6 = inlined_call_operand.vmem [shape: bf16[2,32,32], index: 6, kind: input, shape index: {}]
  %s7 = inlined_call_operand.vmem [shape: f32[2,1,32], index: 7, kind: input, shape index: {}]
  %s8 = inlined_call_operand.vmem [shape: f32[2,1,32], index: 8, kind: input, shape index: {}]
  %s9 = inlined_call_operand.vmem [shape: f32[2,1,32], index: 9, kind: input, shape index: {}]
  %s10 = inlined_call_operand.vmem [shape: bf16[2,32,128], index: 10, kind: input, shape index: {}]
  %s11 = inlined_call_operand.vmem [shape: f32[2,1,128], index: 11, kind: input, shape index: {}]
  %s12 = inlined_call_operand.vmem [shape: bf16[2,128,32], index: 12, kind: input, shape index: {}]
  %s13 = inlined_call_operand.vmem [shape: f32[2,1,32], index: 13, kind: input, shape index: {}]
  %s14 = inlined_call_operand.vmem [shape: f32[1,32], index: 14, kind: input, shape index: {}]
  %s15 = inlined_call_operand.vmem [shape: f32[1,32], index: 15, kind: input, shape index: {}]
  %s16 = inlined_call_operand.hbm [shape: f32[4,8,32], index: 16, kind: output, shape index: {}]
  %s17 = sld [smem:[#allocation0]]
  $region105: #{tpu_custom_call.1} parent=0
    _
  %s19 = ssub.s32 1, %s17
  %s20 = scalar_select 0, %s19, %s17
  $region1: #{tpu_custom_call.1} parent=0
    #allocation3 [shape = 'u8[16384]{0}', space=vmem, size = 0x4000, scoped, tag = 'output window, operand 0']
    #allocation4 [shape = 's32[2]{0}', space=sflag, size = 0x8, scoped, tag = 'scoped memory for tpu_custom_call.1']
    %21 = vsyncpa [#allocation4], 0
    %s22 = scalar_lea.sflag [#allocation4], 1
    %23 = vsyncpa %s22, 0
    loop: start=0, step=1, limit=6
    $region2: #{tpu_custom_call.1} parent=1 // loop_pre_header
      _
    $region3: #{tpu_custom_call.1} parent=1 // loop_header
      %s25 = sphi 0, %s29
      %p26 = scmp.ge.s32.totalorder %s25, 6
      %s32 = sphi 0, %s44
      %s33 = sphi 0, %s40
      %s34 = sphi 0, %s32
      %s35 = sphi 0, %s33
      %s36 = sphi 0, %s34
      %s37 = sphi 0, %s35
      %s47 = sphi 0, %s49
      %s50 = sphi 0, %s47
      %s51 = sphi 0, %s50
      %s67 = sphi 0, %s51
      %s71 = sphi 0, %s71
      %s73 = sphi 0, %s71
      %s74 = sphi 0, %s73
      %s88 = sphi 0, %s74
      %s94 = sphi 0, %s96
      %s97 = sphi 0, %s94
      %s98 = sphi 0, %s97
      %s114 = sphi 0, %s98
      %s120 = sphi 0, %s122
      %s123 = sphi 0, %s120
      %s124 = sphi 0, %s123
      %s140 = sphi 0, %s124
      %s146 = sphi 0, %s148
      %s149 = sphi 0, %s146
      %s150 = sphi 0, %s149
      %s166 = sphi 0, %s150
      %s172 = sphi 0, %s174
      %s175 = sphi 0, %s172
      %s176 = sphi 0, %s175
      %s192 = sphi 0, %s176
      %s198 = sphi 0, %s200
      %s201 = sphi 0, %s198
      %s202 = sphi 0, %s201
      %s218 = sphi 0, %s202
      %s224 = sphi 0, %s226
      %s227 = sphi 0, %s224
      %s228 = sphi 0, %s227
      %s244 = sphi 0, %s228
      %s250 = sphi 0, %s252
      %s253 = sphi 0, %s250
      %s254 = sphi 0, %s253
      %s270 = sphi 0, %s254
      %s276 = sphi 0, %s278
      %s279 = sphi 0, %s276
      %s280 = sphi 0, %s279
      %s296 = sphi 0, %s280
      %s302 = sphi 0, %s304
      %s305 = sphi 0, %s302
      %s306 = sphi 0, %s305
      %s322 = sphi 0, %s306
      %s328 = sphi 0, %s330
      %s331 = sphi 0, %s328
      %s332 = sphi 0, %s331
      %s348 = sphi 0, %s332
      %s354 = sphi 0, %s356
      %s357 = sphi 0, %s354
      %s358 = sphi 0, %s357
      %s374 = sphi 0, %s358
      %s380 = sphi 0, %s382
      %s383 = sphi 0, %s380
      %s384 = sphi 0, %s383
      %s400 = sphi 0, %s384
      %s404 = sphi 0, %s404
      %s406 = sphi 0, %s404
      %s407 = sphi 0, %s406
      %s421 = sphi 0, %s407
      %s425 = sphi 0, %s425
      %s427 = sphi 0, %s425
      %s428 = sphi 0, %s427
      %s442 = sphi 0, %s428
      %s448 = sphi 0, %s450
      %s451 = sphi 0, %s448
      %s452 = sphi 0, %s451
      %s468 = sphi 0, %s452
    $region4: #{tpu_custom_call.1} parent=1 // loop_header_branch
      %28 = sbr.rel (%p26) target = $region8
    $region5: #{tpu_custom_call.1} parent=1 // loop_body
      %s30 = ssub.s32 %s25, 1
      %s31 = ssub.s32 %s25, 2
      %s38 = sadd.s32 1, %s33
      %p39 = scmp.ge.s32.totalorder %s38, 2
      %s40 = scalar_select %p39, 0, %s38
      %s41 = sadd.s32 1, %s32
      %s42 = scalar_select %p39, %s41, %s32
      %p43 = scmp.ge.s32.totalorder %s42, 2
      %s44 = scalar_select %p43, 0, %s42
      %s45 = ssub.s32 %s32, %s44
      %p46 = scmp.eq.s32.totalorder %s45, 0
      %s48 = sadd.s32 %s47, 1
      %s49 = scalar_select %p46, %s47, %s48
      %p52 = pneg %p46
      %p53 = scmp.eq.s32.totalorder %s25, 3
      %p54 = por %p52, %p53
      %p55 = scmp.ne.s32.totalorder %s47, %s50
      %p56 = scmp.eq.s32.totalorder %s25, 0
      %p57 = por %p55, %p56
      %p58 = scmp.ne.s32.totalorder %s47, %s50
      %p59 = scmp.eq.s32.totalorder %s30, 3
      %p60 = por %p58, %p59
      %p61 = scmp.ne.s32.totalorder %s50, %s51
      %p62 = scmp.eq.s32.totalorder %s30, 0
      %p63 = por %p61, %p62
      %p64 = scmp.ne.s32.totalorder %s50, %s51
      %p65 = scmp.eq.s32.totalorder %s31, 3
      %p66 = por %p64, %p65
      %p68 = scmp.ne.s32.totalorder %s51, %s67
      %p69 = scmp.eq.s32.totalorder %s31, 0
      %p70 = por %p68, %p69
      %s72 = sadd.s32 %s71, 1
      %p75 = scmp.eq.s32.totalorder %s25, 3
      %p76 = scmp.ne.s32.totalorder %s71, %s73
      %p77 = scmp.eq.s32.totalorder %s25, 0
      %p78 = por %p76, %p77
      %p79 = scmp.ne.s32.totalorder %s71, %s73
      %p80 = scmp.eq.s32.totalorder %s30, 3
      %p81 = por %p79, %p80
      %p82 = scmp.ne.s32.totalorder %s73, %s74
      %p83 = scmp.eq.s32.totalorder %s30, 0
      %p84 = por %p82, %p83
      %p85 = scmp.ne.s32.totalorder %s73, %s74
      %p86 = scmp.eq.s32.totalorder %s31, 3
      %p87 = por %p85, %p86
      %p89 = scmp.ne.s32.totalorder %s74, %s88
      %p90 = scmp.eq.s32.totalorder %s31, 0
      %p91 = por %p89, %p90
      %s92 = ssub.s32 %s33, %s40
      %p93 = scmp.eq.s32.totalorder %s92, 0
      %s95 = sadd.s32 %s94, 1
      %s96 = scalar_select %p93, %s94, %s95
      %p99 = pneg %p93
      %p100 = scmp.eq.s32.totalorder %s25, 3
      %p101 = por %p99, %p100
      %p102 = scmp.ne.s32.totalorder %s94, %s97
      %p103 = scmp.eq.s32.totalorder %s25, 0
      %p104 = por %p102, %p103
      %p105 = scmp.ne.s32.totalorder %s94, %s97
      %p106 = scmp.eq.s32.totalorder %s30, 3
      %p107 = por %p105, %p106
      %p108 = scmp.ne.s32.totalorder %s97, %s98
      %p109 = scmp.eq.s32.totalorder %s30, 0
      %p110 = por %p108, %p109
      %p111 = scmp.ne.s32.totalorder %s97, %s98
      %p112 = scmp.eq.s32.totalorder %s31, 3
      %p113 = por %p111, %p112
      %p115 = scmp.ne.s32.totalorder %s98, %s114
      %p116 = scmp.eq.s32.totalorder %s31, 0
      %p117 = por %p115, %p116
      %s118 = ssub.s32 %s33, %s40
      %p119 = scmp.eq.s32.totalorder %s118, 0
      %s121 = sadd.s32 %s120, 1
      %s122 = scalar_select %p119, %s120, %s121
      %p125 = pneg %p119
      %p126 = scmp.eq.s32.totalorder %s25, 3
      %p127 = por %p125, %p126
      %p128 = scmp.ne.s32.totalorder %s120, %s123
      %p129 = scmp.eq.s32.totalorder %s25, 0
      %p130 = por %p128, %p129
      %p131 = scmp.ne.s32.totalorder %s120, %s123
      %p132 = scmp.eq.s32.totalorder %s30, 3
      %p133 = por %p131, %p132
      %p134 = scmp.ne.s32.totalorder %s123, %s124
      %p135 = scmp.eq.s32.totalorder %s30, 0
      %p136 = por %p134, %p135
      %p137 = scmp.ne.s32.totalorder %s123, %s124
      %p138 = scmp.eq.s32.totalorder %s31, 3
      %p139 = por %p137, %p138
      %p141 = scmp.ne.s32.totalorder %s124, %s140
      %p142 = scmp.eq.s32.totalorder %s31, 0
      %p143 = por %p141, %p142
      %s144 = ssub.s32 %s33, %s40
      %p145 = scmp.eq.s32.totalorder %s144, 0
      %s147 = sadd.s32 %s146, 1
      %s148 = scalar_select %p145, %s146, %s147
      %p151 = pneg %p145
      %p152 = scmp.eq.s32.totalorder %s25, 3
      %p153 = por %p151, %p152
      %p154 = scmp.ne.s32.totalorder %s146, %s149
      %p155 = scmp.eq.s32.totalorder %s25, 0
      %p156 = por %p154, %p155
      %p157 = scmp.ne.s32.totalorder %s146, %s149
      %p158 = scmp.eq.s32.totalorder %s30, 3
      %p159 = por %p157, %p158
      %p160 = scmp.ne.s32.totalorder %s149, %s150
      %p161 = scmp.eq.s32.totalorder %s30, 0
      %p162 = por %p160, %p161
      %p163 = scmp.ne.s32.totalorder %s149, %s150
      %p164 = scmp.eq.s32.totalorder %s31, 3
      %p165 = por %p163, %p164
      %p167 = scmp.ne.s32.totalorder %s150, %s166
      %p168 = scmp.eq.s32.totalorder %s31, 0
      %p169 = por %p167, %p168
      %s170 = ssub.s32 %s33, %s40
      %p171 = scmp.eq.s32.totalorder %s170, 0
      %s173 = sadd.s32 %s172, 1
      %s174 = scalar_select %p171, %s172, %s173
      %p177 = pneg %p171
      %p178 = scmp.eq.s32.totalorder %s25, 3
      %p179 = por %p177, %p178
      %p180 = scmp.ne.s32.totalorder %s172, %s175
      %p181 = scmp.eq.s32.totalorder %s25, 0
      %p182 = por %p180, %p181
      %p183 = scmp.ne.s32.totalorder %s172, %s175
      %p184 = scmp.eq.s32.totalorder %s30, 3
      %p185 = por %p183, %p184
      %p186 = scmp.ne.s32.totalorder %s175, %s176
      %p187 = scmp.eq.s32.totalorder %s30, 0
      %p188 = por %p186, %p187
      %p189 = scmp.ne.s32.totalorder %s175, %s176
      %p190 = scmp.eq.s32.totalorder %s31, 3
      %p191 = por %p189, %p190
      %p193 = scmp.ne.s32.totalorder %s176, %s192
      %p194 = scmp.eq.s32.totalorder %s31, 0
      %p195 = por %p193, %p194
      %s196 = ssub.s32 %s33, %s40
      %p197 = scmp.eq.s32.totalorder %s196, 0
      %s199 = sadd.s32 %s198, 1
      %s200 = scalar_select %p197, %s198, %s199
      %p203 = pneg %p197
      %p204 = scmp.eq.s32.totalorder %s25, 3
      %p205 = por %p203, %p204
      %p206 = scmp.ne.s32.totalorder %s198, %s201
      %p207 = scmp.eq.s32.totalorder %s25, 0
      %p208 = por %p206, %p207
      %p209 = scmp.ne.s32.totalorder %s198, %s201
      %p210 = scmp.eq.s32.totalorder %s30, 3
      %p211 = por %p209, %p210
      %p212 = scmp.ne.s32.totalorder %s201, %s202
      %p213 = scmp.eq.s32.totalorder %s30, 0
      %p214 = por %p212, %p213
      %p215 = scmp.ne.s32.totalorder %s201, %s202
      %p216 = scmp.eq.s32.totalorder %s31, 3
      %p217 = por %p215, %p216
      %p219 = scmp.ne.s32.totalorder %s202, %s218
      %p220 = scmp.eq.s32.totalorder %s31, 0
      %p221 = por %p219, %p220
      %s222 = ssub.s32 %s33, %s40
      %p223 = scmp.eq.s32.totalorder %s222, 0
      %s225 = sadd.s32 %s224, 1
      %s226 = scalar_select %p223, %s224, %s225
      %p229 = pneg %p223
      %p230 = scmp.eq.s32.totalorder %s25, 3
      %p231 = por %p229, %p230
      %p232 = scmp.ne.s32.totalorder %s224, %s227
      %p233 = scmp.eq.s32.totalorder %s25, 0
      %p234 = por %p232, %p233
      %p235 = scmp.ne.s32.totalorder %s224, %s227
      %p236 = scmp.eq.s32.totalorder %s30, 3
      %p237 = por %p235, %p236
      %p238 = scmp.ne.s32.totalorder %s227, %s228
      %p239 = scmp.eq.s32.totalorder %s30, 0
      %p240 = por %p238, %p239
      %p241 = scmp.ne.s32.totalorder %s227, %s228
      %p242 = scmp.eq.s32.totalorder %s31, 3
      %p243 = por %p241, %p242
      %p245 = scmp.ne.s32.totalorder %s228, %s244
      %p246 = scmp.eq.s32.totalorder %s31, 0
      %p247 = por %p245, %p246
      %s248 = ssub.s32 %s33, %s40
      %p249 = scmp.eq.s32.totalorder %s248, 0
      %s251 = sadd.s32 %s250, 1
      %s252 = scalar_select %p249, %s250, %s251
      %p255 = pneg %p249
      %p256 = scmp.eq.s32.totalorder %s25, 3
      %p257 = por %p255, %p256
      %p258 = scmp.ne.s32.totalorder %s250, %s253
      %p259 = scmp.eq.s32.totalorder %s25, 0
      %p260 = por %p258, %p259
      %p261 = scmp.ne.s32.totalorder %s250, %s253
      %p262 = scmp.eq.s32.totalorder %s30, 3
      %p263 = por %p261, %p262
      %p264 = scmp.ne.s32.totalorder %s253, %s254
      %p265 = scmp.eq.s32.totalorder %s30, 0
      %p266 = por %p264, %p265
      %p267 = scmp.ne.s32.totalorder %s253, %s254
      %p268 = scmp.eq.s32.totalorder %s31, 3
      %p269 = por %p267, %p268
      %p271 = scmp.ne.s32.totalorder %s254, %s270
      %p272 = scmp.eq.s32.totalorder %s31, 0
      %p273 = por %p271, %p272
      %s274 = ssub.s32 %s33, %s40
      %p275 = scmp.eq.s32.totalorder %s274, 0
      %s277 = sadd.s32 %s276, 1
      %s278 = scalar_select %p275, %s276, %s277
      %p281 = pneg %p275
      %p282 = scmp.eq.s32.totalorder %s25, 3
      %p283 = por %p281, %p282
      %p284 = scmp.ne.s32.totalorder %s276, %s279
      %p285 = scmp.eq.s32.totalorder %s25, 0
      %p286 = por %p284, %p285
      %p287 = scmp.ne.s32.totalorder %s276, %s279
      %p288 = scmp.eq.s32.totalorder %s30, 3
      %p289 = por %p287, %p288
      %p290 = scmp.ne.s32.totalorder %s279, %s280
      %p291 = scmp.eq.s32.totalorder %s30, 0
      %p292 = por %p290, %p291
      %p293 = scmp.ne.s32.totalorder %s279, %s280
      %p294 = scmp.eq.s32.totalorder %s31, 3
      %p295 = por %p293, %p294
      %p297 = scmp.ne.s32.totalorder %s280, %s296
      %p298 = scmp.eq.s32.totalorder %s31, 0
      %p299 = por %p297, %p298
      %s300 = ssub.s32 %s33, %s40
      %p301 = scmp.eq.s32.totalorder %s300, 0
      %s303 = sadd.s32 %s302, 1
      %s304 = scalar_select %p301, %s302, %s303
      %p307 = pneg %p301
      %p308 = scmp.eq.s32.totalorder %s25, 3
      %p309 = por %p307, %p308
      %p310 = scmp.ne.s32.totalorder %s302, %s305
      %p311 = scmp.eq.s32.totalorder %s25, 0
      %p312 = por %p310, %p311
      %p313 = scmp.ne.s32.totalorder %s302, %s305
      %p314 = scmp.eq.s32.totalorder %s30, 3
      %p315 = por %p313, %p314
      %p316 = scmp.ne.s32.totalorder %s305, %s306
      %p317 = scmp.eq.s32.totalorder %s30, 0
      %p318 = por %p316, %p317
      %p319 = scmp.ne.s32.totalorder %s305, %s306
      %p320 = scmp.eq.s32.totalorder %s31, 3
      %p321 = por %p319, %p320
      %p323 = scmp.ne.s32.totalorder %s306, %s322
      %p324 = scmp.eq.s32.totalorder %s31, 0
      %p325 = por %p323, %p324
      %s326 = ssub.s32 %s33, %s40
      %p327 = scmp.eq.s32.totalorder %s326, 0
      %s329 = sadd.s32 %s328, 1
      %s330 = scalar_select %p327, %s328, %s329
      %p333 = pneg %p327
      %p334 = scmp.eq.s32.totalorder %s25, 3
      %p335 = por %p333, %p334
      %p336 = scmp.ne.s32.totalorder %s328, %s331
      %p337 = scmp.eq.s32.totalorder %s25, 0
      %p338 = por %p336, %p337
      %p339 = scmp.ne.s32.totalorder %s328, %s331
      %p340 = scmp.eq.s32.totalorder %s30, 3
      %p341 = por %p339, %p340
      %p342 = scmp.ne.s32.totalorder %s331, %s332
      %p343 = scmp.eq.s32.totalorder %s30, 0
      %p344 = por %p342, %p343
      %p345 = scmp.ne.s32.totalorder %s331, %s332
      %p346 = scmp.eq.s32.totalorder %s31, 3
      %p347 = por %p345, %p346
      %p349 = scmp.ne.s32.totalorder %s332, %s348
      %p350 = scmp.eq.s32.totalorder %s31, 0
      %p351 = por %p349, %p350
      %s352 = ssub.s32 %s33, %s40
      %p353 = scmp.eq.s32.totalorder %s352, 0
      %s355 = sadd.s32 %s354, 1
      %s356 = scalar_select %p353, %s354, %s355
      %p359 = pneg %p353
      %p360 = scmp.eq.s32.totalorder %s25, 3
      %p361 = por %p359, %p360
      %p362 = scmp.ne.s32.totalorder %s354, %s357
      %p363 = scmp.eq.s32.totalorder %s25, 0
      %p364 = por %p362, %p363
      %p365 = scmp.ne.s32.totalorder %s354, %s357
      %p366 = scmp.eq.s32.totalorder %s30, 3
      %p367 = por %p365, %p366
      %p368 = scmp.ne.s32.totalorder %s357, %s358
      %p369 = scmp.eq.s32.totalorder %s30, 0
      %p370 = por %p368, %p369
      %p371 = scmp.ne.s32.totalorder %s357, %s358
      %p372 = scmp.eq.s32.totalorder %s31, 3
      %p373 = por %p371, %p372
      %p375 = scmp.ne.s32.totalorder %s358, %s374
      %p376 = scmp.eq.s32.totalorder %s31, 0
      %p377 = por %p375, %p376
      %s378 = ssub.s32 %s33, %s40
      %p379 = scmp.eq.s32.totalorder %s378, 0
      %s381 = sadd.s32 %s380, 1
      %s382 = scalar_select %p379, %s380, %s381
      %p385 = pneg %p379
      %p386 = scmp.eq.s32.totalorder %s25, 3
      %p387 = por %p385, %p386
      %p388 = scmp.ne.s32.totalorder %s380, %s383
      %p389 = scmp.eq.s32.totalorder %s25, 0
      %p390 = por %p388, %p389
      %p391 = scmp.ne.s32.totalorder %s380, %s383
      %p392 = scmp.eq.s32.totalorder %s30, 3
      %p393 = por %p391, %p392
      %p394 = scmp.ne.s32.totalorder %s383, %s384
      %p395 = scmp.eq.s32.totalorder %s30, 0
      %p396 = por %p394, %p395
      %p397 = scmp.ne.s32.totalorder %s383, %s384
      %p398 = scmp.eq.s32.totalorder %s31, 3
      %p399 = por %p397, %p398
      %p401 = scmp.ne.s32.totalorder %s384, %s400
      %p402 = scmp.eq.s32.totalorder %s31, 0
      %p403 = por %p401, %p402
      %s405 = sadd.s32 %s404, 1
      %p408 = scmp.eq.s32.totalorder %s25, 3
      %p409 = scmp.ne.s32.totalorder %s404, %s406
      %p410 = scmp.eq.s32.totalorder %s25, 0
      %p411 = por %p409, %p410
      %p412 = scmp.ne.s32.totalorder %s404, %s406
      %p413 = scmp.eq.s32.totalorder %s30, 3
      %p414 = por %p412, %p413
      %p415 = scmp.ne.s32.totalorder %s406, %s407
      %p416 = scmp.eq.s32.totalorder %s30, 0
      %p417 = por %p415, %p416
      %p418 = scmp.ne.s32.totalorder %s406, %s407
      %p419 = scmp.eq.s32.totalorder %s31, 3
      %p420 = por %p418, %p419
      %p422 = scmp.ne.s32.totalorder %s407, %s421
      %p423 = scmp.eq.s32.totalorder %s31, 0
      %p424 = por %p422, %p423
      %s426 = sadd.s32 %s425, 1
      %p429 = scmp.eq.s32.totalorder %s25, 3
      %p430 = scmp.ne.s32.totalorder %s425, %s427
      %p431 = scmp.eq.s32.totalorder %s25, 0
      %p432 = por %p430, %p431
      %p433 = scmp.ne.s32.totalorder %s425, %s427
      %p434 = scmp.eq.s32.totalorder %s30, 3
      %p435 = por %p433, %p434
      %p436 = scmp.ne.s32.totalorder %s427, %s428
      %p437 = scmp.eq.s32.totalorder %s30, 0
      %p438 = por %p436, %p437
      %p439 = scmp.ne.s32.totalorder %s427, %s428
      %p440 = scmp.eq.s32.totalorder %s31, 3
      %p441 = por %p439, %p440
      %p443 = scmp.ne.s32.totalorder %s428, %s442
      %p444 = scmp.eq.s32.totalorder %s31, 0
      %p445 = por %p443, %p444
      %s446 = ssub.s32 %s32, %s44
      %p447 = scmp.eq.s32.totalorder %s446, 0
      %s449 = sadd.s32 %s448, 1
      %s450 = scalar_select %p447, %s448, %s449
      %p453 = pneg %p447
      %p454 = scmp.eq.s32.totalorder %s25, 3
      %p455 = por %p453, %p454
      %p456 = scmp.ne.s32.totalorder %s448, %s451
      %p457 = scmp.eq.s32.totalorder %s25, 0
      %p458 = por %p456, %p457
      %p459 = scmp.ne.s32.totalorder %s448, %s451
      %p460 = scmp.eq.s32.totalorder %s30, 3
      %p461 = por %p459, %p460
      %p462 = scmp.ne.s32.totalorder %s451, %s452
      %p463 = scmp.eq.s32.totalorder %s30, 0
      %p464 = por %p462, %p463
      %p465 = scmp.ne.s32.totalorder %s451, %s452
      %p466 = scmp.eq.s32.totalorder %s31, 3
      %p467 = por %p465, %p466
      %p469 = scmp.ne.s32.totalorder %s452, %s468
      %p470 = scmp.eq.s32.totalorder %s31, 0
      %p471 = por %p469, %p470
      %p472 = scmp.le.s32.totalorder 1, %s25
      %p473 = scmp.lt.s32.totalorder %s25, 5
      %p474 = pnand %p472, %p473
      %p475 = pneg %p474
      // Predicated region
      $region9: #{tpu_custom_call.1} parent=5 // pred_check
        _
      $region10: #{tpu_custom_call.1} parent=5 // pred_check_branch
        %477 = sbr.rel (%p474) target = $region12
      $region11: #{tpu_custom_call.1} parent=5 // pred_region
        %s478 = ssub.s32 %s25, 1
        // Predicated region
        $region13: #{tpu_custom_call.1} parent=11 // pred_check
          %p479 = pneg %p84
        $region14: #{tpu_custom_call.1} parent=11 // pred_check_branch
          %481 = sbr.rel (%p479) target = $region16
        $region15: #{tpu_custom_call.1} parent=11 // pred_region
          _
        $region16: #{tpu_custom_call.1} parent=11 // pred_fallthru
          _
        // Predicated region
        $region17: #{tpu_custom_call.1} parent=11 // pred_check
          %p482 = pneg %p417
        $region18: #{tpu_custom_call.1} parent=11 // pred_check_branch
          %484 = sbr.rel (%p482) target = $region20
        $region19: #{tpu_custom_call.1} parent=11 // pred_region
          _
        $region20: #{tpu_custom_call.1} parent=11 // pred_fallthru
          _
        // Predicated region
        $region21: #{tpu_custom_call.1} parent=11 // pred_check
          %p485 = pneg %p438
        $region22: #{tpu_custom_call.1} parent=11 // pred_check_branch
          %487 = sbr.rel (%p485) target = $region24
        $region23: #{tpu_custom_call.1} parent=11 // pred_region
          _
        $region24: #{tpu_custom_call.1} parent=11 // pred_fallthru
          _
      $region12: #{tpu_custom_call.1} parent=5 // pred_fallthru
        _
      %p488 = scmp.lt.s32.totalorder %s25, 4
      // Predicated region
      $region25: #{tpu_custom_call.1} parent=5 // pred_check
        %p489 = pneg %p488
      $region26: #{tpu_custom_call.1} parent=5 // pred_check_branch
        %491 = sbr.rel (%p489) target = $region28
      $region27: #{tpu_custom_call.1} parent=5 // pred_region
        // Predicated region
        $region29: #{tpu_custom_call.1} parent=27 // pred_check
          %p492 = pneg %p57
        $region30: #{tpu_custom_call.1} parent=27 // pred_check_branch
          %494 = sbr.rel (%p492) target = $region32
        $region31: #{tpu_custom_call.1} parent=27 // pred_region
          %s495 = smul.u32 2, %s32
          %p496 = scmp.lt.s32.totalorder %s495, 3
          %s497 = scalar_select %p496, %s495, 3
          %s498 = smul.addr %s497, 8
          %s499 = scalar_lea.vmem %s0, %s498
          %s500 = smul.u32 2, %s32
        $region32: #{tpu_custom_call.1} parent=27 // pred_fallthru
          _
        // Predicated region
        $region33: #{tpu_custom_call.1} parent=27 // pred_check
          %p501 = pneg %p104
        $region34: #{tpu_custom_call.1} parent=27 // pred_check_branch
          %503 = sbr.rel (%p501) target = $region36
        $region35: #{tpu_custom_call.1} parent=27 // pred_region
          %p504 = scmp.lt.s32.totalorder %s33, 1
          %s505 = scalar_select %p504, %s33, 1
          %s506 = scalar_lea.vmem %s2, %s505
        $region36: #{tpu_custom_call.1} parent=27 // pred_fallthru
          _
        // Predicated region
        $region37: #{tpu_custom_call.1} parent=27 // pred_check
          %p507 = pneg %p130
        $region38: #{tpu_custom_call.1} parent=27 // pred_check_branch
          %509 = sbr.rel (%p507) target = $region40
        $region39: #{tpu_custom_call.1} parent=27 // pred_region
          %p510 = scmp.lt.s32.totalorder %s33, 1
          %s511 = scalar_select %p510, %s33, 1
          %s512 = scalar_lea.vmem %s3, %s511
        $region40: #{tpu_custom_call.1} parent=27 // pred_fallthru
          _
        // Predicated region
        $region41: #{tpu_custom_call.1} parent=27 // pred_check
          %p513 = pneg %p156
        $region42: #{tpu_custom_call.1} parent=27 // pred_check_branch
          %515 = sbr.rel (%p513) target = $region44
        $region43: #{tpu_custom_call.1} parent=27 // pred_region
          %p516 = scmp.lt.s32.totalorder %s33, 1
          %s517 = scalar_select %p516, %s33, 1
          %s518 = smul.addr %s517, 4
          %s519 = smul.addr %s518, 4
          %s520 = scalar_lea.vmem %s4, %s519
        $region44: #{tpu_custom_call.1} parent=27 // pred_fallthru
          _
        // Predicated region
        $region45: #{tpu_custom_call.1} parent=27 // pred_check
          %p521 = pneg %p182
        $region46: #{tpu_custom_call.1} parent=27 // pred_check_branch
          %523 = sbr.rel (%p521) target = $region48
        $region47: #{tpu_custom_call.1} parent=27 // pred_region
          %p524 = scmp.lt.s32.totalorder %s33, 1
          %s525 = scalar_select %p524, %s33, 1
          %s526 = scalar_lea.vmem %s5, %s525
        $region48: #{tpu_custom_call.1} parent=27 // pred_fallthru
          _
        // Predicated region
        $region49: #{tpu_custom_call.1} parent=27 // pred_check
          %p527 = pneg %p208
        $region50: #{tpu_custom_call.1} parent=27 // pred_check_branch
          %529 = sbr.rel (%p527) target = $region52
        $region51: #{tpu_custom_call.1} parent=27 // pred_region
          %p530 = scmp.lt.s32.totalorder %s33, 1
          %s531 = scalar_select %p530, %s33, 1
          %s532 = smul.addr %s531, 4
          %s533 = smul.addr %s532, 4
          %s534 = scalar_lea.vmem %s6, %s533
        $region52: #{tpu_custom_call.1} parent=27 // pred_fallthru
          _
        // Predicated region
        $region53: #{tpu_custom_call.1} parent=27 // pred_check
          %p535 = pneg %p234
        $region54: #{tpu_custom_call.1} parent=27 // pred_check_branch
          %537 = sbr.rel (%p535) target = $region56
        $region55: #{tpu_custom_call.1} parent=27 // pred_region
          %p538 = scmp.lt.s32.totalorder %s33, 1
          %s539 = scalar_select %p538, %s33, 1
          %s540 = scalar_lea.vmem %s7, %s539
        $region56: #{tpu_custom_call.1} parent=27 // pred_fallthru
          _
        // Predicated region
        $region57: #{tpu_custom_call.1} parent=27 // pred_check
          %p541 = pneg %p260
        $region58: #{tpu_custom_call.1} parent=27 // pred_check_branch
          %543 = sbr.rel (%p541) target = $region60
        $region59: #{tpu_custom_call.1} parent=27 // pred_region
          %p544 = scmp.lt.s32.totalorder %s33, 1
          %s545 = scalar_select %p544, %s33, 1
          %s546 = scalar_lea.vmem %s8, %s545
        $region60: #{tpu_custom_call.1} parent=27 // pred_fallthru
          _
        // Predicated region
        $region61: #{tpu_custom_call.1} parent=27 // pred_check
          %p547 = pneg %p286
        $region62: #{tpu_custom_call.1} parent=27 // pred_check_branch
          %549 = sbr.rel (%p547) target = $region64
        $region63: #{tpu_custom_call.1} parent=27 // pred_region
          %p550 = scmp.lt.s32.totalorder %s33, 1
          %s551 = scalar_select %p550, %s33, 1
          %s552 = scalar_lea.vmem %s9, %s551
        $region64: #{tpu_custom_call.1} parent=27 // pred_fallthru
          _
        // Predicated region
        $region65: #{tpu_custom_call.1} parent=27 // pred_check
          %p553 = pneg %p312
        $region66: #{tpu_custom_call.1} parent=27 // pred_check_branch
          %555 = sbr.rel (%p553) target = $region68
        $region67: #{tpu_custom_call.1} parent=27 // pred_region
          %p556 = scmp.lt.s32.totalorder %s33, 1
          %s557 = scalar_select %p556, %s33, 1
          %s558 = smul.addr %s557, 4
          %s559 = smul.addr %s558, 4
          %s560 = scalar_lea.vmem %s10, %s559
        $region68: #{tpu_custom_call.1} parent=27 // pred_fallthru
          _
        // Predicated region
        $region69: #{tpu_custom_call.1} parent=27 // pred_check
          %p561 = pneg %p338
        $region70: #{tpu_custom_call.1} parent=27 // pred_check_branch
          %563 = sbr.rel (%p561) target = $region72
        $region71: #{tpu_custom_call.1} parent=27 // pred_region
          %p564 = scmp.lt.s32.totalorder %s33, 1
          %s565 = scalar_select %p564, %s33, 1
          %s566 = scalar_lea.vmem %s11, %s565
        $region72: #{tpu_custom_call.1} parent=27 // pred_fallthru
          _
        // Predicated region
        $region73: #{tpu_custom_call.1} parent=27 // pred_check
          %p567 = pneg %p364
        $region74: #{tpu_custom_call.1} parent=27 // pred_check_branch
          %569 = sbr.rel (%p567) target = $region76
        $region75: #{tpu_custom_call.1} parent=27 // pred_region
          %p570 = scmp.lt.s32.totalorder %s33, 1
          %s571 = scalar_select %p570, %s33, 1
          %s572 = smul.addr %s571, 16
          %s573 = smul.addr %s572, 4
          %s574 = scalar_lea.vmem %s12, %s573
        $region76: #{tpu_custom_call.1} parent=27 // pred_fallthru
          _
        // Predicated region
        $region77: #{tpu_custom_call.1} parent=27 // pred_check
          %p575 = pneg %p390
        $region78: #{tpu_custom_call.1} parent=27 // pred_check_branch
          %577 = sbr.rel (%p575) target = $region80
        $region79: #{tpu_custom_call.1} parent=27 // pred_region
          %p578 = scmp.lt.s32.totalorder %s33, 1
          %s579 = scalar_select %p578, %s33, 1
          %s580 = scalar_lea.vmem %s13, %s579
        $region80: #{tpu_custom_call.1} parent=27 // pred_fallthru
          _
      $region28: #{tpu_custom_call.1} parent=5 // pred_fallthru
        _
      %p581 = scmp.le.s32.totalorder 1, %s25
      %p582 = scmp.lt.s32.totalorder %s25, 5
      %p583 = pnand %p581, %p582
      %p584 = pneg %p583
      // Predicated region
      $region81: #{tpu_custom_call.1} parent=5 // pred_check
        _
      $region82: #{tpu_custom_call.1} parent=5 // pred_check_branch
        %586 = sbr.rel (%p583) target = $region84
      $region83: #{tpu_custom_call.1} parent=5 // pred_region
        %s587 = ssub.s32 %s25, 1
        %s588 = smul.u32 2, %s34
        %p589 = scmp.lt.s32.totalorder %s588, 3
        %s590 = scalar_select %p589, %s588, 3
        %s591 = smul.addr %s590, 8
        %s592 = scalar_lea.vmem %s0, %s591
        %p593 = pneg %p63
        %p594 = pneg %p60
        %p595 = pneg %p84
        %p596 = pneg %p81
        %p597 = scmp.lt.s32.totalorder %s35, 1
        %s598 = scalar_select %p597, %s35, 1
        %s599 = scalar_lea.vmem %s2, %s598
        %p600 = pneg %p110
        %p601 = pneg %p107
        %p602 = scmp.lt.s32.totalorder %s35, 1
        %s603 = scalar_select %p602, %s35, 1
        %s604 = scalar_lea.vmem %s3, %s603
        %p605 = pneg %p136
        %p606 = pneg %p133
        %p607 = scmp.lt.s32.totalorder %s35, 1
        %s608 = scalar_select %p607, %s35, 1
        %s609 = smul.addr %s608, 4
        %s610 = smul.addr %s609, 4
        %s611 = scalar_lea.vmem %s4, %s610
        %p612 = pneg %p162
        %p613 = pneg %p159
        %p614 = scmp.lt.s32.totalorder %s35, 1
        %s615 = scalar_select %p614, %s35, 1
        %s616 = scalar_lea.vmem %s5, %s615
        %p617 = pneg %p188
        %p618 = pneg %p185
        %p619 = scmp.lt.s32.totalorder %s35, 1
        %s620 = scalar_select %p619, %s35, 1
        %s621 = smul.addr %s620, 4
        %s622 = smul.addr %s621, 4
        %s623 = scalar_lea.vmem %s6, %s622
        %p624 = pneg %p214
        %p625 = pneg %p211
        %p626 = scmp.lt.s32.totalorder %s35, 1
        %s627 = scalar_select %p626, %s35, 1
        %s628 = scalar_lea.vmem %s7, %s627
        %p629 = pneg %p240
        %p630 = pneg %p237
        %p631 = scmp.lt.s32.totalorder %s35, 1
        %s632 = scalar_select %p631, %s35, 1
        %s633 = scalar_lea.vmem %s8, %s632
        %p634 = pneg %p266
        %p635 = pneg %p263
        %p636 = scmp.lt.s32.totalorder %s35, 1
        %s637 = scalar_select %p636, %s35, 1
        %s638 = scalar_lea.vmem %s9, %s637
        %p639 = pneg %p292
        %p640 = pneg %p289
        %p641 = scmp.lt.s32.totalorder %s35, 1
        %s642 = scalar_select %p641, %s35, 1
        %s643 = smul.addr %s642, 4
        %s644 = smul.addr %s643, 4
        %s645 = scalar_lea.vmem %s10, %s644
        %p646 = pneg %p318
        %p647 = pneg %p315
        %p648 = scmp.lt.s32.totalorder %s35, 1
        %s649 = scalar_select %p648, %s35, 1
        %s650 = scalar_lea.vmem %s11, %s649
        %p651 = pneg %p344
        %p652 = pneg %p341
        %p653 = scmp.lt.s32.totalorder %s35, 1
        %s654 = scalar_select %p653, %s35, 1
        %s655 = smul.addr %s654, 16
        %s656 = smul.addr %s655, 4
        %s657 = scalar_lea.vmem %s12, %s656
        %p658 = pneg %p370
        %p659 = pneg %p367
        %p660 = scmp.lt.s32.totalorder %s35, 1
        %s661 = scalar_select %p660, %s35, 1
        %s662 = scalar_lea.vmem %s13, %s661
        %p663 = pneg %p396
        %p664 = pneg %p393
        %p665 = pneg %p417
        %p666 = pneg %p414
        %p667 = pneg %p438
        %p668 = pneg %p435
        %p669 = pneg %p464
        %p670 = pneg %p461
        %s671 = sand.u32 %s451, 1
        %s672 = scalar_lea.sflag [#allocation4], %s671
        %s673 = sand.u32 %s451, 1
        %s674 = smul.addr %s673, 16
        %s675 = scalar_lea.vmem [#allocation3], %s674
        %s676 = smul.u32 2, %s34
        %p677 = scmp.lt.s32.totalorder %s676, 3
        %s678 = scalar_select %p677, %s676, 3
        %s679 = smul.addr %s678, 8
        %s680 = scalar_lea.vmem %s0, %s679
        %s681 = smul.u32 2, %s34
        %p682 = scmp.lt.s32.totalorder %s35, 1
        %s683 = scalar_select %p682, %s35, 1
        %s684 = scalar_lea.vmem %s2, %s683
        %p685 = scmp.lt.s32.totalorder %s35, 1
        %s686 = scalar_select %p685, %s35, 1
        %s687 = scalar_lea.vmem %s3, %s686
        %p688 = scmp.lt.s32.totalorder %s35, 1
        %s689 = scalar_select %p688, %s35, 1
        %s690 = smul.addr %s689, 4
        %s691 = smul.addr %s690, 4
        %s692 = scalar_lea.vmem %s4, %s691
        %p693 = scmp.lt.s32.totalorder %s35, 1
        %s694 = scalar_select %p693, %s35, 1
        %s695 = scalar_lea.vmem %s5, %s694
        %p696 = scmp.lt.s32.totalorder %s35, 1
        %s697 = scalar_select %p696, %s35, 1
        %s698 = smul.addr %s697, 4
        %s699 = smul.addr %s698, 4
        %s700 = scalar_lea.vmem %s6, %s699
        %p701 = scmp.lt.s32.totalorder %s35, 1
        %s702 = scalar_select %p701, %s35, 1
        %s703 = scalar_lea.vmem %s7, %s702
        %p704 = scmp.lt.s32.totalorder %s35, 1
        %s705 = scalar_select %p704, %s35, 1
        %s706 = scalar_lea.vmem %s8, %s705
        %p707 = scmp.lt.s32.totalorder %s35, 1
        %s708 = scalar_select %p707, %s35, 1
        %s709 = scalar_lea.vmem %s9, %s708
        %p710 = scmp.lt.s32.totalorder %s35, 1
        %s711 = scalar_select %p710, %s35, 1
        %s712 = smul.addr %s711, 4
        %s713 = smul.addr %s712, 4
        %s714 = scalar_lea.vmem %s10, %s713
        %p715 = scmp.lt.s32.totalorder %s35, 1
        %s716 = scalar_select %p715, %s35, 1
        %s717 = scalar_lea.vmem %s11, %s716
        %p718 = scmp.lt.s32.totalorder %s35, 1
        %s719 = scalar_select %p718, %s35, 1
        %s720 = smul.addr %s719, 16
        %s721 = smul.addr %s720, 4
        %s722 = scalar_lea.vmem %s12, %s721
        %p723 = scmp.lt.s32.totalorder %s35, 1
        %s724 = scalar_select %p723, %s35, 1
        %s725 = scalar_lea.vmem %s13, %s724
        %s726 = smul.u32 2, %s34
        %p728 = scmp.eq.s32.totalorder %s35, 0
        // Predicated region
        $region85: #{tpu_custom_call.1} parent=83 // pred_check
          %p729 = pneg %p728
        $region86: #{tpu_custom_call.1} parent=83 // pred_check_branch
          %731 = sbr.rel (%p729) target = $region88
        $region87: #{tpu_custom_call.1} parent=83 // pred_region
          %v732 = vld [vmem:[%s680] sm:$0xff]
          %v733 = vld [vmem:[%s680 + $0x8] sm:$0xff]
          %v734 = vld [vmem:[%s1] sm:$0xff]
          %v735 = vadd.f32 %v732, %v734
          %v736 = vadd.f32 %v733, %v734
          %vm737 = vcmask 261120
          %738 = vst.msk [vmem:[#allocation2] sm:$0xff] %vm737, %v735
          %739 = vst.msk [vmem:[#allocation2 + $0x8] sm:$0xff] %vm737, %v736
        $region88: #{tpu_custom_call.1} parent=83 // pred_fallthru
          _
        %v740 = vld [vmem:[#allocation2] sm:$0xff]
        %v741 = vld [vmem:[#allocation2 + $0x8] sm:$0xff]
        %v742 = vld [vmem:[%s684] sm:$0x1]
        %v743 = vld [vmem:[%s687] sm:$0x1]
        %vm744 = vcmask 261120
        %v745 = vsel %vm744, %v740, 0.0
        %746 = vadd.xlane.f32.xlu0 %v745
        %v747 = vpop.xlane.xlu0 %746
        %v748 = vsel %vm744, %v741, 0.0
        %749 = vadd.xlane.f32.xlu0 %v748
        %v750 = vpop.xlane.xlu0 %749
        %v751 = vrcp.pop 32.0
        %v752 = vmul.f32 %v747, %v751
        %v753 = vmul.f32 %v750, %v751
        %v754 = vsub.f32 %v740, %v752
        %v755 = vsub.f32 %v741, %v753
        %v756 = vmul.f32 %v754, %v754
        %v757 = vmul.f32 %v755, %v755
        %v758 = vsel %vm744, %v756, 0.0
        %759 = vadd.xlane.f32.xlu0 %v758
        %v760 = vpop.xlane.xlu0 %759
        %v761 = vsel %vm744, %v757, 0.0
        %762 = vadd.xlane.f32.xlu0 %v761
        %v763 = vpop.xlane.xlu0 %762
        %v764 = vmul.f32 %v760, %v751
        %v765 = vmul.f32 %v763, %v751
        %v766 = vadd.f32 %v764, 1e-05
        %v767 = vadd.f32 %v765, 1e-05
        %v768 = vrsqrt.pop %v766
        %v769 = vrsqrt.pop %v767
        %v770 = vmul.f32 %v754, %v768
        %v771 = vmul.f32 %v755, %v769
        %v773 = vlaneseq
        %v774 = vshrl.u32 %v773, 7
        %v775 = vsub.s32 0, %v774
        %v776 = vrot.slane %v742, %v775
        %v778 = vmul.f32 %v770, %v776
        %v779 = vmul.f32 %v771, %v776
        %v781 = vlaneseq
        %v782 = vshrl.u32 %v781, 7
        %v783 = vsub.s32 0, %v782
        %v784 = vrot.slane %v743, %v783
        %v786 = vadd.f32 %v778, %v784
        %v787 = vadd.f32 %v779, %v784
        %v788 = vpack.c.bf16 %v787, %v786
        %v789 = vld [vmem:[%s692] sm:$0xf]
        %v790 = vld [vmem:[%s692 + $0x4] sm:$0xf]
        %v791 = vld [vmem:[%s692 + $0x8] sm:$0xf]
        %v792 = vld [vmem:[%s692 + $0xc] sm:$0xf]
        %v793 = vld [vmem:[%s695] sm:$0x1]
        %v795 = vlaneseq
        %v796 = vshrl.u32 %v795, 7
        %v797 = vsub.s32 0, %v796
        %v798 = vrot.slane %v793, %v797
        %v804 = vunpack.c.l.b16 %v789
        %v805 = vunpack.c.l.b16 %v790
        %v806 = vunpack.c.l.b16 %v791
        %v807 = vunpack.c.l.b16 %v792
        %v808 = vpack.c.b16 %v805, %v804
        %v809 = vpack.c.b16 %v807, %v806
        %v813 = vsel %vm744, %v788, 0
        %815 = vmatprep.subr.bf16.mxu0 0
        %816 = vmatpush1.bf16.msra.mxu0 %v808
        %817 = vmatprep.subr.bf16.mxu0 0
        %818 = vmatpush1.bf16.msra.mxu0 %v809
        %819 = vmatprep.subr.bf16.mxu0 0
        %820 = vmatpush1.bf16.msra.mxu0 0
        %821 = vmatprep.subr.bf16.mxu0 0
        %822 = vmatpush1.bf16.msra.mxu0 0
        %823 = vmatprep.subr.bf16.mxu0 0
        %824 = vmatpush1.bf16.msra.mxu0 0
        %825 = vmatprep.subr.bf16.mxu0 0
        %826 = vmatpush1.bf16.msra.mxu0 0
        %827 = vmatprep.subr.bf16.mxu0 0
        %828 = vmatpush1.bf16.msra.mxu0 0
        %829 = vmatprep.subr.bf16.mxu0 0
        %830 = vmatpush1.bf16.msra.mxu0 0
        %831 = vmatprep.subr.bf16.mxu0 0
        %832 = vmatpush1.bf16.msra.mxu0 0
        %833 = vmatprep.subr.bf16.mxu0 0
        %834 = vmatpush1.bf16.msra.mxu0 0
        %835 = vmatprep.subr.bf16.mxu0 0
        %836 = vmatpush1.bf16.msra.mxu0 0
        %837 = vmatprep.subr.bf16.mxu0 0
        %838 = vmatpush1.bf16.msra.mxu0 0
        %839 = vmatprep.subr.bf16.mxu0 0
        %840 = vmatpush1.bf16.msra.mxu0 0
        %841 = vmatprep.subr.bf16.mxu0 0
        %842 = vmatpush1.bf16.msra.mxu0 0
        %843 = vmatprep.subr.bf16.mxu0 0
        %844 = vmatpush1.bf16.msra.mxu0 0
        %845 = vmatprep.subr.bf16.mxu0 0
        %846 = vmatpush1.bf16.msra.mxu0 0
        %847 = vmatprep.mubr.bf16.mxu0 0
        %848 = vmatmul.mubr.bf16.gmra.mrb[0].mxu0 %v813
        %v849 = vpop.f32.mrb[0].mxu0
        %v850 = vadd.f32 %v798, %v849
        %v851 = vpop.f32.mrb[0].mxu0
        %v852 = vpop.f32.mrb[0].mxu0
        %v853 = vadd.f32 %v798, %v852
        %v854 = vpop.f32.mrb[0].mxu0
        %855 = vdwg.mxu0
        %857 = vrot.lane.b32.xlu0 %v850, 120
        %v858 = vpop.permute.xlu0 %857
        %860 = vrot.lane.b32.xlu0 %v850, 112
        %v861 = vpop.permute.xlu0 %860
        %863 = vrot.lane.b32.xlu0 %v850, 104
        %v864 = vpop.permute.xlu0 %863
        %v866 = vcombine.low %v850, %v861
        %v867 = vcombine.high %v850, %v861
        %v869 = vunpack.c.l.s4 1983009808
        %v870 = vunpack.c.0.s8 %v869
        %v871 = vlaneseq
        %v872 = vshrl.u32 %v871, 7
        %v873 = vsub.s32 %v870, %v872
        %v874 = vrot.slane %v866, %v873
        %v876 = vunpack.c.l.s4 1983009808
        %v877 = vunpack.c.0.s8 %v876
        %v878 = vlaneseq
        %v879 = vshrl.u32 %v878, 7
        %v880 = vsub.s32 %v877, %v879
        %v881 = vrot.slane %v867, %v880
        %v882 = vcombine.low %v858, %v864
        %v883 = vcombine.high %v858, %v864
        %v885 = vunpack.c.l.s4 1983009808
        %v886 = vunpack.c.0.s8 %v885
        %v887 = vlaneseq
        %v888 = vshrl.u32 %v887, 7
        %v889 = vsub.s32 %v886, %v888
        %v890 = vrot.slane %v882, %v889
        %v892 = vunpack.c.l.s4 1983009808
        %v893 = vunpack.c.0.s8 %v892
        %v894 = vlaneseq
        %v895 = vshrl.u32 %v894, 7
        %v896 = vsub.s32 %v893, %v895
        %v897 = vrot.slane %v883, %v896
        %v898 = vcombine.low %v874, %v890
        %v899 = vcombine.high %v874, %v890
        %v901 = vunpack.c.l.s4 1934713408
        %v902 = vunpack.c.0.s8 %v901
        %v903 = vlaneseq
        %v904 = vshrl.u32 %v903, 7
        %v905 = vsub.s32 %v902, %v904
        %v906 = vrot.slane %v898, %v905
        %v908 = vunpack.c.l.s4 1934713408
        %v909 = vunpack.c.0.s8 %v908
        %v910 = vlaneseq
        %v911 = vshrl.u32 %v910, 7
        %v912 = vsub.s32 %v909, %v911
        %v913 = vrot.slane %v899, %v912
        %v914 = vcombine.low %v881, %v897
        %v915 = vcombine.high %v881, %v897
        %v917 = vunpack.c.l.s4 1934713408
        %v918 = vunpack.c.0.s8 %v917
        %v919 = vlaneseq
        %v920 = vshrl.u32 %v919, 7
        %v921 = vsub.s32 %v918, %v920
        %v922 = vrot.slane %v914, %v921
        %v924 = vunpack.c.l.s4 1934713408
        %v925 = vunpack.c.0.s8 %v924
        %v926 = vlaneseq
        %v927 = vshrl.u32 %v926, 7
        %v928 = vsub.s32 %v925, %v927
        %v929 = vrot.slane %v915, %v928
        %v930 = vcombine.high %v906, 0.0
        %v931 = vcombine.high %v913, 0.0
        %v932 = vcombine.high %v922, 0.0
        %v933 = vcombine.high %v929, 0.0
        %v934 = vcombine.low %v906, %v913
        %v936 = vunpack.c.l.s4 1983009808
        %v937 = vunpack.c.0.s8 %v936
        %v938 = vlaneseq
        %v939 = vshrl.u32 %v938, 7
        %v940 = vsub.s32 %v937, %v939
        %v941 = vrot.slane %v934, %v940
        %v942 = vcombine.low %v930, %v931
        %v944 = vunpack.c.l.s4 1983009808
        %v945 = vunpack.c.0.s8 %v944
        %v946 = vlaneseq
        %v947 = vshrl.u32 %v946, 7
        %v948 = vsub.s32 %v945, %v947
        %v949 = vrot.slane %v942, %v948
        %v950 = vcombine.low %v922, %v929
        %v952 = vunpack.c.l.s4 1983009808
        %v953 = vunpack.c.0.s8 %v952
        %v954 = vlaneseq
        %v955 = vshrl.u32 %v954, 7
        %v956 = vsub.s32 %v953, %v955
        %v957 = vrot.slane %v950, %v956
        %v958 = vcombine.low %v932, %v933
        %v960 = vunpack.c.l.s4 1983009808
        %v961 = vunpack.c.0.s8 %v960
        %v962 = vlaneseq
        %v963 = vshrl.u32 %v962, 7
        %v964 = vsub.s32 %v961, %v963
        %v965 = vrot.slane %v958, %v964
        %v966 = vcombine.low %v941, %v949
        %v967 = vcombine.high %v941, %v949
        %v969 = vunpack.c.l.s4 1934713408
        %v970 = vunpack.c.0.s8 %v969
        %v971 = vlaneseq
        %v972 = vshrl.u32 %v971, 7
        %v973 = vsub.s32 %v970, %v972
        %v974 = vrot.slane %v966, %v973
        %v976 = vunpack.c.l.s4 1934713408
        %v977 = vunpack.c.0.s8 %v976
        %v978 = vlaneseq
        %v979 = vshrl.u32 %v978, 7
        %v980 = vsub.s32 %v977, %v979
        %v981 = vrot.slane %v967, %v980
        %v982 = vcombine.low %v957, %v965
        %v983 = vcombine.high %v957, %v965
        %v985 = vunpack.c.l.s4 1934713408
        %v986 = vunpack.c.0.s8 %v985
        %v987 = vlaneseq
        %v988 = vshrl.u32 %v987, 7
        %v989 = vsub.s32 %v986, %v988
        %v990 = vrot.slane %v982, %v989
        %v992 = vunpack.c.l.s4 1934713408
        %v993 = vunpack.c.0.s8 %v992
        %v994 = vlaneseq
        %v995 = vshrl.u32 %v994, 7
        %v996 = vsub.s32 %v993, %v995
        %v997 = vrot.slane %v983, %v996
        %v998 = vcombine.low %v974, %v990
        %v999 = vcombine.high %v974, %v990
        %v1000 = vcombine.low %v981, %v997
        %v1001 = vcombine.high %v981, %v997
        %v1002 = vpack.c.bf16 %v998, %v998
        %v1003 = vpack.c.bf16 %v999, %v999
        %v1004 = vpack.c.bf16 %v1000, %v1000
        %v1005 = vpack.c.bf16 %v1001, %v1001
        %1006 = vrot.lane.b32.xlu0 %v850, 96
        %v1007 = vpop.permute.xlu0 %1006
        %1008 = vrot.lane.b32.xlu0 %v858, 96
        %v1009 = vpop.permute.xlu0 %1008
        %1010 = vrot.lane.b32.xlu0 %v861, 96
        %v1011 = vpop.permute.xlu0 %1010
        %1012 = vrot.lane.b32.xlu0 %v864, 96
        %v1013 = vpop.permute.xlu0 %1012
        %v1018 = vcombine.low %v1007, %v1011
        %v1019 = vcombine.high %v1007, %v1011
        %v1021 = vunpack.c.l.s4 1983009808
        %v1022 = vunpack.c.0.s8 %v1021
        %v1023 = vlaneseq
        %v1024 = vshrl.u32 %v1023, 7
        %v1025 = vsub.s32 %v1022, %v1024
        %v1026 = vrot.slane %v1018, %v1025
        %v1028 = vunpack.c.l.s4 1983009808
        %v1029 = vunpack.c.0.s8 %v1028
        %v1030 = vlaneseq
        %v1031 = vshrl.u32 %v1030, 7
        %v1032 = vsub.s32 %v1029, %v1031
        %v1033 = vrot.slane %v1019, %v1032
        %v1034 = vcombine.low %v1009, %v1013
        %v1035 = vcombine.high %v1009, %v1013
        %v1037 = vunpack.c.l.s4 1983009808
        %v1038 = vunpack.c.0.s8 %v1037
        %v1039 = vlaneseq
        %v1040 = vshrl.u32 %v1039, 7
        %v1041 = vsub.s32 %v1038, %v1040
        %v1042 = vrot.slane %v1034, %v1041
        %v1044 = vunpack.c.l.s4 1983009808
        %v1045 = vunpack.c.0.s8 %v1044
        %v1046 = vlaneseq
        %v1047 = vshrl.u32 %v1046, 7
        %v1048 = vsub.s32 %v1045, %v1047
        %v1049 = vrot.slane %v1035, %v1048
        %v1050 = vcombine.low %v1026, %v1042
        %v1051 = vcombine.high %v1026, %v1042
        %v1053 = vunpack.c.l.s4 1934713408
        %v1054 = vunpack.c.0.s8 %v1053
        %v1055 = vlaneseq
        %v1056 = vshrl.u32 %v1055, 7
        %v1057 = vsub.s32 %v1054, %v1056
        %v1058 = vrot.slane %v1050, %v1057
        %v1060 = vunpack.c.l.s4 1934713408
        %v1061 = vunpack.c.0.s8 %v1060
        %v1062 = vlaneseq
        %v1063 = vshrl.u32 %v1062, 7
        %v1064 = vsub.s32 %v1061, %v1063
        %v1065 = vrot.slane %v1051, %v1064
        %v1066 = vcombine.low %v1033, %v1049
        %v1067 = vcombine.high %v1033, %v1049
        %v1069 = vunpack.c.l.s4 1934713408
        %v1070 = vunpack.c.0.s8 %v1069
        %v1071 = vlaneseq
        %v1072 = vshrl.u32 %v1071, 7
        %v1073 = vsub.s32 %v1070, %v1072
        %v1074 = vrot.slane %v1066, %v1073
        %v1076 = vunpack.c.l.s4 1934713408
        %v1077 = vunpack.c.0.s8 %v1076
        %v1078 = vlaneseq
        %v1079 = vshrl.u32 %v1078, 7
        %v1080 = vsub.s32 %v1077, %v1079
        %v1081 = vrot.slane %v1067, %v1080
        %v1082 = vcombine.high %v1058, 0.0
        %v1083 = vcombine.high %v1065, 0.0
        %v1084 = vcombine.high %v1074, 0.0
        %v1085 = vcombine.high %v1081, 0.0
        %v1086 = vcombine.low %v1058, %v1065
        %v1088 = vunpack.c.l.s4 1983009808
        %v1089 = vunpack.c.0.s8 %v1088
        %v1090 = vlaneseq
        %v1091 = vshrl.u32 %v1090, 7
        %v1092 = vsub.s32 %v1089, %v1091
        %v1093 = vrot.slane %v1086, %v1092
        %v1094 = vcombine.low %v1082, %v1083
        %v1096 = vunpack.c.l.s4 1983009808
        %v1097 = vunpack.c.0.s8 %v1096
        %v1098 = vlaneseq
        %v1099 = vshrl.u32 %v1098, 7
        %v1100 = vsub.s32 %v1097, %v1099
        %v1101 = vrot.slane %v1094, %v1100
        %v1102 = vcombine.low %v1074, %v1081
        %v1104 = vunpack.c.l.s4 1983009808
        %v1105 = vunpack.c.0.s8 %v1104
        %v1106 = vlaneseq
        %v1107 = vshrl.u32 %v1106, 7
        %v1108 = vsub.s32 %v1105, %v1107
        %v1109 = vrot.slane %v1102, %v1108
        %v1110 = vcombine.low %v1084, %v1085
        %v1112 = vunpack.c.l.s4 1983009808
        %v1113 = vunpack.c.0.s8 %v1112
        %v1114 = vlaneseq
        %v1115 = vshrl.u32 %v1114, 7
        %v1116 = vsub.s32 %v1113, %v1115
        %v1117 = vrot.slane %v1110, %v1116
        %v1118 = vcombine.low %v1093, %v1101
        %v1119 = vcombine.high %v1093, %v1101
        %v1121 = vunpack.c.l.s4 1934713408
        %v1122 = vunpack.c.0.s8 %v1121
        %v1123 = vlaneseq
        %v1124 = vshrl.u32 %v1123, 7
        %v1125 = vsub.s32 %v1122, %v1124
        %v1126 = vrot.slane %v1118, %v1125
        %v1128 = vunpack.c.l.s4 1934713408
        %v1129 = vunpack.c.0.s8 %v1128
        %v1130 = vlaneseq
        %v1131 = vshrl.u32 %v1130, 7
        %v1132 = vsub.s32 %v1129, %v1131
        %v1133 = vrot.slane %v1119, %v1132
        %v1134 = vcombine.low %v1109, %v1117
        %v1135 = vcombine.high %v1109, %v1117
        %v1137 = vunpack.c.l.s4 1934713408
        %v1138 = vunpack.c.0.s8 %v1137
        %v1139 = vlaneseq
        %v1140 = vshrl.u32 %v1139, 7
        %v1141 = vsub.s32 %v1138, %v1140
        %v1142 = vrot.slane %v1134, %v1141
        %v1144 = vunpack.c.l.s4 1934713408
        %v1145 = vunpack.c.0.s8 %v1144
        %v1146 = vlaneseq
        %v1147 = vshrl.u32 %v1146, 7
        %v1148 = vsub.s32 %v1145, %v1147
        %v1149 = vrot.slane %v1135, %v1148
        %v1150 = vcombine.low %v1126, %v1142
        %v1151 = vcombine.high %v1126, %v1142
        %v1152 = vcombine.low %v1133, %v1149
        %v1153 = vcombine.high %v1133, %v1149
        %v1154 = vpack.c.bf16 %v1150, %v1150
        %v1155 = vpack.c.bf16 %v1151, %v1151
        %v1156 = vpack.c.bf16 %v1152, %v1152
        %v1157 = vpack.c.bf16 %v1153, %v1153
        %1158 = vrot.lane.b32.xlu0 %v850, 64
        %v1159 = vpop.permute.xlu0 %1158
        %1160 = vrot.lane.b32.xlu0 %v858, 64
        %v1161 = vpop.permute.xlu0 %1160
        %1162 = vrot.lane.b32.xlu0 %v861, 64
        %v1163 = vpop.permute.xlu0 %1162
        %1164 = vrot.lane.b32.xlu0 %v864, 64
        %v1165 = vpop.permute.xlu0 %1164
        %v1170 = vcombine.low %v1159, %v1163
        %v1171 = vcombine.high %v1159, %v1163
        %v1173 = vunpack.c.l.s4 1983009808
        %v1174 = vunpack.c.0.s8 %v1173
        %v1175 = vlaneseq
        %v1176 = vshrl.u32 %v1175, 7
        %v1177 = vsub.s32 %v1174, %v1176
        %v1178 = vrot.slane %v1170, %v1177
        %v1180 = vunpack.c.l.s4 1983009808
        %v1181 = vunpack.c.0.s8 %v1180
        %v1182 = vlaneseq
        %v1183 = vshrl.u32 %v1182, 7
        %v1184 = vsub.s32 %v1181, %v1183
        %v1185 = vrot.slane %v1171, %v1184
        %v1186 = vcombine.low %v1161, %v1165
        %v1187 = vcombine.high %v1161, %v1165
        %v1189 = vunpack.c.l.s4 1983009808
        %v1190 = vunpack.c.0.s8 %v1189
        %v1191 = vlaneseq
        %v1192 = vshrl.u32 %v1191, 7
        %v1193 = vsub.s32 %v1190, %v1192
        %v1194 = vrot.slane %v1186, %v1193
        %v1196 = vunpack.c.l.s4 1983009808
        %v1197 = vunpack.c.0.s8 %v1196
        %v1198 = vlaneseq
        %v1199 = vshrl.u32 %v1198, 7
        %v1200 = vsub.s32 %v1197, %v1199
        %v1201 = vrot.slane %v1187, %v1200
        %v1202 = vcombine.low %v1178, %v1194
        %v1203 = vcombine.high %v1178, %v1194
        %v1205 = vunpack.c.l.s4 1934713408
        %v1206 = vunpack.c.0.s8 %v1205
        %v1207 = vlaneseq
        %v1208 = vshrl.u32 %v1207, 7
        %v1209 = vsub.s32 %v1206, %v1208
        %v1210 = vrot.slane %v1202, %v1209
        %v1212 = vunpack.c.l.s4 1934713408
        %v1213 = vunpack.c.0.s8 %v1212
        %v1214 = vlaneseq
        %v1215 = vshrl.u32 %v1214, 7
        %v1216 = vsub.s32 %v1213, %v1215
        %v1217 = vrot.slane %v1203, %v1216
        %v1218 = vcombine.low %v1185, %v1201
        %v1219 = vcombine.high %v1185, %v1201
        %v1221 = vunpack.c.l.s4 1934713408
        %v1222 = vunpack.c.0.s8 %v1221
        %v1223 = vlaneseq
        %v1224 = vshrl.u32 %v1223, 7
        %v1225 = vsub.s32 %v1222, %v1224
        %v1226 = vrot.slane %v1218, %v1225
        %v1228 = vunpack.c.l.s4 1934713408
        %v1229 = vunpack.c.0.s8 %v1228
        %v1230 = vlaneseq
        %v1231 = vshrl.u32 %v1230, 7
        %v1232 = vsub.s32 %v1229, %v1231
        %v1233 = vrot.slane %v1219, %v1232
        %v1234 = vcombine.high %v1210, 0.0
        %v1235 = vcombine.high %v1217, 0.0
        %v1236 = vcombine.high %v1226, 0.0
        %v1237 = vcombine.high %v1233, 0.0
        %v1238 = vcombine.low %v1210, %v1217
        %v1240 = vunpack.c.l.s4 1983009808
        %v1241 = vunpack.c.0.s8 %v1240
        %v1242 = vlaneseq
        %v1243 = vshrl.u32 %v1242, 7
        %v1244 = vsub.s32 %v1241, %v1243
        %v1245 = vrot.slane %v1238, %v1244
        %v1246 = vcombine.low %v1234, %v1235
        %v1248 = vunpack.c.l.s4 1983009808
        %v1249 = vunpack.c.0.s8 %v1248
        %v1250 = vlaneseq
        %v1251 = vshrl.u32 %v1250, 7
        %v1252 = vsub.s32 %v1249, %v1251
        %v1253 = vrot.slane %v1246, %v1252
        %v1254 = vcombine.low %v1226, %v1233
        %v1256 = vunpack.c.l.s4 1983009808
        %v1257 = vunpack.c.0.s8 %v1256
        %v1258 = vlaneseq
        %v1259 = vshrl.u32 %v1258, 7
        %v1260 = vsub.s32 %v1257, %v1259
        %v1261 = vrot.slane %v1254, %v1260
        %v1262 = vcombine.low %v1236, %v1237
        %v1264 = vunpack.c.l.s4 1983009808
        %v1265 = vunpack.c.0.s8 %v1264
        %v1266 = vlaneseq
        %v1267 = vshrl.u32 %v1266, 7
        %v1268 = vsub.s32 %v1265, %v1267
        %v1269 = vrot.slane %v1262, %v1268
        %v1270 = vcombine.low %v1245, %v1253
        %v1271 = vcombine.high %v1245, %v1253
        %v1273 = vunpack.c.l.s4 1934713408
        %v1274 = vunpack.c.0.s8 %v1273
        %v1275 = vlaneseq
        %v1276 = vshrl.u32 %v1275, 7
        %v1277 = vsub.s32 %v1274, %v1276
        %v1278 = vrot.slane %v1270, %v1277
        %v1280 = vunpack.c.l.s4 1934713408
        %v1281 = vunpack.c.0.s8 %v1280
        %v1282 = vlaneseq
        %v1283 = vshrl.u32 %v1282, 7
        %v1284 = vsub.s32 %v1281, %v1283
        %v1285 = vrot.slane %v1271, %v1284
        %v1286 = vcombine.low %v1261, %v1269
        %v1287 = vcombine.high %v1261, %v1269
        %v1289 = vunpack.c.l.s4 1934713408
        %v1290 = vunpack.c.0.s8 %v1289
        %v1291 = vlaneseq
        %v1292 = vshrl.u32 %v1291, 7
        %v1293 = vsub.s32 %v1290, %v1292
        %v1294 = vrot.slane %v1286, %v1293
        %v1296 = vunpack.c.l.s4 1934713408
        %v1297 = vunpack.c.0.s8 %v1296
        %v1298 = vlaneseq
        %v1299 = vshrl.u32 %v1298, 7
        %v1300 = vsub.s32 %v1297, %v1299
        %v1301 = vrot.slane %v1287, %v1300
        %v1302 = vcombine.low %v1278, %v1294
        %v1303 = vcombine.high %v1278, %v1294
        %v1304 = vcombine.low %v1285, %v1301
        %v1305 = vcombine.high %v1285, %v1301
        %v1306 = vpack.c.bf16 %v1302, %v1302
        %v1307 = vpack.c.bf16 %v1303, %v1303
        %v1308 = vpack.c.bf16 %v1304, %v1304
        %v1309 = vpack.c.bf16 %v1305, %v1305
        %vm1310 = vcmask 64512
        %v1312 = vsel %vm1310, %v1002, 0
        %v1315 = vsel %vm1310, %v1154, 0
        %1317 = vmatprep.subr.bf16.mxu0 0
        %1318 = vmatpush1.bf16.xpose.msra.mxu0 %v1315
        %1319 = vmatprep.subr.bf16.mxu0 0
        %1320 = vmatpush1.bf16.xpose.msra.mxu0 0
        %1321 = vmatprep.subr.bf16.mxu0 0
        %1322 = vmatpush1.bf16.xpose.msra.mxu0 0
        %1323 = vmatprep.subr.bf16.mxu0 0
        %1324 = vmatpush1.bf16.xpose.msra.mxu0 0
        %1325 = vmatprep.subr.bf16.mxu0 0
        %1326 = vmatpush1.bf16.xpose.msra.mxu0 0
        %1327 = vmatprep.subr.bf16.mxu0 0
        %1328 = vmatpush1.bf16.xpose.msra.mxu0 0
        %1329 = vmatprep.subr.bf16.mxu0 0
        %1330 = vmatpush1.bf16.xpose.msra.mxu0 0
        %1331 = vmatprep.subr.bf16.mxu0 0
        %1332 = vmatpush1.bf16.xpose.msra.mxu0 0
        %1333 = vmatprep.subr.bf16.mxu0 0
        %1334 = vmatpush1.bf16.xpose.msra.mxu0 0
        %1335 = vmatprep.subr.bf16.mxu0 0
        %1336 = vmatpush1.bf16.xpose.msra.mxu0 0
        %1337 = vmatprep.subr.bf16.mxu0 0
        %1338 = vmatpush1.bf16.xpose.msra.mxu0 0
        %1339 = vmatprep.subr.bf16.mxu0 0
        %1340 = vmatpush1.bf16.xpose.msra.mxu0 0
        %1341 = vmatprep.subr.bf16.mxu0 0
        %1342 = vmatpush1.bf16.xpose.msra.mxu0 0
        %1343 = vmatprep.subr.bf16.mxu0 0
        %1344 = vmatpush1.bf16.xpose.msra.mxu0 0
        %1345 = vmatprep.subr.bf16.mxu0 0
        %1346 = vmatpush1.bf16.xpose.msra.mxu0 0
        %1347 = vmatprep.subr.bf16.mxu0 0
        %1348 = vmatpush1.bf16.xpose.msra.mxu0 0
        %1349 = vmatprep.mubr.bf16.mxu0 0
        %1350 = vmatmul.mubr.bf16.gmra.mrb[0].mxu0 %v1312
        %v1351 = vpop.f32.mrb[0].mxu0
        %v1352 = vadd.f32 0.0, %v1351
        %v1353 = vpop.f32.mrb[0].mxu0
        %v1354 = vpop.f32.mrb[0].mxu0
        %v1355 = vpop.f32.mrb[0].mxu0
        %1356 = vdwg.mxu0
        %v1358 = vsel %vm1310, %v1003, 0
        %v1361 = vsel %vm1310, %v1155, 0
        %1363 = vmatprep.subr.bf16.mxu0 0
        %1364 = vmatpush1.bf16.xpose.msra.mxu0 %v1361
        %1365 = vmatprep.subr.bf16.mxu0 0
        %1366 = vmatpush1.bf16.xpose.msra.mxu0 0
        %1367 = vmatprep.subr.bf16.mxu0 0
        %1368 = vmatpush1.bf16.xpose.msra.mxu0 0
        %1369 = vmatprep.subr.bf16.mxu0 0
        %1370 = vmatpush1.bf16.xpose.msra.mxu0 0
        %1371 = vmatprep.subr.bf16.mxu0 0
        %1372 = vmatpush1.bf16.xpose.msra.mxu0 0
        %1373 = vmatprep.subr.bf16.mxu0 0
        %1374 = vmatpush1.bf16.xpose.msra.mxu0 0
        %1375 = vmatprep.subr.bf16.mxu0 0
        %1376 = vmatpush1.bf16.xpose.msra.mxu0 0
        %1377 = vmatprep.subr.bf16.mxu0 0
        %1378 = vmatpush1.bf16.xpose.msra.mxu0 0
        %1379 = vmatprep.subr.bf16.mxu0 0
        %1380 = vmatpush1.bf16.xpose.msra.mxu0 0
        %1381 = vmatprep.subr.bf16.mxu0 0
        %1382 = vmatpush1.bf16.xpose.msra.mxu0 0
        %1383 = vmatprep.subr.bf16.mxu0 0
        %1384 = vmatpush1.bf16.xpose.msra.mxu0 0
        %1385 = vmatprep.subr.bf16.mxu0 0
        %1386 = vmatpush1.bf16.xpose.msra.mxu0 0
        %1387 = vmatprep.subr.bf16.mxu0 0
        %1388 = vmatpush1.bf16.xpose.msra.mxu0 0
        %1389 = vmatprep.subr.bf16.mxu0 0
        %1390 = vmatpush1.bf16.xpose.msra.mxu0 0
        %1391 = vmatprep.subr.bf16.mxu0 0
        %1392 = vmatpush1.bf16.xpose.msra.mxu0 0
        %1393 = vmatprep.subr.bf16.mxu0 0
        %1394 = vmatpush1.bf16.xpose.msra.mxu0 0
        %1395 = vmatprep.mubr.bf16.mxu0 0
        %1396 = vmatmul.mubr.bf16.gmra.mrb[0].mxu0 %v1358
        %v1397 = vpop.f32.mrb[0].mxu0
        %v1398 = vadd.f32 0.0, %v1397
        %v1399 = vpop.f32.mrb[0].mxu0
        %v1400 = vpop.f32.mrb[0].mxu0
        %v1401 = vpop.f32.mrb[0].mxu0
        %1402 = vdwg.mxu0
        %v1404 = vsel %vm1310, %v1004, 0
        %v1407 = vsel %vm1310, %v1156, 0
        %1409 = vmatprep.subr.bf16.mxu0 0
        %1410 = vmatpush1.bf16.xpose.msra.mxu0 %v1407
        %1411 = vmatprep.subr.bf16.mxu0 0
        %1412 = vmatpush1.bf16.xpose.msra.mxu0 0
        %1413 = vmatprep.subr.bf16.mxu0 0
        %1414 = vmatpush1.bf16.xpose.msra.mxu0 0
        %1415 = vmatprep.subr.bf16.mxu0 0
        %1416 = vmatpush1.bf16.xpose.msra.mxu0 0
        %1417 = vmatprep.subr.bf16.mxu0 0
        %1418 = vmatpush1.bf16.xpose.msra.mxu0 0
        %1419 = vmatprep.subr.bf16.mxu0 0
        %1420 = vmatpush1.bf16.xpose.msra.mxu0 0
        %1421 = vmatprep.subr.bf16.mxu0 0
        %1422 = vmatpush1.bf16.xpose.msra.mxu0 0
        %1423 = vmatprep.subr.bf16.mxu0 0
        %1424 = vmatpush1.bf16.xpose.msra.mxu0 0
        %1425 = vmatprep.subr.bf16.mxu0 0
        %1426 = vmatpush1.bf16.xpose.msra.mxu0 0
        %1427 = vmatprep.subr.bf16.mxu0 0
        %1428 = vmatpush1.bf16.xpose.msra.mxu0 0
        %1429 = vmatprep.subr.bf16.mxu0 0
        %1430 = vmatpush1.bf16.xpose.msra.mxu0 0
        %1431 = vmatprep.subr.bf16.mxu0 0
        %1432 = vmatpush1.bf16.xpose.msra.mxu0 0
        %1433 = vmatprep.subr.bf16.mxu0 0
        %1434 = vmatpush1.bf16.xpose.msra.mxu0 0
        %1435 = vmatprep.subr.bf16.mxu0 0
        %1436 = vmatpush1.bf16.xpose.msra.mxu0 0
        %1437 = vmatprep.subr.bf16.mxu0 0
        %1438 = vmatpush1.bf16.xpose.msra.mxu0 0
        %1439 = vmatprep.subr.bf16.mxu0 0
        %1440 = vmatpush1.bf16.xpose.msra.mxu0 0
        %1441 = vmatprep.mubr.bf16.mxu0 0
        %1442 = vmatmul.mubr.bf16.gmra.mrb[0].mxu0 %v1404
        %v1443 = vpop.f32.mrb[0].mxu0
        %v1444 = vadd.f32 0.0, %v1443
        %v1445 = vpop.f32.mrb[0].mxu0
        %v1446 = vpop.f32.mrb[0].mxu0
        %v1447 = vpop.f32.mrb[0].mxu0
        %1448 = vdwg.mxu0
        %v1450 = vsel %vm1310, %v1005, 0
        %v1453 = vsel %vm1310, %v1157, 0
        %1455 = vmatprep.subr.bf16.mxu0 0
        %1456 = vmatpush1.bf16.xpose.msra.mxu0 %v1453
        %1457 = vmatprep.subr.bf16.mxu0 0
        %1458 = vmatpush1.bf16.xpose.msra.mxu0 0
        %1459 = vmatprep.subr.bf16.mxu0 0
        %1460 = vmatpush1.bf16.xpose.msra.mxu0 0
        %1461 = vmatprep.subr.bf16.mxu0 0
        %1462 = vmatpush1.bf16.xpose.msra.mxu0 0
        %1463 = vmatprep.subr.bf16.mxu0 0
        %1464 = vmatpush1.bf16.xpose.msra.mxu0 0
        %1465 = vmatprep.subr.bf16.mxu0 0
        %1466 = vmatpush1.bf16.xpose.msra.mxu0 0
        %1467 = vmatprep.subr.bf16.mxu0 0
        %1468 = vmatpush1.bf16.xpose.msra.mxu0 0
        %1469 = vmatprep.subr.bf16.mxu0 0
        %1470 = vmatpush1.bf16.xpose.msra.mxu0 0
        %1471 = vmatprep.subr.bf16.mxu0 0
        %1472 = vmatpush1.bf16.xpose.msra.mxu0 0
        %1473 = vmatprep.subr.bf16.mxu0 0
        %1474 = vmatpush1.bf16.xpose.msra.mxu0 0
        %1475 = vmatprep.subr.bf16.mxu0 0
        %1476 = vmatpush1.bf16.xpose.msra.mxu0 0
        %1477 = vmatprep.subr.bf16.mxu0 0
        %1478 = vmatpush1.bf16.xpose.msra.mxu0 0
        %1479 = vmatprep.subr.bf16.mxu0 0
        %1480 = vmatpush1.bf16.xpose.msra.mxu0 0
        %1481 = vmatprep.subr.bf16.mxu0 0
        %1482 = vmatpush1.bf16.xpose.msra.mxu0 0
        %1483 = vmatprep.subr.bf16.mxu0 0
        %1484 = vmatpush1.bf16.xpose.msra.mxu0 0
        %1485 = vmatprep.subr.bf16.mxu0 0
        %1486 = vmatpush1.bf16.xpose.msra.mxu0 0
        %1487 = vmatprep.mubr.bf16.mxu0 0
        %1488 = vmatmul.mubr.bf16.gmra.mrb[0].mxu0 %v1450
        %v1489 = vpop.f32.mrb[0].mxu0
        %v1490 = vadd.f32 0.0, %v1489
        %v1491 = vpop.f32.mrb[0].mxu0
        %v1492 = vpop.f32.mrb[0].mxu0
        %v1493 = vpop.f32.mrb[0].mxu0
        %1494 = vdwg.mxu0
        %v1495 = vsel %vm1310, %v1352, -inf
        %1496 = vmax.xlane.f32.xlu0 %v1495
        %v1497 = vpop.xlane.xlu0 %1496
        %v1498 = vsel %vm1310, %v1398, -inf
        %1499 = vmax.xlane.f32.xlu0 %v1498
        %v1500 = vpop.xlane.xlu0 %1499
        %v1501 = vsel %vm1310, %v1444, -inf
        %1502 = vmax.xlane.f32.xlu0 %v1501
        %v1503 = vpop.xlane.xlu0 %1502
        %v1504 = vsel %vm1310, %v1490, -inf
        %1505 = vmax.xlane.f32.xlu0 %v1504
        %v1506 = vpop.xlane.xlu0 %1505
        %v1507 = vsub.f32 %v1352, %v1497
        %v1508 = vsub.f32 %v1398, %v1500
        %v1509 = vsub.f32 %v1444, %v1503
        %v1510 = vsub.f32 %v1490, %v1506
        %v1511 = vmul.f32 %v1507, 1.442695
        %v1512 = vpow.pop %v1511
        %v1513 = vmul.f32 %v1508, 1.442695
        %v1514 = vpow.pop %v1513
        %v1515 = vmul.f32 %v1509, 1.442695
        %v1516 = vpow.pop %v1515
        %v1517 = vmul.f32 %v1510, 1.442695
        %v1518 = vpow.pop %v1517
        %v1519 = vsel %vm1310, %v1512, 0.0
        %1520 = vadd.xlane.f32.xlu0 %v1519
        %v1521 = vpop.xlane.xlu0 %1520
        %v1522 = vsel %vm1310, %v1514, 0.0
        %1523 = vadd.xlane.f32.xlu0 %v1522
        %v1524 = vpop.xlane.xlu0 %1523
        %v1525 = vsel %vm1310, %v1516, 0.0
        %1526 = vadd.xlane.f32.xlu0 %v1525
        %v1527 = vpop.xlane.xlu0 %1526
        %v1528 = vsel %vm1310, %v1518, 0.0
        %1529 = vadd.xlane.f32.xlu0 %v1528
        %v1530 = vpop.xlane.xlu0 %1529
        %v1531 = vrcp.pop %v1521
        %v1532 = vrcp.pop %v1524
        %v1533 = vrcp.pop %v1527
        %v1534 = vrcp.pop %v1530
        %v1535 = vmul.f32 %v1512, %v1531
        %v1536 = vmul.f32 %v1514, %v1532
        %v1537 = vmul.f32 %v1516, %v1533
        %v1538 = vmul.f32 %v1518, %v1534
        %v1539 = vpack.c.bf16 %v1535, %v1535
        %v1540 = vpack.c.bf16 %v1536, %v1536
        %v1541 = vpack.c.bf16 %v1537, %v1537
        %v1542 = vpack.c.bf16 %v1538, %v1538
        %v1544 = vsel %vm1310, %v1539, 0
        %vm1546 = vcmask 1043456
        %v1548 = vsel %vm1546, %v1306, 0
        %1550 = vmatprep.subr.bf16.mxu0 0
        %1551 = vmatpush1.bf16.msra.mxu0 %v1548
        %1552 = vmatprep.subr.bf16.mxu0 0
        %1553 = vmatpush1.bf16.msra.mxu0 0
        %1554 = vmatprep.subr.bf16.mxu0 0
        %1555 = vmatpush1.bf16.msra.mxu0 0
        %1556 = vmatprep.subr.bf16.mxu0 0
        %1557 = vmatpush1.bf16.msra.mxu0 0
        %1558 = vmatprep.subr.bf16.mxu0 0
        %1559 = vmatpush1.bf16.msra.mxu0 0
        %1560 = vmatprep.subr.bf16.mxu0 0
        %1561 = vmatpush1.bf16.msra.mxu0 0
        %1562 = vmatprep.subr.bf16.mxu0 0
        %1563 = vmatpush1.bf16.msra.mxu0 0
        %1564 = vmatprep.subr.bf16.mxu0 0
        %1565 = vmatpush1.bf16.msra.mxu0 0
        %1566 = vmatprep.subr.bf16.mxu0 0
        %1567 = vmatpush1.bf16.msra.mxu0 0
        %1568 = vmatprep.subr.bf16.mxu0 0
        %1569 = vmatpush1.bf16.msra.mxu0 0
        %1570 = vmatprep.subr.bf16.mxu0 0
        %1571 = vmatpush1.bf16.msra.mxu0 0
        %1572 = vmatprep.subr.bf16.mxu0 0
        %1573 = vmatpush1.bf16.msra.mxu0 0
        %1574 = vmatprep.subr.bf16.mxu0 0
        %1575 = vmatpush1.bf16.msra.mxu0 0
        %1576 = vmatprep.subr.bf16.mxu0 0
        %1577 = vmatpush1.bf16.msra.mxu0 0
        %1578 = vmatprep.subr.bf16.mxu0 0
        %1579 = vmatpush1.bf16.msra.mxu0 0
        %1580 = vmatprep.subr.bf16.mxu0 0
        %1581 = vmatpush1.bf16.msra.mxu0 0
        %1582 = vmatprep.mubr.bf16.mxu0 0
        %1583 = vmatmul.mubr.bf16.gmra.mrb[0].mxu0 %v1544
        %v1584 = vpop.f32.mrb[0].mxu0
        %v1585 = vadd.f32 0.0, %v1584
        %v1586 = vpop.f32.mrb[0].mxu0
        %v1587 = vpop.f32.mrb[0].mxu0
        %v1588 = vpop.f32.mrb[0].mxu0
        %1589 = vdwg.mxu0
        %v1591 = vsel %vm1310, %v1540, 0
        %v1594 = vsel %vm1546, %v1307, 0
        %1596 = vmatprep.subr.bf16.mxu0 0
        %1597 = vmatpush1.bf16.msra.mxu0 %v1594
        %1598 = vmatprep.subr.bf16.mxu0 0
        %1599 = vmatpush1.bf16.msra.mxu0 0
        %1600 = vmatprep.subr.bf16.mxu0 0
        %1601 = vmatpush1.bf16.msra.mxu0 0
        %1602 = vmatprep.subr.bf16.mxu0 0
        %1603 = vmatpush1.bf16.msra.mxu0 0
        %1604 = vmatprep.subr.bf16.mxu0 0
        %1605 = vmatpush1.bf16.msra.mxu0 0
        %1606 = vmatprep.subr.bf16.mxu0 0
        %1607 = vmatpush1.bf16.msra.mxu0 0
        %1608 = vmatprep.subr.bf16.mxu0 0
        %1609 = vmatpush1.bf16.msra.mxu0 0
        %1610 = vmatprep.subr.bf16.mxu0 0
        %1611 = vmatpush1.bf16.msra.mxu0 0
        %1612 = vmatprep.subr.bf16.mxu0 0
        %1613 = vmatpush1.bf16.msra.mxu0 0
        %1614 = vmatprep.subr.bf16.mxu0 0
        %1615 = vmatpush1.bf16.msra.mxu0 0
        %1616 = vmatprep.subr.bf16.mxu0 0
        %1617 = vmatpush1.bf16.msra.mxu0 0
        %1618 = vmatprep.subr.bf16.mxu0 0
        %1619 = vmatpush1.bf16.msra.mxu0 0
        %1620 = vmatprep.subr.bf16.mxu0 0
        %1621 = vmatpush1.bf16.msra.mxu0 0
        %1622 = vmatprep.subr.bf16.mxu0 0
        %1623 = vmatpush1.bf16.msra.mxu0 0
        %1624 = vmatprep.subr.bf16.mxu0 0
        %1625 = vmatpush1.bf16.msra.mxu0 0
        %1626 = vmatprep.subr.bf16.mxu0 0
        %1627 = vmatpush1.bf16.msra.mxu0 0
        %1628 = vmatprep.mubr.bf16.mxu0 0
        %1629 = vmatmul.mubr.bf16.gmra.mrb[0].mxu0 %v1591
        %v1630 = vpop.f32.mrb[0].mxu0
        %v1631 = vadd.f32 0.0, %v1630
        %v1632 = vpop.f32.mrb[0].mxu0
        %v1633 = vpop.f32.mrb[0].mxu0
        %v1634 = vpop.f32.mrb[0].mxu0
        %1635 = vdwg.mxu0
        %v1637 = vsel %vm1310, %v1541, 0
        %v1640 = vsel %vm1546, %v1308, 0
        %1642 = vmatprep.subr.bf16.mxu0 0
        %1643 = vmatpush1.bf16.msra.mxu0 %v1640
        %1644 = vmatprep.subr.bf16.mxu0 0
        %1645 = vmatpush1.bf16.msra.mxu0 0
        %1646 = vmatprep.subr.bf16.mxu0 0
        %1647 = vmatpush1.bf16.msra.mxu0 0
        %1648 = vmatprep.subr.bf16.mxu0 0
        %1649 = vmatpush1.bf16.msra.mxu0 0
        %1650 = vmatprep.subr.bf16.mxu0 0
        %1651 = vmatpush1.bf16.msra.mxu0 0
        %1652 = vmatprep.subr.bf16.mxu0 0
        %1653 = vmatpush1.bf16.msra.mxu0 0
        %1654 = vmatprep.subr.bf16.mxu0 0
        %1655 = vmatpush1.bf16.msra.mxu0 0
        %1656 = vmatprep.subr.bf16.mxu0 0
        %1657 = vmatpush1.bf16.msra.mxu0 0
        %1658 = vmatprep.subr.bf16.mxu0 0
        %1659 = vmatpush1.bf16.msra.mxu0 0
        %1660 = vmatprep.subr.bf16.mxu0 0
        %1661 = vmatpush1.bf16.msra.mxu0 0
        %1662 = vmatprep.subr.bf16.mxu0 0
        %1663 = vmatpush1.bf16.msra.mxu0 0
        %1664 = vmatprep.subr.bf16.mxu0 0
        %1665 = vmatpush1.bf16.msra.mxu0 0
        %1666 = vmatprep.subr.bf16.mxu0 0
        %1667 = vmatpush1.bf16.msra.mxu0 0
        %1668 = vmatprep.subr.bf16.mxu0 0
        %1669 = vmatpush1.bf16.msra.mxu0 0
        %1670 = vmatprep.subr.bf16.mxu0 0
        %1671 = vmatpush1.bf16.msra.mxu0 0
        %1672 = vmatprep.subr.bf16.mxu0 0
        %1673 = vmatpush1.bf16.msra.mxu0 0
        %1674 = vmatprep.mubr.bf16.mxu0 0
        %1675 = vmatmul.mubr.bf16.gmra.mrb[0].mxu0 %v1637
        %v1676 = vpop.f32.mrb[0].mxu0
        %v1677 = vadd.f32 0.0, %v1676
        %v1678 = vpop.f32.mrb[0].mxu0
        %v1679 = vpop.f32.mrb[0].mxu0
        %v1680 = vpop.f32.mrb[0].mxu0
        %1681 = vdwg.mxu0
        %v1683 = vsel %vm1310, %v1542, 0
        %v1686 = vsel %vm1546, %v1309, 0
        %1688 = vmatprep.subr.bf16.mxu0 0
        %1689 = vmatpush1.bf16.msra.mxu0 %v1686
        %1690 = vmatprep.subr.bf16.mxu0 0
        %1691 = vmatpush1.bf16.msra.mxu0 0
        %1692 = vmatprep.subr.bf16.mxu0 0
        %1693 = vmatpush1.bf16.msra.mxu0 0
        %1694 = vmatprep.subr.bf16.mxu0 0
        %1695 = vmatpush1.bf16.msra.mxu0 0
        %1696 = vmatprep.subr.bf16.mxu0 0
        %1697 = vmatpush1.bf16.msra.mxu0 0
        %1698 = vmatprep.subr.bf16.mxu0 0
        %1699 = vmatpush1.bf16.msra.mxu0 0
        %1700 = vmatprep.subr.bf16.mxu0 0
        %1701 = vmatpush1.bf16.msra.mxu0 0
        %1702 = vmatprep.subr.bf16.mxu0 0
        %1703 = vmatpush1.bf16.msra.mxu0 0
        %1704 = vmatprep.subr.bf16.mxu0 0
        %1705 = vmatpush1.bf16.msra.mxu0 0
        %1706 = vmatprep.subr.bf16.mxu0 0
        %1707 = vmatpush1.bf16.msra.mxu0 0
        %1708 = vmatprep.subr.bf16.mxu0 0
        %1709 = vmatpush1.bf16.msra.mxu0 0
        %1710 = vmatprep.subr.bf16.mxu0 0
        %1711 = vmatpush1.bf16.msra.mxu0 0
        %1712 = vmatprep.subr.bf16.mxu0 0
        %1713 = vmatpush1.bf16.msra.mxu0 0
        %1714 = vmatprep.subr.bf16.mxu0 0
        %1715 = vmatpush1.bf16.msra.mxu0 0
        %1716 = vmatprep.subr.bf16.mxu0 0
        %1717 = vmatpush1.bf16.msra.mxu0 0
        %1718 = vmatprep.subr.bf16.mxu0 0
        %1719 = vmatpush1.bf16.msra.mxu0 0
        %1720 = vmatprep.mubr.bf16.mxu0 0
        %1721 = vmatmul.mubr.bf16.gmra.mrb[0].mxu0 %v1683
        %v1722 = vpop.f32.mrb[0].mxu0
        %v1723 = vadd.f32 0.0, %v1722
        %v1724 = vpop.f32.mrb[0].mxu0
        %v1725 = vpop.f32.mrb[0].mxu0
        %v1726 = vpop.f32.mrb[0].mxu0
        %1727 = vdwg.mxu0
        %v1728 = vcombine.low %v1585, %v1677
        %v1729 = vcombine.high %v1585, %v1677
        %v1731 = vunpack.c.l.s4 1983009808
        %v1732 = vunpack.c.0.s8 %v1731
        %v1733 = vlaneseq
        %v1734 = vshrl.u32 %v1733, 7
        %v1735 = vsub.s32 %v1732, %v1734
        %v1736 = vrot.slane %v1728, %v1735
        %v1738 = vunpack.c.l.s4 1983009808
        %v1739 = vunpack.c.0.s8 %v1738
        %v1740 = vlaneseq
        %v1741 = vshrl.u32 %v1740, 7
        %v1742 = vsub.s32 %v1739, %v1741
        %v1743 = vrot.slane %v1729, %v1742
        %v1744 = vcombine.low %v1631, %v1723
        %v1745 = vcombine.high %v1631, %v1723
        %v1747 = vunpack.c.l.s4 1983009808
        %v1748 = vunpack.c.0.s8 %v1747
        %v1749 = vlaneseq
        %v1750 = vshrl.u32 %v1749, 7
        %v1751 = vsub.s32 %v1748, %v1750
        %v1752 = vrot.slane %v1744, %v1751
        %v1754 = vunpack.c.l.s4 1983009808
        %v1755 = vunpack.c.0.s8 %v1754
        %v1756 = vlaneseq
        %v1757 = vshrl.u32 %v1756, 7
        %v1758 = vsub.s32 %v1755, %v1757
        %v1759 = vrot.slane %v1745, %v1758
        %v1760 = vcombine.low %v1736, %v1752
        %v1761 = vcombine.high %v1736, %v1752
        %v1763 = vunpack.c.l.s4 1934713408
        %v1764 = vunpack.c.0.s8 %v1763
        %v1765 = vlaneseq
        %v1766 = vshrl.u32 %v1765, 7
        %v1767 = vsub.s32 %v1764, %v1766
        %v1768 = vrot.slane %v1760, %v1767
        %v1770 = vunpack.c.l.s4 1934713408
        %v1771 = vunpack.c.0.s8 %v1770
        %v1772 = vlaneseq
        %v1773 = vshrl.u32 %v1772, 7
        %v1774 = vsub.s32 %v1771, %v1773
        %v1775 = vrot.slane %v1761, %v1774
        %v1776 = vcombine.low %v1743, %v1759
        %v1777 = vcombine.high %v1743, %v1759
        %v1779 = vunpack.c.l.s4 1934713408
        %v1780 = vunpack.c.0.s8 %v1779
        %v1781 = vlaneseq
        %v1782 = vshrl.u32 %v1781, 7
        %v1783 = vsub.s32 %v1780, %v1782
        %v1784 = vrot.slane %v1776, %v1783
        %v1786 = vunpack.c.l.s4 1934713408
        %v1787 = vunpack.c.0.s8 %v1786
        %v1788 = vlaneseq
        %v1789 = vshrl.u32 %v1788, 7
        %v1790 = vsub.s32 %v1787, %v1789
        %v1791 = vrot.slane %v1777, %v1790
        %v1792 = vcombine.high %v1768, 0.0
        %v1793 = vcombine.high %v1775, 0.0
        %v1794 = vcombine.high %v1784, 0.0
        %v1795 = vcombine.high %v1791, 0.0
        %v1796 = vcombine.low %v1768, %v1775
        %v1798 = vunpack.c.l.s4 1983009808
        %v1799 = vunpack.c.0.s8 %v1798
        %v1800 = vlaneseq
        %v1801 = vshrl.u32 %v1800, 7
        %v1802 = vsub.s32 %v1799, %v1801
        %v1803 = vrot.slane %v1796, %v1802
        %v1804 = vcombine.low %v1792, %v1793
        %v1806 = vunpack.c.l.s4 1983009808
        %v1807 = vunpack.c.0.s8 %v1806
        %v1808 = vlaneseq
        %v1809 = vshrl.u32 %v1808, 7
        %v1810 = vsub.s32 %v1807, %v1809
        %v1811 = vrot.slane %v1804, %v1810
        %v1812 = vcombine.low %v1784, %v1791
        %v1814 = vunpack.c.l.s4 1983009808
        %v1815 = vunpack.c.0.s8 %v1814
        %v1816 = vlaneseq
        %v1817 = vshrl.u32 %v1816, 7
        %v1818 = vsub.s32 %v1815, %v1817
        %v1819 = vrot.slane %v1812, %v1818
        %v1820 = vcombine.low %v1794, %v1795
        %v1822 = vunpack.c.l.s4 1983009808
        %v1823 = vunpack.c.0.s8 %v1822
        %v1824 = vlaneseq
        %v1825 = vshrl.u32 %v1824, 7
        %v1826 = vsub.s32 %v1823, %v1825
        %v1827 = vrot.slane %v1820, %v1826
        %v1828 = vcombine.low %v1803, %v1811
        %v1829 = vcombine.high %v1803, %v1811
        %v1831 = vunpack.c.l.s4 1934713408
        %v1832 = vunpack.c.0.s8 %v1831
        %v1833 = vlaneseq
        %v1834 = vshrl.u32 %v1833, 7
        %v1835 = vsub.s32 %v1832, %v1834
        %v1836 = vrot.slane %v1828, %v1835
        %v1838 = vunpack.c.l.s4 1934713408
        %v1839 = vunpack.c.0.s8 %v1838
        %v1840 = vlaneseq
        %v1841 = vshrl.u32 %v1840, 7
        %v1842 = vsub.s32 %v1839, %v1841
        %v1843 = vrot.slane %v1829, %v1842
        %v1844 = vcombine.low %v1819, %v1827
        %v1845 = vcombine.high %v1819, %v1827
        %v1847 = vunpack.c.l.s4 1934713408
        %v1848 = vunpack.c.0.s8 %v1847
        %v1849 = vlaneseq
        %v1850 = vshrl.u32 %v1849, 7
        %v1851 = vsub.s32 %v1848, %v1850
        %v1852 = vrot.slane %v1844, %v1851
        %v1854 = vunpack.c.l.s4 1934713408
        %v1855 = vunpack.c.0.s8 %v1854
        %v1856 = vlaneseq
        %v1857 = vshrl.u32 %v1856, 7
        %v1858 = vsub.s32 %v1855, %v1857
        %v1859 = vrot.slane %v1845, %v1858
        %v1860 = vcombine.low %v1836, %v1852
        %v1861 = vcombine.high %v1836, %v1852
        %v1862 = vcombine.low %v1843, %v1859
        %v1863 = vcombine.high %v1843, %v1859
        %1865 = vrot.lane.b32.xlu0 %v1861, 8
        %v1866 = vpop.permute.xlu0 %1865
        %1869 = vrot.lane.b32.xlu0 %v1862, 16
        %v1870 = vpop.permute.xlu0 %1869
        %1873 = vrot.lane.b32.xlu0 %v1863, 24
        %v1874 = vpop.permute.xlu0 %1873
        %v1876 = vsel %vm1310, %v1860, %v1866
        %vm1877 = vcmask 130048
        %v1878 = vsel %vm1877, %v1876, %v1870
        %vm1879 = vcmask 195584
        %v1880 = vsel %vm1879, %v1878, %v1874
        %1882 = vrot.lane.b32.xlu0 %v853, 120
        %v1883 = vpop.permute.xlu0 %1882
        %1885 = vrot.lane.b32.xlu0 %v853, 112
        %v1886 = vpop.permute.xlu0 %1885
        %1888 = vrot.lane.b32.xlu0 %v853, 104
        %v1889 = vpop.permute.xlu0 %1888
        %v1891 = vcombine.low %v853, %v1886
        %v1892 = vcombine.high %v853, %v1886
        %v1894 = vunpack.c.l.s4 1983009808
        %v1895 = vunpack.c.0.s8 %v1894
        %v1896 = vlaneseq
        %v1897 = vshrl.u32 %v1896, 7
        %v1898 = vsub.s32 %v1895, %v1897
        %v1899 = vrot.slane %v1891, %v1898
        %v1901 = vunpack.c.l.s4 1983009808
        %v1902 = vunpack.c.0.s8 %v1901
        %v1903 = vlaneseq
        %v1904 = vshrl.u32 %v1903, 7
        %v1905 = vsub.s32 %v1902, %v1904
        %v1906 = vrot.slane %v1892, %v1905
        %v1907 = vcombine.low %v1883, %v1889
        %v1908 = vcombine.high %v1883, %v1889
        %v1910 = vunpack.c.l.s4 1983009808
        %v1911 = vunpack.c.0.s8 %v1910
        %v1912 = vlaneseq
        %v1913 = vshrl.u32 %v1912, 7
        %v1914 = vsub.s32 %v1911, %v1913
        %v1915 = vrot.slane %v1907, %v1914
        %v1917 = vunpack.c.l.s4 1983009808
        %v1918 = vunpack.c.0.s8 %v1917
        %v1919 = vlaneseq
        %v1920 = vshrl.u32 %v1919, 7
        %v1921 = vsub.s32 %v1918, %v1920
        %v1922 = vrot.slane %v1908, %v1921
        %v1923 = vcombine.low %v1899, %v1915
        %v1924 = vcombine.high %v1899, %v1915
        %v1926 = vunpack.c.l.s4 1934713408
        %v1927 = vunpack.c.0.s8 %v1926
        %v1928 = vlaneseq
        %v1929 = vshrl.u32 %v1928, 7
        %v1930 = vsub.s32 %v1927, %v1929
        %v1931 = vrot.slane %v1923, %v1930
        %v1933 = vunpack.c.l.s4 1934713408
        %v1934 = vunpack.c.0.s8 %v1933
        %v1935 = vlaneseq
        %v1936 = vshrl.u32 %v1935, 7
        %v1937 = vsub.s32 %v1934, %v1936
        %v1938 = vrot.slane %v1924, %v1937
        %v1939 = vcombine.low %v1906, %v1922
        %v1940 = vcombine.high %v1906, %v1922
        %v1942 = vunpack.c.l.s4 1934713408
        %v1943 = vunpack.c.0.s8 %v1942
        %v1944 = vlaneseq
        %v1945 = vshrl.u32 %v1944, 7
        %v1946 = vsub.s32 %v1943, %v1945
        %v1947 = vrot.slane %v1939, %v1946
        %v1949 = vunpack.c.l.s4 1934713408
        %v1950 = vunpack.c.0.s8 %v1949
        %v1951 = vlaneseq
        %v1952 = vshrl.u32 %v1951, 7
        %v1953 = vsub.s32 %v1950, %v1952
        %v1954 = vrot.slane %v1940, %v1953
        %v1955 = vcombine.high %v1931, 0.0
        %v1956 = vcombine.high %v1938, 0.0
        %v1957 = vcombine.high %v1947, 0.0
        %v1958 = vcombine.high %v1954, 0.0
        %v1959 = vcombine.low %v1931, %v1938
        %v1961 = vunpack.c.l.s4 1983009808
        %v1962 = vunpack.c.0.s8 %v1961
        %v1963 = vlaneseq
        %v1964 = vshrl.u32 %v1963, 7
        %v1965 = vsub.s32 %v1962, %v1964
        %v1966 = vrot.slane %v1959, %v1965
        %v1967 = vcombine.low %v1955, %v1956
        %v1969 = vunpack.c.l.s4 1983009808
        %v1970 = vunpack.c.0.s8 %v1969
        %v1971 = vlaneseq
        %v1972 = vshrl.u32 %v1971, 7
        %v1973 = vsub.s32 %v1970, %v1972
        %v1974 = vrot.slane %v1967, %v1973
        %v1975 = vcombine.low %v1947, %v1954
        %v1977 = vunpack.c.l.s4 1983009808
        %v1978 = vunpack.c.0.s8 %v1977
        %v1979 = vlaneseq
        %v1980 = vshrl.u32 %v1979, 7
        %v1981 = vsub.s32 %v1978, %v1980
        %v1982 = vrot.slane %v1975, %v1981
        %v1983 = vcombine.low %v1957, %v1958
        %v1985 = vunpack.c.l.s4 1983009808
        %v1986 = vunpack.c.0.s8 %v1985
        %v1987 = vlaneseq
        %v1988 = vshrl.u32 %v1987, 7
        %v1989 = vsub.s32 %v1986, %v1988
        %v1990 = vrot.slane %v1983, %v1989
        %v1991 = vcombine.low %v1966, %v1974
        %v1992 = vcombine.high %v1966, %v1974
        %v1994 = vunpack.c.l.s4 1934713408
        %v1995 = vunpack.c.0.s8 %v1994
        %v1996 = vlaneseq
        %v1997 = vshrl.u32 %v1996, 7
        %v1998 = vsub.s32 %v1995, %v1997
        %v1999 = vrot.slane %v1991, %v1998
        %v2001 = vunpack.c.l.s4 1934713408
        %v2002 = vunpack.c.0.s8 %v2001
        %v2003 = vlaneseq
        %v2004 = vshrl.u32 %v2003, 7
        %v2005 = vsub.s32 %v2002, %v2004
        %v2006 = vrot.slane %v1992, %v2005
        %v2007 = vcombine.low %v1982, %v1990
        %v2008 = vcombine.high %v1982, %v1990
        %v2010 = vunpack.c.l.s4 1934713408
        %v2011 = vunpack.c.0.s8 %v2010
        %v2012 = vlaneseq
        %v2013 = vshrl.u32 %v2012, 7
        %v2014 = vsub.s32 %v2011, %v2013
        %v2015 = vrot.slane %v2007, %v2014
        %v2017 = vunpack.c.l.s4 1934713408
        %v2018 = vunpack.c.0.s8 %v2017
        %v2019 = vlaneseq
        %v2020 = vshrl.u32 %v2019, 7
        %v2021 = vsub.s32 %v2018, %v2020
        %v2022 = vrot.slane %v2008, %v2021
        %v2023 = vcombine.low %v1999, %v2015
        %v2024 = vcombine.high %v1999, %v2015
        %v2025 = vcombine.low %v2006, %v2022
        %v2026 = vcombine.high %v2006, %v2022
        %v2027 = vpack.c.bf16 %v2023, %v2023
        %v2028 = vpack.c.bf16 %v2024, %v2024
        %v2029 = vpack.c.bf16 %v2025, %v2025
        %v2030 = vpack.c.bf16 %v2026, %v2026
        %2031 = vrot.lane.b32.xlu0 %v853, 96
        %v2032 = vpop.permute.xlu0 %2031
        %2033 = vrot.lane.b32.xlu0 %v1883, 96
        %v2034 = vpop.permute.xlu0 %2033
        %2035 = vrot.lane.b32.xlu0 %v1886, 96
        %v2036 = vpop.permute.xlu0 %2035
        %2037 = vrot.lane.b32.xlu0 %v1889, 96
        %v2038 = vpop.permute.xlu0 %2037
        %v2043 = vcombine.low %v2032, %v2036
        %v2044 = vcombine.high %v2032, %v2036
        %v2046 = vunpack.c.l.s4 1983009808
        %v2047 = vunpack.c.0.s8 %v2046
        %v2048 = vlaneseq
        %v2049 = vshrl.u32 %v2048, 7
        %v2050 = vsub.s32 %v2047, %v2049
        %v2051 = vrot.slane %v2043, %v2050
        %v2053 = vunpack.c.l.s4 1983009808
        %v2054 = vunpack.c.0.s8 %v2053
        %v2055 = vlaneseq
        %v2056 = vshrl.u32 %v2055, 7
        %v2057 = vsub.s32 %v2054, %v2056
        %v2058 = vrot.slane %v2044, %v2057
        %v2059 = vcombine.low %v2034, %v2038
        %v2060 = vcombine.high %v2034, %v2038
        %v2062 = vunpack.c.l.s4 1983009808
        %v2063 = vunpack.c.0.s8 %v2062
        %v2064 = vlaneseq
        %v2065 = vshrl.u32 %v2064, 7
        %v2066 = vsub.s32 %v2063, %v2065
        %v2067 = vrot.slane %v2059, %v2066
        %v2069 = vunpack.c.l.s4 1983009808
        %v2070 = vunpack.c.0.s8 %v2069
        %v2071 = vlaneseq
        %v2072 = vshrl.u32 %v2071, 7
        %v2073 = vsub.s32 %v2070, %v2072
        %v2074 = vrot.slane %v2060, %v2073
        %v2075 = vcombine.low %v2051, %v2067
        %v2076 = vcombine.high %v2051, %v2067
        %v2078 = vunpack.c.l.s4 1934713408
        %v2079 = vunpack.c.0.s8 %v2078
        %v2080 = vlaneseq
        %v2081 = vshrl.u32 %v2080, 7
        %v2082 = vsub.s32 %v2079, %v2081
        %v2083 = vrot.slane %v2075, %v2082
        %v2085 = vunpack.c.l.s4 1934713408
        %v2086 = vunpack.c.0.s8 %v2085
        %v2087 = vlaneseq
        %v2088 = vshrl.u32 %v2087, 7
        %v2089 = vsub.s32 %v2086, %v2088
        %v2090 = vrot.slane %v2076, %v2089
        %v2091 = vcombine.low %v2058, %v2074
        %v2092 = vcombine.high %v2058, %v2074
        %v2094 = vunpack.c.l.s4 1934713408
        %v2095 = vunpack.c.0.s8 %v2094
        %v2096 = vlaneseq
        %v2097 = vshrl.u32 %v2096, 7
        %v2098 = vsub.s32 %v2095, %v2097
        %v2099 = vrot.slane %v2091, %v2098
        %v2101 = vunpack.c.l.s4 1934713408
        %v2102 = vunpack.c.0.s8 %v2101
        %v2103 = vlaneseq
        %v2104 = vshrl.u32 %v2103, 7
        %v2105 = vsub.s32 %v2102, %v2104
        %v2106 = vrot.slane %v2092, %v2105
        %v2107 = vcombine.high %v2083, 0.0
        %v2108 = vcombine.high %v2090, 0.0
        %v2109 = vcombine.high %v2099, 0.0
        %v2110 = vcombine.high %v2106, 0.0
        %v2111 = vcombine.low %v2083, %v2090
        %v2113 = vunpack.c.l.s4 1983009808
        %v2114 = vunpack.c.0.s8 %v2113
        %v2115 = vlaneseq
        %v2116 = vshrl.u32 %v2115, 7
        %v2117 = vsub.s32 %v2114, %v2116
        %v2118 = vrot.slane %v2111, %v2117
        %v2119 = vcombine.low %v2107, %v2108
        %v2121 = vunpack.c.l.s4 1983009808
        %v2122 = vunpack.c.0.s8 %v2121
        %v2123 = vlaneseq
        %v2124 = vshrl.u32 %v2123, 7
        %v2125 = vsub.s32 %v2122, %v2124
        %v2126 = vrot.slane %v2119, %v2125
        %v2127 = vcombine.low %v2099, %v2106
        %v2129 = vunpack.c.l.s4 1983009808
        %v2130 = vunpack.c.0.s8 %v2129
        %v2131 = vlaneseq
        %v2132 = vshrl.u32 %v2131, 7
        %v2133 = vsub.s32 %v2130, %v2132
        %v2134 = vrot.slane %v2127, %v2133
        %v2135 = vcombine.low %v2109, %v2110
        %v2137 = vunpack.c.l.s4 1983009808
        %v2138 = vunpack.c.0.s8 %v2137
        %v2139 = vlaneseq
        %v2140 = vshrl.u32 %v2139, 7
        %v2141 = vsub.s32 %v2138, %v2140
        %v2142 = vrot.slane %v2135, %v2141
        %v2143 = vcombine.low %v2118, %v2126
        %v2144 = vcombine.high %v2118, %v2126
        %v2146 = vunpack.c.l.s4 1934713408
        %v2147 = vunpack.c.0.s8 %v2146
        %v2148 = vlaneseq
        %v2149 = vshrl.u32 %v2148, 7
        %v2150 = vsub.s32 %v2147, %v2149
        %v2151 = vrot.slane %v2143, %v2150
        %v2153 = vunpack.c.l.s4 1934713408
        %v2154 = vunpack.c.0.s8 %v2153
        %v2155 = vlaneseq
        %v2156 = vshrl.u32 %v2155, 7
        %v2157 = vsub.s32 %v2154, %v2156
        %v2158 = vrot.slane %v2144, %v2157
        %v2159 = vcombine.low %v2134, %v2142
        %v2160 = vcombine.high %v2134, %v2142
        %v2162 = vunpack.c.l.s4 1934713408
        %v2163 = vunpack.c.0.s8 %v2162
        %v2164 = vlaneseq
        %v2165 = vshrl.u32 %v2164, 7
        %v2166 = vsub.s32 %v2163, %v2165
        %v2167 = vrot.slane %v2159, %v2166
        %v2169 = vunpack.c.l.s4 1934713408
        %v2170 = vunpack.c.0.s8 %v2169
        %v2171 = vlaneseq
        %v2172 = vshrl.u32 %v2171, 7
        %v2173 = vsub.s32 %v2170, %v2172
        %v2174 = vrot.slane %v2160, %v2173
        %v2175 = vcombine.low %v2151, %v2167
        %v2176 = vcombine.high %v2151, %v2167
        %v2177 = vcombine.low %v2158, %v2174
        %v2178 = vcombine.high %v2158, %v2174
        %v2179 = vpack.c.bf16 %v2175, %v2175
        %v2180 = vpack.c.bf16 %v2176, %v2176
        %v2181 = vpack.c.bf16 %v2177, %v2177
        %v2182 = vpack.c.bf16 %v2178, %v2178
        %2183 = vrot.lane.b32.xlu0 %v853, 64
        %v2184 = vpop.permute.xlu0 %2183
        %2185 = vrot.lane.b32.xlu0 %v1883, 64
        %v2186 = vpop.permute.xlu0 %2185
        %2187 = vrot.lane.b32.xlu0 %v1886, 64
        %v2188 = vpop.permute.xlu0 %2187
        %2189 = vrot.lane.b32.xlu0 %v1889, 64
        %v2190 = vpop.permute.xlu0 %2189
        %v2195 = vcombine.low %v2184, %v2188
        %v2196 = vcombine.high %v2184, %v2188
        %v2198 = vunpack.c.l.s4 1983009808
        %v2199 = vunpack.c.0.s8 %v2198
        %v2200 = vlaneseq
        %v2201 = vshrl.u32 %v2200, 7
        %v2202 = vsub.s32 %v2199, %v2201
        %v2203 = vrot.slane %v2195, %v2202
        %v2205 = vunpack.c.l.s4 1983009808
        %v2206 = vunpack.c.0.s8 %v2205
        %v2207 = vlaneseq
        %v2208 = vshrl.u32 %v2207, 7
        %v2209 = vsub.s32 %v2206, %v2208
        %v2210 = vrot.slane %v2196, %v2209
        %v2211 = vcombine.low %v2186, %v2190
        %v2212 = vcombine.high %v2186, %v2190
        %v2214 = vunpack.c.l.s4 1983009808
        %v2215 = vunpack.c.0.s8 %v2214
        %v2216 = vlaneseq
        %v2217 = vshrl.u32 %v2216, 7
        %v2218 = vsub.s32 %v2215, %v2217
        %v2219 = vrot.slane %v2211, %v2218
        %v2221 = vunpack.c.l.s4 1983009808
        %v2222 = vunpack.c.0.s8 %v2221
        %v2223 = vlaneseq
        %v2224 = vshrl.u32 %v2223, 7
        %v2225 = vsub.s32 %v2222, %v2224
        %v2226 = vrot.slane %v2212, %v2225
        %v2227 = vcombine.low %v2203, %v2219
        %v2228 = vcombine.high %v2203, %v2219
        %v2230 = vunpack.c.l.s4 1934713408
        %v2231 = vunpack.c.0.s8 %v2230
        %v2232 = vlaneseq
        %v2233 = vshrl.u32 %v2232, 7
        %v2234 = vsub.s32 %v2231, %v2233
        %v2235 = vrot.slane %v2227, %v2234
        %v2237 = vunpack.c.l.s4 1934713408
        %v2238 = vunpack.c.0.s8 %v2237
        %v2239 = vlaneseq
        %v2240 = vshrl.u32 %v2239, 7
        %v2241 = vsub.s32 %v2238, %v2240
        %v2242 = vrot.slane %v2228, %v2241
        %v2243 = vcombine.low %v2210, %v2226
        %v2244 = vcombine.high %v2210, %v2226
        %v2246 = vunpack.c.l.s4 1934713408
        %v2247 = vunpack.c.0.s8 %v2246
        %v2248 = vlaneseq
        %v2249 = vshrl.u32 %v2248, 7
        %v2250 = vsub.s32 %v2247, %v2249
        %v2251 = vrot.slane %v2243, %v2250
        %v2253 = vunpack.c.l.s4 1934713408
        %v2254 = vunpack.c.0.s8 %v2253
        %v2255 = vlaneseq
        %v2256 = vshrl.u32 %v2255, 7
        %v2257 = vsub.s32 %v2254, %v2256
        %v2258 = vrot.slane %v2244, %v2257
        %v2259 = vcombine.high %v2235, 0.0
        %v2260 = vcombine.high %v2242, 0.0
        %v2261 = vcombine.high %v2251, 0.0
        %v2262 = vcombine.high %v2258, 0.0
        %v2263 = vcombine.low %v2235, %v2242
        %v2265 = vunpack.c.l.s4 1983009808
        %v2266 = vunpack.c.0.s8 %v2265
        %v2267 = vlaneseq
        %v2268 = vshrl.u32 %v2267, 7
        %v2269 = vsub.s32 %v2266, %v2268
        %v2270 = vrot.slane %v2263, %v2269
        %v2271 = vcombine.low %v2259, %v2260
        %v2273 = vunpack.c.l.s4 1983009808
        %v2274 = vunpack.c.0.s8 %v2273
        %v2275 = vlaneseq
        %v2276 = vshrl.u32 %v2275, 7
        %v2277 = vsub.s32 %v2274, %v2276
        %v2278 = vrot.slane %v2271, %v2277
        %v2279 = vcombine.low %v2251, %v2258
        %v2281 = vunpack.c.l.s4 1983009808
        %v2282 = vunpack.c.0.s8 %v2281
        %v2283 = vlaneseq
        %v2284 = vshrl.u32 %v2283, 7
        %v2285 = vsub.s32 %v2282, %v2284
        %v2286 = vrot.slane %v2279, %v2285
        %v2287 = vcombine.low %v2261, %v2262
        %v2289 = vunpack.c.l.s4 1983009808
        %v2290 = vunpack.c.0.s8 %v2289
        %v2291 = vlaneseq
        %v2292 = vshrl.u32 %v2291, 7
        %v2293 = vsub.s32 %v2290, %v2292
        %v2294 = vrot.slane %v2287, %v2293
        %v2295 = vcombine.low %v2270, %v2278
        %v2296 = vcombine.high %v2270, %v2278
        %v2298 = vunpack.c.l.s4 1934713408
        %v2299 = vunpack.c.0.s8 %v2298
        %v2300 = vlaneseq
        %v2301 = vshrl.u32 %v2300, 7
        %v2302 = vsub.s32 %v2299, %v2301
        %v2303 = vrot.slane %v2295, %v2302
        %v2305 = vunpack.c.l.s4 1934713408
        %v2306 = vunpack.c.0.s8 %v2305
        %v2307 = vlaneseq
        %v2308 = vshrl.u32 %v2307, 7
        %v2309 = vsub.s32 %v2306, %v2308
        %v2310 = vrot.slane %v2296, %v2309
        %v2311 = vcombine.low %v2286, %v2294
        %v2312 = vcombine.high %v2286, %v2294
        %v2314 = vunpack.c.l.s4 1934713408
        %v2315 = vunpack.c.0.s8 %v2314
        %v2316 = vlaneseq
        %v2317 = vshrl.u32 %v2316, 7
        %v2318 = vsub.s32 %v2315, %v2317
        %v2319 = vrot.slane %v2311, %v2318
        %v2321 = vunpack.c.l.s4 1934713408
        %v2322 = vunpack.c.0.s8 %v2321
        %v2323 = vlaneseq
        %v2324 = vshrl.u32 %v2323, 7
        %v2325 = vsub.s32 %v2322, %v2324
        %v2326 = vrot.slane %v2312, %v2325
        %v2327 = vcombine.low %v2303, %v2319
        %v2328 = vcombine.high %v2303, %v2319
        %v2329 = vcombine.low %v2310, %v2326
        %v2330 = vcombine.high %v2310, %v2326
        %v2331 = vpack.c.bf16 %v2327, %v2327
        %v2332 = vpack.c.bf16 %v2328, %v2328
        %v2333 = vpack.c.bf16 %v2329, %v2329
        %v2334 = vpack.c.bf16 %v2330, %v2330
        %v2336 = vsel %vm1310, %v2027, 0
        %v2339 = vsel %vm1310, %v2179, 0
        %2341 = vmatprep.subr.bf16.mxu0 0
        %2342 = vmatpush1.bf16.xpose.msra.mxu0 %v2339
        %2343 = vmatprep.subr.bf16.mxu0 0
        %2344 = vmatpush1.bf16.xpose.msra.mxu0 0
        %2345 = vmatprep.subr.bf16.mxu0 0
        %2346 = vmatpush1.bf16.xpose.msra.mxu0 0
        %2347 = vmatprep.subr.bf16.mxu0 0
        %2348 = vmatpush1.bf16.xpose.msra.mxu0 0
        %2349 = vmatprep.subr.bf16.mxu0 0
        %2350 = vmatpush1.bf16.xpose.msra.mxu0 0
        %2351 = vmatprep.subr.bf16.mxu0 0
        %2352 = vmatpush1.bf16.xpose.msra.mxu0 0
        %2353 = vmatprep.subr.bf16.mxu0 0
        %2354 = vmatpush1.bf16.xpose.msra.mxu0 0
        %2355 = vmatprep.subr.bf16.mxu0 0
        %2356 = vmatpush1.bf16.xpose.msra.mxu0 0
        %2357 = vmatprep.subr.bf16.mxu0 0
        %2358 = vmatpush1.bf16.xpose.msra.mxu0 0
        %2359 = vmatprep.subr.bf16.mxu0 0
        %2360 = vmatpush1.bf16.xpose.msra.mxu0 0
        %2361 = vmatprep.subr.bf16.mxu0 0
        %2362 = vmatpush1.bf16.xpose.msra.mxu0 0
        %2363 = vmatprep.subr.bf16.mxu0 0
        %2364 = vmatpush1.bf16.xpose.msra.mxu0 0
        %2365 = vmatprep.subr.bf16.mxu0 0
        %2366 = vmatpush1.bf16.xpose.msra.mxu0 0
        %2367 = vmatprep.subr.bf16.mxu0 0
        %2368 = vmatpush1.bf16.xpose.msra.mxu0 0
        %2369 = vmatprep.subr.bf16.mxu0 0
        %2370 = vmatpush1.bf16.xpose.msra.mxu0 0
        %2371 = vmatprep.subr.bf16.mxu0 0
        %2372 = vmatpush1.bf16.xpose.msra.mxu0 0
        %2373 = vmatprep.mubr.bf16.mxu0 0
        %2374 = vmatmul.mubr.bf16.gmra.mrb[0].mxu0 %v2336
        %v2375 = vpop.f32.mrb[0].mxu0
        %v2376 = vadd.f32 0.0, %v2375
        %v2377 = vpop.f32.mrb[0].mxu0
        %v2378 = vpop.f32.mrb[0].mxu0
        %v2379 = vpop.f32.mrb[0].mxu0
        %2380 = vdwg.mxu0
        %v2382 = vsel %vm1310, %v2028, 0
        %v2385 = vsel %vm1310, %v2180, 0
        %2387 = vmatprep.subr.bf16.mxu0 0
        %2388 = vmatpush1.bf16.xpose.msra.mxu0 %v2385
        %2389 = vmatprep.subr.bf16.mxu0 0
        %2390 = vmatpush1.bf16.xpose.msra.mxu0 0
        %2391 = vmatprep.subr.bf16.mxu0 0
        %2392 = vmatpush1.bf16.xpose.msra.mxu0 0
        %2393 = vmatprep.subr.bf16.mxu0 0
        %2394 = vmatpush1.bf16.xpose.msra.mxu0 0
        %2395 = vmatprep.subr.bf16.mxu0 0
        %2396 = vmatpush1.bf16.xpose.msra.mxu0 0
        %2397 = vmatprep.subr.bf16.mxu0 0
        %2398 = vmatpush1.bf16.xpose.msra.mxu0 0
        %2399 = vmatprep.subr.bf16.mxu0 0
        %2400 = vmatpush1.bf16.xpose.msra.mxu0 0
        %2401 = vmatprep.subr.bf16.mxu0 0
        %2402 = vmatpush1.bf16.xpose.msra.mxu0 0
        %2403 = vmatprep.subr.bf16.mxu0 0
        %2404 = vmatpush1.bf16.xpose.msra.mxu0 0
        %2405 = vmatprep.subr.bf16.mxu0 0
        %2406 = vmatpush1.bf16.xpose.msra.mxu0 0
        %2407 = vmatprep.subr.bf16.mxu0 0
        %2408 = vmatpush1.bf16.xpose.msra.mxu0 0
        %2409 = vmatprep.subr.bf16.mxu0 0
        %2410 = vmatpush1.bf16.xpose.msra.mxu0 0
        %2411 = vmatprep.subr.bf16.mxu0 0
        %2412 = vmatpush1.bf16.xpose.msra.mxu0 0
        %2413 = vmatprep.subr.bf16.mxu0 0
        %2414 = vmatpush1.bf16.xpose.msra.mxu0 0
        %2415 = vmatprep.subr.bf16.mxu0 0
        %2416 = vmatpush1.bf16.xpose.msra.mxu0 0
        %2417 = vmatprep.subr.bf16.mxu0 0
        %2418 = vmatpush1.bf16.xpose.msra.mxu0 0
        %2419 = vmatprep.mubr.bf16.mxu0 0
        %2420 = vmatmul.mubr.bf16.gmra.mrb[0].mxu0 %v2382
        %v2421 = vpop.f32.mrb[0].mxu0
        %v2422 = vadd.f32 0.0, %v2421
        %v2423 = vpop.f32.mrb[0].mxu0
        %v2424 = vpop.f32.mrb[0].mxu0
        %v2425 = vpop.f32.mrb[0].mxu0
        %2426 = vdwg.mxu0
        %v2428 = vsel %vm1310, %v2029, 0
        %v2431 = vsel %vm1310, %v2181, 0
        %2433 = vmatprep.subr.bf16.mxu0 0
        %2434 = vmatpush1.bf16.xpose.msra.mxu0 %v2431
        %2435 = vmatprep.subr.bf16.mxu0 0
        %2436 = vmatpush1.bf16.xpose.msra.mxu0 0
        %2437 = vmatprep.subr.bf16.mxu0 0
        %2438 = vmatpush1.bf16.xpose.msra.mxu0 0
        %2439 = vmatprep.subr.bf16.mxu0 0
        %2440 = vmatpush1.bf16.xpose.msra.mxu0 0
        %2441 = vmatprep.subr.bf16.mxu0 0
        %2442 = vmatpush1.bf16.xpose.msra.mxu0 0
        %2443 = vmatprep.subr.bf16.mxu0 0
        %2444 = vmatpush1.bf16.xpose.msra.mxu0 0
        %2445 = vmatprep.subr.bf16.mxu0 0
        %2446 = vmatpush1.bf16.xpose.msra.mxu0 0
        %2447 = vmatprep.subr.bf16.mxu0 0
        %2448 = vmatpush1.bf16.xpose.msra.mxu0 0
        %2449 = vmatprep.subr.bf16.mxu0 0
        %2450 = vmatpush1.bf16.xpose.msra.mxu0 0
        %2451 = vmatprep.subr.bf16.mxu0 0
        %2452 = vmatpush1.bf16.xpose.msra.mxu0 0
        %2453 = vmatprep.subr.bf16.mxu0 0
        %2454 = vmatpush1.bf16.xpose.msra.mxu0 0
        %2455 = vmatprep.subr.bf16.mxu0 0
        %2456 = vmatpush1.bf16.xpose.msra.mxu0 0
        %2457 = vmatprep.subr.bf16.mxu0 0
        %2458 = vmatpush1.bf16.xpose.msra.mxu0 0
        %2459 = vmatprep.subr.bf16.mxu0 0
        %2460 = vmatpush1.bf16.xpose.msra.mxu0 0
        %2461 = vmatprep.subr.bf16.mxu0 0
        %2462 = vmatpush1.bf16.xpose.msra.mxu0 0
        %2463 = vmatprep.subr.bf16.mxu0 0
        %2464 = vmatpush1.bf16.xpose.msra.mxu0 0
        %2465 = vmatprep.mubr.bf16.mxu0 0
        %2466 = vmatmul.mubr.bf16.gmra.mrb[0].mxu0 %v2428
        %v2467 = vpop.f32.mrb[0].mxu0
        %v2468 = vadd.f32 0.0, %v2467
        %v2469 = vpop.f32.mrb[0].mxu0
        %v2470 = vpop.f32.mrb[0].mxu0
        %v2471 = vpop.f32.mrb[0].mxu0
        %2472 = vdwg.mxu0
        %v2474 = vsel %vm1310, %v2030, 0
        %v2477 = vsel %vm1310, %v2182, 0
        %2479 = vmatprep.subr.bf16.mxu0 0
        %2480 = vmatpush1.bf16.xpose.msra.mxu0 %v2477
        %2481 = vmatprep.subr.bf16.mxu0 0
        %2482 = vmatpush1.bf16.xpose.msra.mxu0 0
        %2483 = vmatprep.subr.bf16.mxu0 0
        %2484 = vmatpush1.bf16.xpose.msra.mxu0 0
        %2485 = vmatprep.subr.bf16.mxu0 0
        %2486 = vmatpush1.bf16.xpose.msra.mxu0 0
        %2487 = vmatprep.subr.bf16.mxu0 0
        %2488 = vmatpush1.bf16.xpose.msra.mxu0 0
        %2489 = vmatprep.subr.bf16.mxu0 0
        %2490 = vmatpush1.bf16.xpose.msra.mxu0 0
        %2491 = vmatprep.subr.bf16.mxu0 0
        %2492 = vmatpush1.bf16.xpose.msra.mxu0 0
        %2493 = vmatprep.subr.bf16.mxu0 0
        %2494 = vmatpush1.bf16.xpose.msra.mxu0 0
        %2495 = vmatprep.subr.bf16.mxu0 0
        %2496 = vmatpush1.bf16.xpose.msra.mxu0 0
        %2497 = vmatprep.subr.bf16.mxu0 0
        %2498 = vmatpush1.bf16.xpose.msra.mxu0 0
        %2499 = vmatprep.subr.bf16.mxu0 0
        %2500 = vmatpush1.bf16.xpose.msra.mxu0 0
        %2501 = vmatprep.subr.bf16.mxu0 0
        %2502 = vmatpush1.bf16.xpose.msra.mxu0 0
        %2503 = vmatprep.subr.bf16.mxu0 0
        %2504 = vmatpush1.bf16.xpose.msra.mxu0 0
        %2505 = vmatprep.subr.bf16.mxu0 0
        %2506 = vmatpush1.bf16.xpose.msra.mxu0 0
        %2507 = vmatprep.subr.bf16.mxu0 0
        %2508 = vmatpush1.bf16.xpose.msra.mxu0 0
        %2509 = vmatprep.subr.bf16.mxu0 0
        %2510 = vmatpush1.bf16.xpose.msra.mxu0 0
        %2511 = vmatprep.mubr.bf16.mxu0 0
        %2512 = vmatmul.mubr.bf16.gmra.mrb[0].mxu0 %v2474
        %v2513 = vpop.f32.mrb[0].mxu0
        %v2514 = vadd.f32 0.0, %v2513
        %v2515 = vpop.f32.mrb[0].mxu0
        %v2516 = vpop.f32.mrb[0].mxu0
        %v2517 = vpop.f32.mrb[0].mxu0
        %2518 = vdwg.mxu0
        %v2519 = vsel %vm1310, %v2376, -inf
        %2520 = vmax.xlane.f32.xlu0 %v2519
        %v2521 = vpop.xlane.xlu0 %2520
        %v2522 = vsel %vm1310, %v2422, -inf
        %2523 = vmax.xlane.f32.xlu0 %v2522
        %v2524 = vpop.xlane.xlu0 %2523
        %v2525 = vsel %vm1310, %v2468, -inf
        %2526 = vmax.xlane.f32.xlu0 %v2525
        %v2527 = vpop.xlane.xlu0 %2526
        %v2528 = vsel %vm1310, %v2514, -inf
        %2529 = vmax.xlane.f32.xlu0 %v2528
        %v2530 = vpop.xlane.xlu0 %2529
        %v2531 = vsub.f32 %v2376, %v2521
        %v2532 = vsub.f32 %v2422, %v2524
        %v2533 = vsub.f32 %v2468, %v2527
        %v2534 = vsub.f32 %v2514, %v2530
        %v2535 = vmul.f32 %v2531, 1.442695
        %v2536 = vpow.pop %v2535
        %v2537 = vmul.f32 %v2532, 1.442695
        %v2538 = vpow.pop %v2537
        %v2539 = vmul.f32 %v2533, 1.442695
        %v2540 = vpow.pop %v2539
        %v2541 = vmul.f32 %v2534, 1.442695
        %v2542 = vpow.pop %v2541
        %v2543 = vsel %vm1310, %v2536, 0.0
        %2544 = vadd.xlane.f32.xlu0 %v2543
        %v2545 = vpop.xlane.xlu0 %2544
        %v2546 = vsel %vm1310, %v2538, 0.0
        %2547 = vadd.xlane.f32.xlu0 %v2546
        %v2548 = vpop.xlane.xlu0 %2547
        %v2549 = vsel %vm1310, %v2540, 0.0
        %2550 = vadd.xlane.f32.xlu0 %v2549
        %v2551 = vpop.xlane.xlu0 %2550
        %v2552 = vsel %vm1310, %v2542, 0.0
        %2553 = vadd.xlane.f32.xlu0 %v2552
        %v2554 = vpop.xlane.xlu0 %2553
        %v2555 = vrcp.pop %v2545
        %v2556 = vrcp.pop %v2548
        %v2557 = vrcp.pop %v2551
        %v2558 = vrcp.pop %v2554
        %v2559 = vmul.f32 %v2536, %v2555
        %v2560 = vmul.f32 %v2538, %v2556
        %v2561 = vmul.f32 %v2540, %v2557
        %v2562 = vmul.f32 %v2542, %v2558
        %v2563 = vpack.c.bf16 %v2559, %v2559
        %v2564 = vpack.c.bf16 %v2560, %v2560
        %v2565 = vpack.c.bf16 %v2561, %v2561
        %v2566 = vpack.c.bf16 %v2562, %v2562
        %v2568 = vsel %vm1310, %v2563, 0
        %v2571 = vsel %vm1546, %v2331, 0
        %2573 = vmatprep.subr.bf16.mxu0 0
        %2574 = vmatpush1.bf16.msra.mxu0 %v2571
        %2575 = vmatprep.subr.bf16.mxu0 0
        %2576 = vmatpush1.bf16.msra.mxu0 0
        %2577 = vmatprep.subr.bf16.mxu0 0
        %2578 = vmatpush1.bf16.msra.mxu0 0
        %2579 = vmatprep.subr.bf16.mxu0 0
        %2580 = vmatpush1.bf16.msra.mxu0 0
        %2581 = vmatprep.subr.bf16.mxu0 0
        %2582 = vmatpush1.bf16.msra.mxu0 0
        %2583 = vmatprep.subr.bf16.mxu0 0
        %2584 = vmatpush1.bf16.msra.mxu0 0
        %2585 = vmatprep.subr.bf16.mxu0 0
        %2586 = vmatpush1.bf16.msra.mxu0 0
        %2587 = vmatprep.subr.bf16.mxu0 0
        %2588 = vmatpush1.bf16.msra.mxu0 0
        %2589 = vmatprep.subr.bf16.mxu0 0
        %2590 = vmatpush1.bf16.msra.mxu0 0
        %2591 = vmatprep.subr.bf16.mxu0 0
        %2592 = vmatpush1.bf16.msra.mxu0 0
        %2593 = vmatprep.subr.bf16.mxu0 0
        %2594 = vmatpush1.bf16.msra.mxu0 0
        %2595 = vmatprep.subr.bf16.mxu0 0
        %2596 = vmatpush1.bf16.msra.mxu0 0
        %2597 = vmatprep.subr.bf16.mxu0 0
        %2598 = vmatpush1.bf16.msra.mxu0 0
        %2599 = vmatprep.subr.bf16.mxu0 0
        %2600 = vmatpush1.bf16.msra.mxu0 0
        %2601 = vmatprep.subr.bf16.mxu0 0
        %2602 = vmatpush1.bf16.msra.mxu0 0
        %2603 = vmatprep.subr.bf16.mxu0 0
        %2604 = vmatpush1.bf16.msra.mxu0 0
        %2605 = vmatprep.mubr.bf16.mxu0 0
        %2606 = vmatmul.mubr.bf16.gmra.mrb[0].mxu0 %v2568
        %v2607 = vpop.f32.mrb[0].mxu0
        %v2608 = vadd.f32 0.0, %v2607
        %v2609 = vpop.f32.mrb[0].mxu0
        %v2610 = vpop.f32.mrb[0].mxu0
        %v2611 = vpop.f32.mrb[0].mxu0
        %2612 = vdwg.mxu0
        %v2614 = vsel %vm1310, %v2564, 0
        %v2617 = vsel %vm1546, %v2332, 0
        %2619 = vmatprep.subr.bf16.mxu0 0
        %2620 = vmatpush1.bf16.msra.mxu0 %v2617
        %2621 = vmatprep.subr.bf16.mxu0 0
        %2622 = vmatpush1.bf16.msra.mxu0 0
        %2623 = vmatprep.subr.bf16.mxu0 0
        %2624 = vmatpush1.bf16.msra.mxu0 0
        %2625 = vmatprep.subr.bf16.mxu0 0
        %2626 = vmatpush1.bf16.msra.mxu0 0
        %2627 = vmatprep.subr.bf16.mxu0 0
        %2628 = vmatpush1.bf16.msra.mxu0 0
        %2629 = vmatprep.subr.bf16.mxu0 0
        %2630 = vmatpush1.bf16.msra.mxu0 0
        %2631 = vmatprep.subr.bf16.mxu0 0
        %2632 = vmatpush1.bf16.msra.mxu0 0
        %2633 = vmatprep.subr.bf16.mxu0 0
        %2634 = vmatpush1.bf16.msra.mxu0 0
        %2635 = vmatprep.subr.bf16.mxu0 0
        %2636 = vmatpush1.bf16.msra.mxu0 0
        %2637 = vmatprep.subr.bf16.mxu0 0
        %2638 = vmatpush1.bf16.msra.mxu0 0
        %2639 = vmatprep.subr.bf16.mxu0 0
        %2640 = vmatpush1.bf16.msra.mxu0 0
        %2641 = vmatprep.subr.bf16.mxu0 0
        %2642 = vmatpush1.bf16.msra.mxu0 0
        %2643 = vmatprep.subr.bf16.mxu0 0
        %2644 = vmatpush1.bf16.msra.mxu0 0
        %2645 = vmatprep.subr.bf16.mxu0 0
        %2646 = vmatpush1.bf16.msra.mxu0 0
        %2647 = vmatprep.subr.bf16.mxu0 0
        %2648 = vmatpush1.bf16.msra.mxu0 0
        %2649 = vmatprep.subr.bf16.mxu0 0
        %2650 = vmatpush1.bf16.msra.mxu0 0
        %2651 = vmatprep.mubr.bf16.mxu0 0
        %2652 = vmatmul.mubr.bf16.gmra.mrb[0].mxu0 %v2614
        %v2653 = vpop.f32.mrb[0].mxu0
        %v2654 = vadd.f32 0.0, %v2653
        %v2655 = vpop.f32.mrb[0].mxu0
        %v2656 = vpop.f32.mrb[0].mxu0
        %v2657 = vpop.f32.mrb[0].mxu0
        %2658 = vdwg.mxu0
        %v2660 = vsel %vm1310, %v2565, 0
        %v2663 = vsel %vm1546, %v2333, 0
        %2665 = vmatprep.subr.bf16.mxu0 0
        %2666 = vmatpush1.bf16.msra.mxu0 %v2663
        %2667 = vmatprep.subr.bf16.mxu0 0
        %2668 = vmatpush1.bf16.msra.mxu0 0
        %2669 = vmatprep.subr.bf16.mxu0 0
        %2670 = vmatpush1.bf16.msra.mxu0 0
        %2671 = vmatprep.subr.bf16.mxu0 0
        %2672 = vmatpush1.bf16.msra.mxu0 0
        %2673 = vmatprep.subr.bf16.mxu0 0
        %2674 = vmatpush1.bf16.msra.mxu0 0
        %2675 = vmatprep.subr.bf16.mxu0 0
        %2676 = vmatpush1.bf16.msra.mxu0 0
        %2677 = vmatprep.subr.bf16.mxu0 0
        %2678 = vmatpush1.bf16.msra.mxu0 0
        %2679 = vmatprep.subr.bf16.mxu0 0
        %2680 = vmatpush1.bf16.msra.mxu0 0
        %2681 = vmatprep.subr.bf16.mxu0 0
        %2682 = vmatpush1.bf16.msra.mxu0 0
        %2683 = vmatprep.subr.bf16.mxu0 0
        %2684 = vmatpush1.bf16.msra.mxu0 0
        %2685 = vmatprep.subr.bf16.mxu0 0
        %2686 = vmatpush1.bf16.msra.mxu0 0
        %2687 = vmatprep.subr.bf16.mxu0 0
        %2688 = vmatpush1.bf16.msra.mxu0 0
        %2689 = vmatprep.subr.bf16.mxu0 0
        %2690 = vmatpush1.bf16.msra.mxu0 0
        %2691 = vmatprep.subr.bf16.mxu0 0
        %2692 = vmatpush1.bf16.msra.mxu0 0
        %2693 = vmatprep.subr.bf16.mxu0 0
        %2694 = vmatpush1.bf16.msra.mxu0 0
        %2695 = vmatprep.subr.bf16.mxu0 0
        %2696 = vmatpush1.bf16.msra.mxu0 0
        %2697 = vmatprep.mubr.bf16.mxu0 0
        %2698 = vmatmul.mubr.bf16.gmra.mrb[0].mxu0 %v2660
        %v2699 = vpop.f32.mrb[0].mxu0
        %v2700 = vadd.f32 0.0, %v2699
        %v2701 = vpop.f32.mrb[0].mxu0
        %v2702 = vpop.f32.mrb[0].mxu0
        %v2703 = vpop.f32.mrb[0].mxu0
        %2704 = vdwg.mxu0
        %v2706 = vsel %vm1310, %v2566, 0
        %v2709 = vsel %vm1546, %v2334, 0
        %2711 = vmatprep.subr.bf16.mxu0 0
        %2712 = vmatpush1.bf16.msra.mxu0 %v2709
        %2713 = vmatprep.subr.bf16.mxu0 0
        %2714 = vmatpush1.bf16.msra.mxu0 0
        %2715 = vmatprep.subr.bf16.mxu0 0
        %2716 = vmatpush1.bf16.msra.mxu0 0
        %2717 = vmatprep.subr.bf16.mxu0 0
        %2718 = vmatpush1.bf16.msra.mxu0 0
        %2719 = vmatprep.subr.bf16.mxu0 0
        %2720 = vmatpush1.bf16.msra.mxu0 0
        %2721 = vmatprep.subr.bf16.mxu0 0
        %2722 = vmatpush1.bf16.msra.mxu0 0
        %2723 = vmatprep.subr.bf16.mxu0 0
        %2724 = vmatpush1.bf16.msra.mxu0 0
        %2725 = vmatprep.subr.bf16.mxu0 0
        %2726 = vmatpush1.bf16.msra.mxu0 0
        %2727 = vmatprep.subr.bf16.mxu0 0
        %2728 = vmatpush1.bf16.msra.mxu0 0
        %2729 = vmatprep.subr.bf16.mxu0 0
        %2730 = vmatpush1.bf16.msra.mxu0 0
        %2731 = vmatprep.subr.bf16.mxu0 0
        %2732 = vmatpush1.bf16.msra.mxu0 0
        %2733 = vmatprep.subr.bf16.mxu0 0
        %2734 = vmatpush1.bf16.msra.mxu0 0
        %2735 = vmatprep.subr.bf16.mxu0 0
        %2736 = vmatpush1.bf16.msra.mxu0 0
        %2737 = vmatprep.subr.bf16.mxu0 0
        %2738 = vmatpush1.bf16.msra.mxu0 0
        %2739 = vmatprep.subr.bf16.mxu0 0
        %2740 = vmatpush1.bf16.msra.mxu0 0
        %2741 = vmatprep.subr.bf16.mxu0 0
        %2742 = vmatpush1.bf16.msra.mxu0 0
        %2743 = vmatprep.mubr.bf16.mxu0 0
        %2744 = vmatmul.mubr.bf16.gmra.mrb[0].mxu0 %v2706
        %v2745 = vpop.f32.mrb[0].mxu0
        %v2746 = vadd.f32 0.0, %v2745
        %v2747 = vpop.f32.mrb[0].mxu0
        %v2748 = vpop.f32.mrb[0].mxu0
        %v2749 = vpop.f32.mrb[0].mxu0
        %2750 = vdwg.mxu0
        %v2751 = vcombine.low %v2608, %v2700
        %v2752 = vcombine.high %v2608, %v2700
        %v2754 = vunpack.c.l.s4 1983009808
        %v2755 = vunpack.c.0.s8 %v2754
        %v2756 = vlaneseq
        %v2757 = vshrl.u32 %v2756, 7
        %v2758 = vsub.s32 %v2755, %v2757
        %v2759 = vrot.slane %v2751, %v2758
        %v2761 = vunpack.c.l.s4 1983009808
        %v2762 = vunpack.c.0.s8 %v2761
        %v2763 = vlaneseq
        %v2764 = vshrl.u32 %v2763, 7
        %v2765 = vsub.s32 %v2762, %v2764
        %v2766 = vrot.slane %v2752, %v2765
        %v2767 = vcombine.low %v2654, %v2746
        %v2768 = vcombine.high %v2654, %v2746
        %v2770 = vunpack.c.l.s4 1983009808
        %v2771 = vunpack.c.0.s8 %v2770
        %v2772 = vlaneseq
        %v2773 = vshrl.u32 %v2772, 7
        %v2774 = vsub.s32 %v2771, %v2773
        %v2775 = vrot.slane %v2767, %v2774
        %v2777 = vunpack.c.l.s4 1983009808
        %v2778 = vunpack.c.0.s8 %v2777
        %v2779 = vlaneseq
        %v2780 = vshrl.u32 %v2779, 7
        %v2781 = vsub.s32 %v2778, %v2780
        %v2782 = vrot.slane %v2768, %v2781
        %v2783 = vcombine.low %v2759, %v2775
        %v2784 = vcombine.high %v2759, %v2775
        %v2786 = vunpack.c.l.s4 1934713408
        %v2787 = vunpack.c.0.s8 %v2786
        %v2788 = vlaneseq
        %v2789 = vshrl.u32 %v2788, 7
        %v2790 = vsub.s32 %v2787, %v2789
        %v2791 = vrot.slane %v2783, %v2790
        %v2793 = vunpack.c.l.s4 1934713408
        %v2794 = vunpack.c.0.s8 %v2793
        %v2795 = vlaneseq
        %v2796 = vshrl.u32 %v2795, 7
        %v2797 = vsub.s32 %v2794, %v2796
        %v2798 = vrot.slane %v2784, %v2797
        %v2799 = vcombine.low %v2766, %v2782
        %v2800 = vcombine.high %v2766, %v2782
        %v2802 = vunpack.c.l.s4 1934713408
        %v2803 = vunpack.c.0.s8 %v2802
        %v2804 = vlaneseq
        %v2805 = vshrl.u32 %v2804, 7
        %v2806 = vsub.s32 %v2803, %v2805
        %v2807 = vrot.slane %v2799, %v2806
        %v2809 = vunpack.c.l.s4 1934713408
        %v2810 = vunpack.c.0.s8 %v2809
        %v2811 = vlaneseq
        %v2812 = vshrl.u32 %v2811, 7
        %v2813 = vsub.s32 %v2810, %v2812
        %v2814 = vrot.slane %v2800, %v2813
        %v2815 = vcombine.high %v2791, 0.0
        %v2816 = vcombine.high %v2798, 0.0
        %v2817 = vcombine.high %v2807, 0.0
        %v2818 = vcombine.high %v2814, 0.0
        %v2819 = vcombine.low %v2791, %v2798
        %v2821 = vunpack.c.l.s4 1983009808
        %v2822 = vunpack.c.0.s8 %v2821
        %v2823 = vlaneseq
        %v2824 = vshrl.u32 %v2823, 7
        %v2825 = vsub.s32 %v2822, %v2824
        %v2826 = vrot.slane %v2819, %v2825
        %v2827 = vcombine.low %v2815, %v2816
        %v2829 = vunpack.c.l.s4 1983009808
        %v2830 = vunpack.c.0.s8 %v2829
        %v2831 = vlaneseq
        %v2832 = vshrl.u32 %v2831, 7
        %v2833 = vsub.s32 %v2830, %v2832
        %v2834 = vrot.slane %v2827, %v2833
        %v2835 = vcombine.low %v2807, %v2814
        %v2837 = vunpack.c.l.s4 1983009808
        %v2838 = vunpack.c.0.s8 %v2837
        %v2839 = vlaneseq
        %v2840 = vshrl.u32 %v2839, 7
        %v2841 = vsub.s32 %v2838, %v2840
        %v2842 = vrot.slane %v2835, %v2841
        %v2843 = vcombine.low %v2817, %v2818
        %v2845 = vunpack.c.l.s4 1983009808
        %v2846 = vunpack.c.0.s8 %v2845
        %v2847 = vlaneseq
        %v2848 = vshrl.u32 %v2847, 7
        %v2849 = vsub.s32 %v2846, %v2848
        %v2850 = vrot.slane %v2843, %v2849
        %v2851 = vcombine.low %v2826, %v2834
        %v2852 = vcombine.high %v2826, %v2834
        %v2854 = vunpack.c.l.s4 1934713408
        %v2855 = vunpack.c.0.s8 %v2854
        %v2856 = vlaneseq
        %v2857 = vshrl.u32 %v2856, 7
        %v2858 = vsub.s32 %v2855, %v2857
        %v2859 = vrot.slane %v2851, %v2858
        %v2861 = vunpack.c.l.s4 1934713408
        %v2862 = vunpack.c.0.s8 %v2861
        %v2863 = vlaneseq
        %v2864 = vshrl.u32 %v2863, 7
        %v2865 = vsub.s32 %v2862, %v2864
        %v2866 = vrot.slane %v2852, %v2865
        %v2867 = vcombine.low %v2842, %v2850
        %v2868 = vcombine.high %v2842, %v2850
        %v2870 = vunpack.c.l.s4 1934713408
        %v2871 = vunpack.c.0.s8 %v2870
        %v2872 = vlaneseq
        %v2873 = vshrl.u32 %v2872, 7
        %v2874 = vsub.s32 %v2871, %v2873
        %v2875 = vrot.slane %v2867, %v2874
        %v2877 = vunpack.c.l.s4 1934713408
        %v2878 = vunpack.c.0.s8 %v2877
        %v2879 = vlaneseq
        %v2880 = vshrl.u32 %v2879, 7
        %v2881 = vsub.s32 %v2878, %v2880
        %v2882 = vrot.slane %v2868, %v2881
        %v2883 = vcombine.low %v2859, %v2875
        %v2884 = vcombine.high %v2859, %v2875
        %v2885 = vcombine.low %v2866, %v2882
        %v2886 = vcombine.high %v2866, %v2882
        %2888 = vrot.lane.b32.xlu0 %v2884, 8
        %v2889 = vpop.permute.xlu0 %2888
        %2892 = vrot.lane.b32.xlu0 %v2885, 16
        %v2893 = vpop.permute.xlu0 %2892
        %2896 = vrot.lane.b32.xlu0 %v2886, 24
        %v2897 = vpop.permute.xlu0 %2896
        %v2899 = vsel %vm1310, %v2883, %v2889
        %v2900 = vsel %vm1877, %v2899, %v2893
        %v2901 = vsel %vm1879, %v2900, %v2897
        %v2902 = vpack.c.bf16 %v2901, %v1880
        %v2903 = vld [vmem:[%s700] sm:$0xf]
        %v2904 = vld [vmem:[%s700 + $0x4] sm:$0xf]
        %v2905 = vld [vmem:[%s700 + $0x8] sm:$0xf]
        %v2906 = vld [vmem:[%s700 + $0xc] sm:$0xf]
        %v2907 = vld [vmem:[%s703] sm:$0x1]
        %v2909 = vlaneseq
        %v2910 = vshrl.u32 %v2909, 7
        %v2911 = vsub.s32 0, %v2910
        %v2912 = vrot.slane %v2907, %v2911
        %v2918 = vunpack.c.l.b16 %v2903
        %v2919 = vunpack.c.l.b16 %v2904
        %v2920 = vunpack.c.l.b16 %v2905
        %v2921 = vunpack.c.l.b16 %v2906
        %v2922 = vpack.c.b16 %v2919, %v2918
        %v2923 = vpack.c.b16 %v2921, %v2920
        %v2927 = vsel %vm744, %v2902, 0
        %2929 = vmatprep.subr.bf16.mxu0 0
        %2930 = vmatpush1.bf16.msra.mxu0 %v2922
        %2931 = vmatprep.subr.bf16.mxu0 0
        %2932 = vmatpush1.bf16.msra.mxu0 %v2923
        %2933 = vmatprep.subr.bf16.mxu0 0
        %2934 = vmatpush1.bf16.msra.mxu0 0
        %2935 = vmatprep.subr.bf16.mxu0 0
        %2936 = vmatpush1.bf16.msra.mxu0 0
        %2937 = vmatprep.subr.bf16.mxu0 0
        %2938 = vmatpush1.bf16.msra.mxu0 0
        %2939 = vmatprep.subr.bf16.mxu0 0
        %2940 = vmatpush1.bf16.msra.mxu0 0
        %2941 = vmatprep.subr.bf16.mxu0 0
        %2942 = vmatpush1.bf16.msra.mxu0 0
        %2943 = vmatprep.subr.bf16.mxu0 0
        %2944 = vmatpush1.bf16.msra.mxu0 0
        %2945 = vmatprep.subr.bf16.mxu0 0
        %2946 = vmatpush1.bf16.msra.mxu0 0
        %2947 = vmatprep.subr.bf16.mxu0 0
        %2948 = vmatpush1.bf16.msra.mxu0 0
        %2949 = vmatprep.subr.bf16.mxu0 0
        %2950 = vmatpush1.bf16.msra.mxu0 0
        %2951 = vmatprep.subr.bf16.mxu0 0
        %2952 = vmatpush1.bf16.msra.mxu0 0
        %2953 = vmatprep.subr.bf16.mxu0 0
        %2954 = vmatpush1.bf16.msra.mxu0 0
        %2955 = vmatprep.subr.bf16.mxu0 0
        %2956 = vmatpush1.bf16.msra.mxu0 0
        %2957 = vmatprep.subr.bf16.mxu0 0
        %2958 = vmatpush1.bf16.msra.mxu0 0
        %2959 = vmatprep.subr.bf16.mxu0 0
        %2960 = vmatpush1.bf16.msra.mxu0 0
        %2961 = vmatprep.mubr.bf16.mxu0 0
        %2962 = vmatmul.mubr.bf16.gmra.mrb[0].mxu0 %v2927
        %v2963 = vpop.f32.mrb[0].mxu0
        %v2964 = vadd.f32 %v2912, %v2963
        %v2965 = vpop.f32.mrb[0].mxu0
        %v2966 = vpop.f32.mrb[0].mxu0
        %v2967 = vadd.f32 %v2912, %v2966
        %v2968 = vpop.f32.mrb[0].mxu0
        %2969 = vdwg.mxu0
        %v2970 = vadd.f32 %v740, %v2964
        %v2971 = vadd.f32 %v741, %v2967
        %v2972 = vld [vmem:[%s706] sm:$0x1]
        %v2973 = vld [vmem:[%s709] sm:$0x1]
        %v2974 = vsel %vm744, %v2970, 0.0
        %2975 = vadd.xlane.f32.xlu0 %v2974
        %v2976 = vpop.xlane.xlu0 %2975
        %v2977 = vsel %vm744, %v2971, 0.0
        %2978 = vadd.xlane.f32.xlu0 %v2977
        %v2979 = vpop.xlane.xlu0 %2978
        %v2980 = vmul.f32 %v2976, %v751
        %v2981 = vmul.f32 %v2979, %v751
        %v2982 = vsub.f32 %v2970, %v2980
        %v2983 = vsub.f32 %v2971, %v2981
        %v2984 = vmul.f32 %v2982, %v2982
        %v2985 = vmul.f32 %v2983, %v2983
        %v2986 = vsel %vm744, %v2984, 0.0
        %2987 = vadd.xlane.f32.xlu0 %v2986
        %v2988 = vpop.xlane.xlu0 %2987
        %v2989 = vsel %vm744, %v2985, 0.0
        %2990 = vadd.xlane.f32.xlu0 %v2989
        %v2991 = vpop.xlane.xlu0 %2990
        %v2992 = vmul.f32 %v2988, %v751
        %v2993 = vmul.f32 %v2991, %v751
        %v2994 = vadd.f32 %v2992, 1e-05
        %v2995 = vadd.f32 %v2993, 1e-05
        %v2996 = vrsqrt.pop %v2994
        %v2997 = vrsqrt.pop %v2995
        %v2998 = vmul.f32 %v2982, %v2996
        %v2999 = vmul.f32 %v2983, %v2997
        %v3001 = vlaneseq
        %v3002 = vshrl.u32 %v3001, 7
        %v3003 = vsub.s32 0, %v3002
        %v3004 = vrot.slane %v2972, %v3003
        %v3006 = vmul.f32 %v2998, %v3004
        %v3007 = vmul.f32 %v2999, %v3004
        %v3009 = vlaneseq
        %v3010 = vshrl.u32 %v3009, 7
        %v3011 = vsub.s32 0, %v3010
        %v3012 = vrot.slane %v2973, %v3011
        %v3014 = vadd.f32 %v3006, %v3012
        %v3015 = vadd.f32 %v3007, %v3012
        %v3016 = vpack.c.bf16 %v3015, %v3014
        %v3017 = vld [vmem:[%s714] sm:$0xf]
        %v3018 = vld [vmem:[%s714 + $0x4] sm:$0xf]
        %v3019 = vld [vmem:[%s714 + $0x8] sm:$0xf]
        %v3020 = vld [vmem:[%s714 + $0xc] sm:$0xf]
        %v3021 = vld [vmem:[%s717] sm:$0x1]
        %v3023 = vlaneseq
        %v3024 = vshrl.u32 %v3023, 7
        %v3025 = vsub.s32 0, %v3024
        %v3026 = vrot.slane %v3021, %v3025
        %v3032 = vunpack.c.l.b16 %v3017
        %v3033 = vunpack.c.l.b16 %v3018
        %v3034 = vunpack.c.l.b16 %v3019
        %v3035 = vunpack.c.l.b16 %v3020
        %v3036 = vpack.c.b16 %v3033, %v3032
        %v3037 = vpack.c.b16 %v3035, %v3034
        %v3041 = vsel %vm744, %v3016, 0
        %3043 = vmatprep.subr.bf16.mxu0 0
        %3044 = vmatpush1.bf16.msra.mxu0 %v3036
        %3045 = vmatprep.subr.bf16.mxu0 0
        %3046 = vmatpush1.bf16.msra.mxu0 %v3037
        %3047 = vmatprep.subr.bf16.mxu0 0
        %3048 = vmatpush1.bf16.msra.mxu0 0
        %3049 = vmatprep.subr.bf16.mxu0 0
        %3050 = vmatpush1.bf16.msra.mxu0 0
        %3051 = vmatprep.subr.bf16.mxu0 0
        %3052 = vmatpush1.bf16.msra.mxu0 0
        %3053 = vmatprep.subr.bf16.mxu0 0
        %3054 = vmatpush1.bf16.msra.mxu0 0
        %3055 = vmatprep.subr.bf16.mxu0 0
        %3056 = vmatpush1.bf16.msra.mxu0 0
        %3057 = vmatprep.subr.bf16.mxu0 0
        %3058 = vmatpush1.bf16.msra.mxu0 0
        %3059 = vmatprep.subr.bf16.mxu0 0
        %3060 = vmatpush1.bf16.msra.mxu0 0
        %3061 = vmatprep.subr.bf16.mxu0 0
        %3062 = vmatpush1.bf16.msra.mxu0 0
        %3063 = vmatprep.subr.bf16.mxu0 0
        %3064 = vmatpush1.bf16.msra.mxu0 0
        %3065 = vmatprep.subr.bf16.mxu0 0
        %3066 = vmatpush1.bf16.msra.mxu0 0
        %3067 = vmatprep.subr.bf16.mxu0 0
        %3068 = vmatpush1.bf16.msra.mxu0 0
        %3069 = vmatprep.subr.bf16.mxu0 0
        %3070 = vmatpush1.bf16.msra.mxu0 0
        %3071 = vmatprep.subr.bf16.mxu0 0
        %3072 = vmatpush1.bf16.msra.mxu0 0
        %3073 = vmatprep.subr.bf16.mxu0 0
        %3074 = vmatpush1.bf16.msra.mxu0 0
        %3075 = vmatprep.mubr.bf16.mxu0 0
        %3076 = vmatmul.mubr.bf16.gmra.mrb[0].mxu0 %v3041
        %v3077 = vpop.f32.mrb[0].mxu0
        %v3078 = vadd.f32 %v3026, %v3077
        %v3079 = vpop.f32.mrb[0].mxu0
        %v3080 = vpop.f32.mrb[0].mxu0
        %v3081 = vadd.f32 %v3026, %v3080
        %v3082 = vpop.f32.mrb[0].mxu0
        %3083 = vdwg.mxu0
        %v3084 = vmul.f32 %v3078, 0.5
        %v3085 = vmul.f32 %v3081, 0.5
        %v3086 = vmul.f32 %v3078, 0.044715
        %v3087 = vmul.f32 %v3081, 0.044715
        %v3088 = vmul.f32 %v3086, %v3078
        %v3089 = vmul.f32 %v3087, %v3081
        %v3090 = vmul.f32 %v3088, %v3078
        %v3091 = vmul.f32 %v3089, %v3081
        %v3092 = vadd.f32 %v3078, %v3090
        %v3093 = vadd.f32 %v3081, %v3091
        %v3094 = vmul.f32 %v3092, 0.7978846
        %v3095 = vmul.f32 %v3093, 0.7978846
        %v3096 = vtanh.pop %v3094
        %v3097 = vtanh.pop %v3095
        %v3098 = vadd.f32 %v3096, 1.0
        %v3099 = vadd.f32 %v3097, 1.0
        %v3100 = vmul.f32 %v3084, %v3098
        %v3101 = vmul.f32 %v3085, %v3099
        %v3102 = vpack.c.bf16 %v3101, %v3100
        %v3103 = vld [vmem:[%s722] sm:$0xf]
        %v3104 = vld [vmem:[%s722 + $0x4] sm:$0xf]
        %v3105 = vld [vmem:[%s722 + $0x8] sm:$0xf]
        %v3106 = vld [vmem:[%s722 + $0xc] sm:$0xf]
        %v3107 = vld [vmem:[%s722 + $0x10] sm:$0xf]
        %v3108 = vld [vmem:[%s722 + $0x14] sm:$0xf]
        %v3109 = vld [vmem:[%s722 + $0x18] sm:$0xf]
        %v3110 = vld [vmem:[%s722 + $0x1c] sm:$0xf]
        %v3111 = vld [vmem:[%s722 + $0x20] sm:$0xf]
        %v3112 = vld [vmem:[%s722 + $0x24] sm:$0xf]
        %v3113 = vld [vmem:[%s722 + $0x28] sm:$0xf]
        %v3114 = vld [vmem:[%s722 + $0x2c] sm:$0xf]
        %v3115 = vld [vmem:[%s722 + $0x30] sm:$0xf]
        %v3116 = vld [vmem:[%s722 + $0x34] sm:$0xf]
        %v3117 = vld [vmem:[%s722 + $0x38] sm:$0xf]
        %v3118 = vld [vmem:[%s722 + $0x3c] sm:$0xf]
        %v3119 = vld [vmem:[%s725] sm:$0x1]
        %v3121 = vlaneseq
        %v3122 = vshrl.u32 %v3121, 7
        %v3123 = vsub.s32 0, %v3122
        %v3124 = vrot.slane %v3119, %v3123
        %v3142 = vunpack.c.l.b16 %v3103
        %v3143 = vunpack.c.l.b16 %v3104
        %v3144 = vunpack.c.l.b16 %v3105
        %v3145 = vunpack.c.l.b16 %v3106
        %v3146 = vunpack.c.l.b16 %v3107
        %v3147 = vunpack.c.l.b16 %v3108
        %v3148 = vunpack.c.l.b16 %v3109
        %v3149 = vunpack.c.l.b16 %v3110
        %v3150 = vunpack.c.l.b16 %v3111
        %v3151 = vunpack.c.l.b16 %v3112
        %v3152 = vunpack.c.l.b16 %v3113
        %v3153 = vunpack.c.l.b16 %v3114
        %v3154 = vunpack.c.l.b16 %v3115
        %v3155 = vunpack.c.l.b16 %v3116
        %v3156 = vunpack.c.l.b16 %v3117
        %v3157 = vunpack.c.l.b16 %v3118
        %v3158 = vpack.c.b16 %v3143, %v3142
        %v3159 = vpack.c.b16 %v3145, %v3144
        %v3160 = vpack.c.b16 %v3147, %v3146
        %v3161 = vpack.c.b16 %v3149, %v3148
        %v3162 = vpack.c.b16 %v3151, %v3150
        %v3163 = vpack.c.b16 %v3153, %v3152
        %v3164 = vpack.c.b16 %v3155, %v3154
        %v3165 = vpack.c.b16 %v3157, %v3156
        %3174 = vmatprep.subr.bf16.mxu0 0
        %3175 = vmatpush1.bf16.msra.mxu0 %v3158
        %3176 = vmatprep.subr.bf16.mxu0 0
        %3177 = vmatpush1.bf16.msra.mxu0 %v3159
        %3178 = vmatprep.subr.bf16.mxu0 0
        %3179 = vmatpush1.bf16.msra.mxu0 %v3160
        %3180 = vmatprep.subr.bf16.mxu0 0
        %3181 = vmatpush1.bf16.msra.mxu0 %v3161
        %3182 = vmatprep.subr.bf16.mxu0 0
        %3183 = vmatpush1.bf16.msra.mxu0 %v3162
        %3184 = vmatprep.subr.bf16.mxu0 0
        %3185 = vmatpush1.bf16.msra.mxu0 %v3163
        %3186 = vmatprep.subr.bf16.mxu0 0
        %3187 = vmatpush1.bf16.msra.mxu0 %v3164
        %3188 = vmatprep.subr.bf16.mxu0 0
        %3189 = vmatpush1.bf16.msra.mxu0 %v3165
        %3190 = vmatprep.subr.bf16.mxu0 0
        %3191 = vmatpush1.bf16.msra.mxu0 0
        %3192 = vmatprep.subr.bf16.mxu0 0
        %3193 = vmatpush1.bf16.msra.mxu0 0
        %3194 = vmatprep.subr.bf16.mxu0 0
        %3195 = vmatpush1.bf16.msra.mxu0 0
        %3196 = vmatprep.subr.bf16.mxu0 0
        %3197 = vmatpush1.bf16.msra.mxu0 0
        %3198 = vmatprep.subr.bf16.mxu0 0
        %3199 = vmatpush1.bf16.msra.mxu0 0
        %3200 = vmatprep.subr.bf16.mxu0 0
        %3201 = vmatpush1.bf16.msra.mxu0 0
        %3202 = vmatprep.subr.bf16.mxu0 0
        %3203 = vmatpush1.bf16.msra.mxu0 0
        %3204 = vmatprep.subr.bf16.mxu0 0
        %3205 = vmatpush1.bf16.msra.mxu0 0
        %3206 = vmatprep.mubr.bf16.mxu0 0
        %3207 = vmatmul.mubr.bf16.gmra.mrb[0].mxu0 %v3102
        %v3208 = vpop.f32.mrb[0].mxu0
        %v3209 = vadd.f32 %v3124, %v3208
        %v3210 = vpop.f32.mrb[0].mxu0
        %v3211 = vpop.f32.mrb[0].mxu0
        %v3212 = vadd.f32 %v3124, %v3211
        %v3213 = vpop.f32.mrb[0].mxu0
        %3214 = vdwg.mxu0
        %v3215 = vadd.f32 %v2970, %v3209
        %v3216 = vadd.f32 %v2971, %v3212
        %3217 = vst.msk [vmem:[#allocation2] sm:$0xff] %vm744, %v3215
        %3218 = vst.msk [vmem:[#allocation2 + $0x8] sm:$0xff] %vm744, %v3216
        %p3219 = scmp.eq.s32.totalorder %s35, 1
        // Predicated region
        $region89: #{tpu_custom_call.1} parent=83 // pred_check
          %p3220 = pneg %p3219
        $region90: #{tpu_custom_call.1} parent=83 // pred_check_branch
          %3222 = sbr.rel (%p3220) target = $region92
        $region91: #{tpu_custom_call.1} parent=83 // pred_region
          %v3223 = vld [vmem:[%s14] sm:$0x1]
          %v3224 = vld [vmem:[%s15] sm:$0x1]
          %v3225 = vsel %vm744, %v3215, 0.0
          %3226 = vadd.xlane.f32.xlu0 %v3225
          %v3227 = vpop.xlane.xlu0 %3226
          %v3228 = vsel %vm744, %v3216, 0.0
          %3229 = vadd.xlane.f32.xlu0 %v3228
          %v3230 = vpop.xlane.xlu0 %3229
          %v3231 = vmul.f32 %v3227, %v751
          %v3232 = vmul.f32 %v3230, %v751
          %v3233 = vsub.f32 %v3215, %v3231
          %v3234 = vsub.f32 %v3216, %v3232
          %v3235 = vmul.f32 %v3233, %v3233
          %v3236 = vmul.f32 %v3234, %v3234
          %v3237 = vsel %vm744, %v3235, 0.0
          %3238 = vadd.xlane.f32.xlu0 %v3237
          %v3239 = vpop.xlane.xlu0 %3238
          %v3240 = vsel %vm744, %v3236, 0.0
          %3241 = vadd.xlane.f32.xlu0 %v3240
          %v3242 = vpop.xlane.xlu0 %3241
          %v3243 = vmul.f32 %v3239, %v751
          %v3244 = vmul.f32 %v3242, %v751
          %v3245 = vadd.f32 %v3243, 1e-05
          %v3246 = vadd.f32 %v3244, 1e-05
          %v3247 = vrsqrt.pop %v3245
          %v3248 = vrsqrt.pop %v3246
          %v3249 = vmul.f32 %v3233, %v3247
          %v3250 = vmul.f32 %v3234, %v3248
          %v3252 = vlaneseq
          %v3253 = vshrl.u32 %v3252, 7
          %v3254 = vsub.s32 0, %v3253
          %v3255 = vrot.slane %v3223, %v3254
          %v3257 = vmul.f32 %v3249, %v3255
          %v3258 = vmul.f32 %v3250, %v3255
          %v3260 = vlaneseq
          %v3261 = vshrl.u32 %v3260, 7
          %v3262 = vsub.s32 0, %v3261
          %v3263 = vrot.slane %v3224, %v3262
          %v3265 = vadd.f32 %v3257, %v3263
          %v3266 = vadd.f32 %v3258, %v3263
          %3267 = vst.msk [vmem:[%s675] sm:$0xff] %vm744, %v3265
          %3268 = vst.msk [vmem:[%s675 + $0x8] sm:$0xff] %vm744, %v3266
        $region92: #{tpu_custom_call.1} parent=83 // pred_fallthru
          _
        %s3269 = sand.u32 %s451, 1
        %s3270 = scalar_lea.sflag [#allocation4], %s3269
        %s3271 = sand.u32 %s451, 1
        %s3272 = smul.addr %s3271, 16
        %s3273 = scalar_lea.vmem [#allocation3], %s3272
        // Predicated region
        $region93: #{tpu_custom_call.1} parent=83 // pred_check
          %p3274 = pneg %p461
        $region94: #{tpu_custom_call.1} parent=83 // pred_check_branch
          %3276 = sbr.rel (%p3274) target = $region96
        $region95: #{tpu_custom_call.1} parent=83 // pred_region
          %s3277 = smul.u32 2, %s34
          %s3279 = ssub.s32 256, 256
          %3280 = vsyncadd %s3270, %s3279
          %s3281 = smul.addr %s3277, 128
          %s3282 = scalar_lea.hbm %s16, %s3281
          %s3283 = sshll.u32 %s3273, 4
          %s3284 = int_to_ptr.vmem [resolvable:$true] %s3283
          %3289 = dma.vmem_to_hbm [thread:$0]  %s3284, 256, %s3282, %s3270, 128, 128, 8
        $region96: #{tpu_custom_call.1} parent=83 // pred_fallthru
          _
      $region84: #{tpu_custom_call.1} parent=5 // pred_fallthru
        _
      %p3290 = scmp.le.s32.totalorder 2, %s25
      // Predicated region
      $region97: #{tpu_custom_call.1} parent=5 // pred_check
        %p3291 = pneg %p3290
      $region98: #{tpu_custom_call.1} parent=5 // pred_check_branch
        %3293 = sbr.rel (%p3291) target = $region100
      $region99: #{tpu_custom_call.1} parent=5 // pred_region
        %s3294 = ssub.s32 %s25, 2
        // Predicated region
        $region101: #{tpu_custom_call.1} parent=99 // pred_check
          %p3295 = pneg %p467
        $region102: #{tpu_custom_call.1} parent=99 // pred_check_branch
          %3297 = sbr.rel (%p3295) target = $region104
        $region103: #{tpu_custom_call.1} parent=99 // pred_region
          %s3298 = sand.u32 %s452, 1
          %s3299 = scalar_lea.sflag [#allocation4], %s3298
          %s3300 = sand.u32 %s452, 1
          %s3301 = smul.addr %s3300, 16
          %s3302 = scalar_lea.vmem [#allocation3], %s3301
          %3303 = dma.done %s3299, 256
        $region104: #{tpu_custom_call.1} parent=99 // pred_fallthru
          _
      $region100: #{tpu_custom_call.1} parent=5 // pred_fallthru
        _
    $region6: #{tpu_custom_call.1} parent=1 // loop_footer
      %s29 = sadd.s32 1, %s25
    $region7: #{tpu_custom_call.1} parent=1 // loop_footer_branch
      %24 = sbr.rel target = $region3
    $region8: #{tpu_custom_call.1} parent=1 // loop_exit
      _
    %3304 = vsyncpa [#allocation4], 1
    %s3305 = scalar_lea.sflag [#allocation4], 1
    %3306 = vsyncpa %s3305, 1

</llo_original>
